<compile_context>
chip_gen: v5e
topology: v5e:2x2
jax: 0.10.0
libtpu: 0.0.40
codegen_flags: <defaults>
</compile_context>

<pallas_src>
import functools

import jax
import jax.numpy as jnp
from jax.experimental import pallas as pl
from jax.experimental.pallas import tpu as pltpu


# ----------------------------------------------------------------------------
# Pallas kernel: one sequence chunk per grid step.
# ----------------------------------------------------------------------------
def _seq_vib_kernel(num_layers, hidden, batch, t_chunk, *refs):
    L, H, B, tS = num_layers, hidden, batch, t_chunk
    n_w = 3 * L

    emb_ref, eps_ref, h0_ref, c0_ref = refs[:4]
    w_refs = refs[4:4 + n_w]
    wgm_ref, bgm_ref, wgv_ref, bgv_ref, wd_ref, bd_ref = refs[4 + n_w:10 + n_w]
    logits_ref, mu_ref, var_ref = refs[10 + n_w:13 + n_w]
    h_carry, c_carry, gx_scr, htop_scr = refs[13 + n_w:]

    # Initialize recurrent state once, at the first sequence chunk.
    @pl.when(pl.program_id(0) == 0)
    def _():
        h_carry[...] = h0_ref[...]
        c_carry[...] = c0_ref[...]

    # Weights (VMEM-resident, constant-index blocks).
    wih = [w_refs[3 * l][...] for l in range(L)]        # (in, 4H), gate cols (i|f|o|g)
    whh = [w_refs[3 * l + 1][...] for l in range(L)]    # (H, 4H)
    bias = [w_refs[3 * l + 2][...] for l in range(L)]   # (1, 4H)

    # Hoisted layer-0 input projection: one big MXU matmul for the whole chunk.
    gx_scr[...] = (jnp.dot(emb_ref[...], wih[0], preferred_element_type=jnp.float32)
                   + bias[0])                           # (tS*B, 4H), rows ordered t-major

    def cell(gates, c_prev):
        # Gate columns pre-permuted to (i | f | o | g):
        sig = jax.nn.sigmoid(gates[:, :3 * H])
        g = jnp.tanh(gates[:, 3 * H:])
        c = sig[:, H:2 * H] * c_prev + sig[:, :H] * g
        h = sig[:, 2 * H:3 * H] * jnp.tanh(c)
        return h, c

    # Per-layer (B, H) state carried as plain values (no stack/unstack per step).
    hs = [h_carry[l] for l in range(L)]
    cs = [c_carry[l] for l in range(L)]

    # Statically unrolled time loop (chunk boundary bounds live ranges).
    for t in range(tS):
        r = t * B
        gates = gx_scr[r:r + B, :] + jnp.dot(hs[0], whh[0],
                                             preferred_element_type=jnp.float32)
        hs[0], cs[0] = cell(gates, cs[0])
        x = hs[0]
        for l in range(1, L):
            gates = (jnp.dot(x, wih[l], preferred_element_type=jnp.float32)
                     + jnp.dot(hs[l], whh[l], preferred_element_type=jnp.float32)
                     + bias[l])
            hs[l], cs[l] = cell(gates, cs[l])
            x = hs[l]
        htop_scr[r:r + B, :] = x                        # collect top-layer hidden

    for l in range(L):
        h_carry[l] = hs[l]
        c_carry[l] = cs[l]

    # Batched sampler + decoder over the whole chunk (lane-dense padded outputs).
    h_all = htop_scr[...]                                                   # (tS*B, H)
    mu = jnp.dot(h_all, wgm_ref[...], preferred_element_type=jnp.float32) + bgm_ref[...]
    var = jax.nn.softplus(
        jnp.dot(h_all, wgv_ref[...], preferred_element_type=jnp.float32) + bgv_ref[...])
    # rsample of N(mu, diag(var)): chol(diag(var)) @ eps == sqrt(var) * eps
    sample = mu + jnp.sqrt(var) * eps_ref[...]
    logits = jnp.dot(sample, wd_ref[...], preferred_element_type=jnp.float32) + bd_ref[...]

    logits_ref[...] = logits
    mu_ref[...] = mu
    var_ref[...] = var


# ----------------------------------------------------------------------------
# Parameters (deterministic, in-script)
# ----------------------------------------------------------------------------
def init_params(key, vocab, emb_dim, num_layers, hidden):
    ks = iter(jax.random.split(key, 8 + 4 * num_layers))

    def uniform(k, shape, bound):
        return jax.random.uniform(k, shape, jnp.float32, -bound, bound)

    def xavier(k, shape):
        bound = float(jnp.sqrt(6.0 / (shape[0] + shape[1])))
        return uniform(k, shape, bound)

    params = {}
    emb = jax.random.normal(next(ks), (vocab, emb_dim), jnp.float32)
    params["embedding"] = emb.at[0].set(0.0)                       # padding_idx=0
    params["initial_state"] = jax.random.normal(next(ks), (2, num_layers, hidden), jnp.float32)

    lstm = []
    inv = 1.0 / float(jnp.sqrt(hidden))
    for l in range(num_layers):
        in_sz = emb_dim if l == 0 else hidden
        wih = uniform(next(ks), (4 * hidden, in_sz), inv)          # torch order i,f,g,o
        whh = uniform(next(ks), (4 * hidden, hidden), inv)
        bih = uniform(next(ks), (4 * hidden,), inv)
        bhh = uniform(next(ks), (4 * hidden,), inv)
        lstm.append((wih, whh, bih, bhh))
    params["lstm"] = lstm

    params["wg"] = xavier(next(ks), (2 * hidden, hidden))          # GaussianSampler linear
    params["bg"] = jnp.zeros((2 * hidden,), jnp.float32)
    params["wd"] = uniform(next(ks), (vocab, hidden), inv)         # decoder
    params["bd"] = uniform(next(ks), (vocab,), inv)
    return params


def _round_up(x, m):
    return ((x + m - 1) // m) * m


# ----------------------------------------------------------------------------
# Wrapper: embedding gather, layout prep, pallas_call, un-padding.
# ----------------------------------------------------------------------------
def sequential_variational_ib_forward(params, x, noise_key, *, num_layers, hidden, vocab,
                                      seq_chunk=16):
    B, S = x.shape
    H, L = hidden, num_layers
    E = params["embedding"].shape[1]
    Hp = _round_up(H, 128)
    Vp = _round_up(vocab, 128)

    # Chunk length: divides S; (tS*B) must be 8-sublane aligned unless it covers all rows.
    tS = S
    for cand in range(min(seq_chunk, S), 0, -1):
        if S % cand == 0 and (cand == S or (cand * B) % 8 == 0):
            tS = cand
            break
    n_chunks = S // tS

    # Embedding lookup; flatten time-major (row index = t*B + b).
    emb = jnp.take(params["embedding"], x, axis=0)                 # (B, S, E); row 0 is zero
    emb2 = jnp.transpose(emb, (1, 0, 2)).reshape(S * B, E).astype(jnp.float32)

    eps = jax.random.normal(noise_key, (S, B, H), jnp.float32)
    eps2 = jnp.pad(eps, ((0, 0), (0, 0), (0, Hp - H))).reshape(S * B, Hp)

    init_h = jnp.broadcast_to(params["initial_state"][0][:, None, :], (L, B, H)).astype(jnp.float32)
    init_c = jnp.broadcast_to(params["initial_state"][1][:, None, :], (L, B, H)).astype(jnp.float32)

    # LSTM weights: reorder gate rows (i,f,g,o) -> (i,f,o,g), transpose, fold the two biases.
    def reorder(w):
        return jnp.concatenate([w[:2 * H], w[3 * H:4 * H], w[2 * H:3 * H]], axis=0)

    lstm_w = []
    for l in range(L):
        wih, whh, bih, bhh = params["lstm"][l]
        lstm_w += [reorder(wih).T, reorder(whh).T, reorder(bih + bhh)[None, :]]

    # Sampler Linear(H -> 2H): first half -> raw variance, second half -> mu; zero-pad lanes.
    wg, bg = params["wg"], params["bg"]
    wg_var = jnp.pad(wg[:H].T, ((0, 0), (0, Hp - H)))
    wg_mu = jnp.pad(wg[H:].T, ((0, 0), (0, Hp - H)))
    bg_var = jnp.pad(bg[:H], (0, Hp - H))[None, :]
    bg_mu = jnp.pad(bg[H:], (0, Hp - H))[None, :]

    # Decoder Linear(H -> V): zero-pad rows (sample lanes) and cols (vocab lanes).
    wd = jnp.pad(params["wd"].T, ((0, Hp - H), (0, Vp - vocab)))
    bd = jnp.pad(params["bd"], (0, Vp - vocab))[None, :]

    inputs = [emb2, eps2, init_h, init_c] + lstm_w + [wg_mu, bg_mu, wg_var, bg_var, wd, bd]

    def const_spec(arr):
        nd = arr.ndim
        return pl.BlockSpec(arr.shape, lambda s, _nd=nd: (0,) * _nd)

    in_specs = [
        pl.BlockSpec((tS * B, E), lambda s: (s, 0)),      # embedded tokens (streamed)
        pl.BlockSpec((tS * B, Hp), lambda s: (s, 0)),     # gaussian noise (streamed)
    ] + [const_spec(a) for a in inputs[2:]]               # init state + weights (resident)

    out_shape = (
        jax.ShapeDtypeStruct((S * B, Vp), jnp.float32),   # logits (lane-dense padded)
        jax.ShapeDtypeStruct((S * B, Hp), jnp.float32),   # mu
        jax.ShapeDtypeStruct((S * B, Hp), jnp.float32),   # diagonal covariance (softplus)
    )
    out_specs = (
        pl.BlockSpec((tS * B, Vp), lambda s: (s, 0)),
        pl.BlockSpec((tS * B, Hp), lambda s: (s, 0)),
        pl.BlockSpec((tS * B, Hp), lambda s: (s, 0)),
    )
    scratch_shapes = [
        pltpu.VMEM((L, B, H), jnp.float32),               # h carried across chunks
        pltpu.VMEM((L, B, H), jnp.float32),               # c carried across chunks
        pltpu.VMEM((tS * B, 4 * H), jnp.float32),         # hoisted layer-0 gates
        pltpu.VMEM((tS * B, H), jnp.float32),             # top-layer hidden (chunk)
    ]

    kernel = functools.partial(_seq_vib_kernel, L, H, B, tS)

    logits2, mu2, var2 = pl.pallas_call(
        kernel,
        out_shape=out_shape,
        grid_spec=pltpu.PrefetchScalarGridSpec(
            num_scalar_prefetch=0,
            grid=(n_chunks,),
            in_specs=in_specs,
            out_specs=out_specs,
            scratch_shapes=scratch_shapes,
        ),
        compiler_params=pltpu.CompilerParams(
            dimension_semantics=("arbitrary",),           # sequential chunks (state carry)
            vmem_limit_bytes=64 * 1024 * 1024,
        ),
    )(*inputs)

    # Un-pad and present batch-major (fused by XLA under jit).
    y_hat = jnp.transpose(logits2.reshape(S, B, Vp)[:, :, :vocab], (1, 0, 2))   # (B, S, V)
    h_mus = jnp.transpose(mu2.reshape(S, B, Hp)[:, :, :H], (1, 0, 2))           # (B, S, H)
    h_var = jnp.transpose(var2.reshape(S, B, Hp)[:, :, :H], (1, 0, 2))          # (B, S, H)
    # torch.diag_embed of the softplus output (diagonal covariance), as in GaussianSampler.
    h_stds = h_var[..., :, None] * jnp.eye(H, dtype=h_var.dtype)                # (B, S, H, H)
    return y_hat, (h_mus, h_stds)


# ----------------------------------------------------------------------------
# Pure-JAX reference (same math, original torch gate order) for correctness check
# ----------------------------------------------------------------------------
def reference_forward(params, x, eps, *, num_layers, hidden):
    B, S = x.shape
    L, H = num_layers, hidden
    emb = jnp.take(params["embedding"], x, axis=0)
    h = jnp.broadcast_to(params["initial_state"][0][:, None, :], (L, B, H))
    c = jnp.broadcast_to(params["initial_state"][1][:, None, :], (L, B, H))
    outs = []
    for t in range(S):
        inp = emb[:, t, :]
        nh, nc = [], []
        for l in range(L):
            wih, whh, bih, bhh = params["lstm"][l]
            gates = inp @ wih.T + bih + h[l] @ whh.T + bhh
            i = jax.nn.sigmoid(gates[:, :H])
            f = jax.nn.sigmoid(gates[:, H:2 * H])
            g = jnp.tanh(gates[:, 2 * H:3 * H])
            o = jax.nn.sigmoid(gates[:, 3 * H:])
            cl = f * c[l] + i * g
            hl = o * jnp.tanh(cl)
            nh.append(hl)
            nc.append(cl)
            inp = hl
        h, c = jnp.stack(nh), jnp.stack(nc)
        outs.append(inp)
    out = jnp.stack(outs, axis=1)                                  # (B, S, H)
    stats = out @ params["wg"].T + params["bg"]
    mu = stats[..., H:]
    var = jax.nn.softplus(stats[..., :H])
    sample = mu + jnp.sqrt(var) * jnp.transpose(eps, (1, 0, 2))
    logits = sample @ params["wd"].T + params["bd"]
    return logits, mu, var


if __name__ == "__main__":
    VOCAB, EMB, LAYERS, HIDDEN = 16, 32, 2, 32
    B, S = 2, 16                                                    # 2 sequence chunks of 8

    root = jax.random.PRNGKey(0)
    k_param, k_data, k_noise = jax.random.split(root, 3)

    params = init_params(k_param, VOCAB, EMB, LAYERS, HIDDEN)
    x = jax.random.randint(k_data, (B, S), 0, VOCAB, dtype=jnp.int32)

    fwd = jax.jit(functools.partial(
        sequential_variational_ib_forward,
        num_layers=LAYERS, hidden=HIDDEN, vocab=VOCAB, seq_chunk=8))
    y_hat, (h_mus, h_stds) = fwd(params, x, k_noise)
    jax.block_until_ready((y_hat, h_mus, h_stds))

    assert y_hat.shape == (B, S, VOCAB)
    assert h_mus.shape == (B, S, HIDDEN)
    assert h_stds.shape == (B, S, HIDDEN, HIDDEN)

    # Cross-check against a pure-JAX reference using the identical noise draw.
    eps = jax.random.normal(k_noise, (S, B, HIDDEN), jnp.float32)
    ref_logits, ref_mu, ref_var = reference_forward(params, x, eps, num_layers=LAYERS, hidden=HIDDEN)
    assert bool(jnp.all(jnp.isfinite(y_hat)))
    assert float(jnp.max(jnp.abs(y_hat - ref_logits))) < 2e-2
    assert float(jnp.max(jnp.abs(h_mus - ref_mu))) < 2e-2
    assert float(jnp.max(jnp.abs(jnp.diagonal(h_stds, axis1=-2, axis2=-1) - ref_var))) < 2e-2

    print("KERNEL_OK")
</pallas_src>

<mosaic_0001>
module attributes {stable_mosaic.version = 11 : i64} {
  func.func @_seq_vib_kernel(%arg0: i32, %arg1: memref<16x32xf32, #tpu.memory_space<vmem>>, %arg2: memref<16x128xf32, #tpu.memory_space<vmem>>, %arg3: memref<2x2x32xf32, #tpu.memory_space<vmem>>, %arg4: memref<2x2x32xf32, #tpu.memory_space<vmem>>, %arg5: memref<32x128xf32, #tpu.memory_space<vmem>>, %arg6: memref<32x128xf32, #tpu.memory_space<vmem>>, %arg7: memref<1x128xf32, #tpu.memory_space<vmem>>, %arg8: memref<32x128xf32, #tpu.memory_space<vmem>>, %arg9: memref<32x128xf32, #tpu.memory_space<vmem>>, %arg10: memref<1x128xf32, #tpu.memory_space<vmem>>, %arg11: memref<32x128xf32, #tpu.memory_space<vmem>>, %arg12: memref<1x128xf32, #tpu.memory_space<vmem>>, %arg13: memref<32x128xf32, #tpu.memory_space<vmem>>, %arg14: memref<1x128xf32, #tpu.memory_space<vmem>>, %arg15: memref<128x128xf32, #tpu.memory_space<vmem>>, %arg16: memref<1x128xf32, #tpu.memory_space<vmem>>, %arg17: memref<16x128xf32, #tpu.memory_space<vmem>>, %arg18: memref<16x128xf32, #tpu.memory_space<vmem>>, %arg19: memref<16x128xf32, #tpu.memory_space<vmem>>, %arg20: memref<2x2x32xf32, #tpu.memory_space<vmem>>, %arg21: memref<2x2x32xf32, #tpu.memory_space<vmem>>, %arg22: memref<16x128xf32, #tpu.memory_space<vmem>>, %arg23: memref<16x32xf32, #tpu.memory_space<vmem>>) attributes {dimension_semantics = [#tpu.dimension_semantics<arbitrary>], iteration_bounds = array<i64: 2>, scalar_prefetch = 0 : i64, scratch_operands = 4 : i64, tpu.core_type = #tpu.core_type<tc>, window_params = [{transform_indices = @transform_0, window_bounds = array<i64: 16, 32>}, {transform_indices = @transform_1, window_bounds = array<i64: 16, 128>}, {pipeline_mode = #tpu.pipeline_mode<synchronous>, transform_indices = @transform_2, window_bounds = array<i64: 2, 2, 32>}, {pipeline_mode = #tpu.pipeline_mode<synchronous>, transform_indices = @transform_3, window_bounds = array<i64: 2, 2, 32>}, {pipeline_mode = #tpu.pipeline_mode<synchronous>, transform_indices = @transform_4, window_bounds = array<i64: 32, 128>}, {pipeline_mode = #tpu.pipeline_mode<synchronous>, transform_indices = @transform_5, window_bounds = array<i64: 32, 128>}, {pipeline_mode = #tpu.pipeline_mode<synchronous>, transform_indices = @transform_6, window_bounds = array<i64: 1, 128>}, {pipeline_mode = #tpu.pipeline_mode<synchronous>, transform_indices = @transform_7, window_bounds = array<i64: 32, 128>}, {pipeline_mode = #tpu.pipeline_mode<synchronous>, transform_indices = @transform_8, window_bounds = array<i64: 32, 128>}, {pipeline_mode = #tpu.pipeline_mode<synchronous>, transform_indices = @transform_9, window_bounds = array<i64: 1, 128>}, {pipeline_mode = #tpu.pipeline_mode<synchronous>, transform_indices = @transform_10, window_bounds = array<i64: 32, 128>}, {pipeline_mode = #tpu.pipeline_mode<synchronous>, transform_indices = @transform_11, window_bounds = array<i64: 1, 128>}, {pipeline_mode = #tpu.pipeline_mode<synchronous>, transform_indices = @transform_12, window_bounds = array<i64: 32, 128>}, {pipeline_mode = #tpu.pipeline_mode<synchronous>, transform_indices = @transform_13, window_bounds = array<i64: 1, 128>}, {pipeline_mode = #tpu.pipeline_mode<synchronous>, transform_indices = @transform_14, window_bounds = array<i64: 128, 128>}, {pipeline_mode = #tpu.pipeline_mode<synchronous>, transform_indices = @transform_15, window_bounds = array<i64: 1, 128>}, {transform_indices = @transform_16, window_bounds = array<i64: 16, 128>}, {transform_indices = @transform_17, window_bounds = array<i64: 16, 128>}, {transform_indices = @transform_18, window_bounds = array<i64: 16, 128>}]} {
    %c0_i32 = arith.constant 0 : i32
    %0 = arith.cmpi eq, %arg0, %c0_i32 : i32
    %1 = arith.extui %0 : i1 to i32
    %c0_i32_0 = arith.constant 0 : i32
    %2 = arith.cmpi ne, %1, %c0_i32_0 : i32
    scf.if %2 {
      %c0_131 = arith.constant 0 : index
      %c0_132 = arith.constant 0 : index
      %c0_133 = arith.constant 0 : index
      %399 = vector.load %arg3[%c0_131, %c0_132, %c0_133] : memref<2x2x32xf32, #tpu.memory_space<vmem>>, vector<2x2x32xf32>
      %c0_134 = arith.constant 0 : index
      %c0_135 = arith.constant 0 : index
      %c0_136 = arith.constant 0 : index
      %400 = vector.load %arg20[%c0_134, %c0_135, %c0_136] : memref<2x2x32xf32, #tpu.memory_space<vmem>>, vector<2x2x32xf32>
      tpu.vector_store %arg20[%c0_134, %c0_135, %c0_136], %399 {strides = array<i32>} : memref<2x2x32xf32, #tpu.memory_space<vmem>>, vector<2x2x32xf32>,
      %c0_137 = arith.constant 0 : index
      %c0_138 = arith.constant 0 : index
      %c0_139 = arith.constant 0 : index
      %401 = vector.load %arg4[%c0_137, %c0_138, %c0_139] : memref<2x2x32xf32, #tpu.memory_space<vmem>>, vector<2x2x32xf32>
      %c0_140 = arith.constant 0 : index
      %c0_141 = arith.constant 0 : index
      %c0_142 = arith.constant 0 : index
      %402 = vector.load %arg21[%c0_140, %c0_141, %c0_142] : memref<2x2x32xf32, #tpu.memory_space<vmem>>, vector<2x2x32xf32>
      tpu.vector_store %arg21[%c0_140, %c0_141, %c0_142], %401 {strides = array<i32>} : memref<2x2x32xf32, #tpu.memory_space<vmem>>, vector<2x2x32xf32>,
    } else {
    }
    %c0 = arith.constant 0 : index
    %c0_1 = arith.constant 0 : index
    %3 = vector.load %arg5[%c0, %c0_1] : memref<32x128xf32, #tpu.memory_space<vmem>>, vector<32x128xf32>
    %c0_2 = arith.constant 0 : index
    %c0_3 = arith.constant 0 : index
    %4 = vector.load %arg8[%c0_2, %c0_3] : memref<32x128xf32, #tpu.memory_space<vmem>>, vector<32x128xf32>
    %c0_4 = arith.constant 0 : index
    %c0_5 = arith.constant 0 : index
    %5 = vector.load %arg6[%c0_4, %c0_5] : memref<32x128xf32, #tpu.memory_space<vmem>>, vector<32x128xf32>
    %c0_6 = arith.constant 0 : index
    %c0_7 = arith.constant 0 : index
    %6 = vector.load %arg9[%c0_6, %c0_7] : memref<32x128xf32, #tpu.memory_space<vmem>>, vector<32x128xf32>
    %c0_8 = arith.constant 0 : index
    %c0_9 = arith.constant 0 : index
    %7 = vector.load %arg7[%c0_8, %c0_9] : memref<1x128xf32, #tpu.memory_space<vmem>>, vector<1x128xf32>
    %c0_10 = arith.constant 0 : index
    %c0_11 = arith.constant 0 : index
    %8 = vector.load %arg10[%c0_10, %c0_11] : memref<1x128xf32, #tpu.memory_space<vmem>>, vector<1x128xf32>
    %c0_12 = arith.constant 0 : index
    %c0_13 = arith.constant 0 : index
    %9 = vector.load %arg1[%c0_12, %c0_13] : memref<16x32xf32, #tpu.memory_space<vmem>>, vector<16x32xf32>
    %cst = arith.constant dense<0.000000e+00> : vector<16x128xf32>
    %10 = tpu.matmul %9, %3, %cst {dimension_numbers = #tpu.dot_dimension_numbers<[1], [0], [0], [1], [0, 0, 1, 1], [], []>} : vector<16x32xf32>, vector<32x128xf32>, vector<16x128xf32> -> vector<16x128xf32>
    %11 = vector.broadcast %7 : vector<1x128xf32> to vector<16x128xf32>
    %12 = arith.addf %10, %11 : vector<16x128xf32>
    %c0_14 = arith.constant 0 : index
    %c0_15 = arith.constant 0 : index
    %13 = vector.load %arg22[%c0_14, %c0_15] : memref<16x128xf32, #tpu.memory_space<vmem>>, vector<16x128xf32>
    tpu.vector_store %arg22[%c0_14, %c0_15], %12 {strides = array<i32>} : memref<16x128xf32, #tpu.memory_space<vmem>>, vector<16x128xf32>,
    %c0_16 = arith.constant 0 : index
    %c0_17 = arith.constant 0 : index
    %c0_18 = arith.constant 0 : index
    %14 = vector.load %arg20[%c0_16, %c0_17, %c0_18] : memref<2x2x32xf32, #tpu.memory_space<vmem>>, vector<1x2x32xf32>
    %15 = vector.shape_cast %14 : vector<1x2x32xf32> to vector<2x32xf32>
    %c1 = arith.constant 1 : index
    %c0_19 = arith.constant 0 : index
    %c0_20 = arith.constant 0 : index
    %16 = vector.load %arg20[%c1, %c0_19, %c0_20] : memref<2x2x32xf32, #tpu.memory_space<vmem>>, vector<1x2x32xf32>
    %17 = vector.shape_cast %16 : vector<1x2x32xf32> to vector<2x32xf32>
    %c0_21 = arith.constant 0 : index
    %c0_22 = arith.constant 0 : index
    %c0_23 = arith.constant 0 : index
    %18 = vector.load %arg21[%c0_21, %c0_22, %c0_23] : memref<2x2x32xf32, #tpu.memory_space<vmem>>, vector<1x2x32xf32>
    %19 = vector.shape_cast %18 : vector<1x2x32xf32> to vector<2x32xf32>
    %c1_24 = arith.constant 1 : index
    %c0_25 = arith.constant 0 : index
    %c0_26 = arith.constant 0 : index
    %20 = vector.load %arg21[%c1_24, %c0_25, %c0_26] : memref<2x2x32xf32, #tpu.memory_space<vmem>>, vector<1x2x32xf32>
    %21 = vector.shape_cast %20 : vector<1x2x32xf32> to vector<2x32xf32>
    %c0_27 = arith.constant 0 : index
    %c0_28 = arith.constant 0 : index
    %22 = vector.load %arg22[%c0_27, %c0_28] : memref<16x128xf32, #tpu.memory_space<vmem>>, vector<2x128xf32>
    %cst_29 = arith.constant dense<0.000000e+00> : vector<2x128xf32>
    %23 = tpu.matmul %15, %5, %cst_29 {dimension_numbers = #tpu.dot_dimension_numbers<[1], [0], [0], [1], [0, 0, 1, 1], [], []>} : vector<2x32xf32>, vector<32x128xf32>, vector<2x128xf32> -> vector<2x128xf32>
    %24 = arith.addf %22, %23 : vector<2x128xf32>
    %25 = vector.extract_strided_slice %24 {offsets = [0, 0], sizes = [2, 96], strides = [1, 1]} : vector<2x128xf32> to vector<2x96xf32>
    %26 = arith.negf %25 : vector<2x96xf32>
    %27 = math.exp %26 : vector<2x96xf32>
    %cst_30 = arith.constant 1.000000e+00 : f32
    %28 = vector.broadcast %cst_30 : f32 to vector<2x96xf32>
    %29 = arith.addf %28, %27 : vector<2x96xf32>
    %30 = arith.divf %28, %29 : vector<2x96xf32>
    %31 = vector.extract_strided_slice %24 {offsets = [0, 96], sizes = [2, 32], strides = [1, 1]} : vector<2x128xf32> to vector<2x32xf32>
    %32 = math.tanh %31 : vector<2x32xf32>
    %33 = vector.extract_strided_slice %30 {offsets = [0, 32], sizes = [2, 32], strides = [1, 1]} : vector<2x96xf32> to vector<2x32xf32>
    %34 = arith.mulf %33, %19 : vector<2x32xf32>
    %35 = vector.extract_strided_slice %30 {offsets = [0, 0], sizes = [2, 32], strides = [1, 1]} : vector<2x96xf32> to vector<2x32xf32>
    %36 = arith.mulf %35, %32 : vector<2x32xf32>
    %37 = arith.addf %34, %36 : vector<2x32xf32>
    %38 = vector.extract_strided_slice %30 {offsets = [0, 64], sizes = [2, 32], strides = [1, 1]} : vector<2x96xf32> to vector<2x32xf32>
    %39 = math.tanh %37 : vector<2x32xf32>
    %40 = arith.mulf %38, %39 : vector<2x32xf32>
    %cst_31 = arith.constant dense<0.000000e+00> : vector<2x128xf32>
    %41 = tpu.matmul %40, %4, %cst_31 {dimension_numbers = #tpu.dot_dimension_numbers<[1], [0], [0], [1], [0, 0, 1, 1], [], []>} : vector<2x32xf32>, vector<32x128xf32>, vector<2x128xf32> -> vector<2x128xf32>
    %cst_32 = arith.constant dense<0.000000e+00> : vector<2x128xf32>
    %42 = tpu.matmul %17, %6, %cst_32 {dimension_numbers = #tpu.dot_dimension_numbers<[1], [0], [0], [1], [0, 0, 1, 1], [], []>} : vector<2x32xf32>, vector<32x128xf32>, vector<2x128xf32> -> vector<2x128xf32>
    %43 = arith.addf %41, %42 : vector<2x128xf32>
    %44 = vector.broadcast %8 : vector<1x128xf32> to vector<2x128xf32>
    %45 = arith.addf %43, %44 : vector<2x128xf32>
    %46 = vector.extract_strided_slice %45 {offsets = [0, 0], sizes = [2, 96], strides = [1, 1]} : vector<2x128xf32> to vector<2x96xf32>
    %47 = arith.negf %46 : vector<2x96xf32>
    %48 = math.exp %47 : vector<2x96xf32>
    %cst_33 = arith.constant 1.000000e+00 : f32
    %49 = vector.broadcast %cst_33 : f32 to vector<2x96xf32>
    %50 = arith.addf %49, %48 : vector<2x96xf32>
    %51 = arith.divf %49, %50 : vector<2x96xf32>
    %52 = vector.extract_strided_slice %45 {offsets = [0, 96], sizes = [2, 32], strides = [1, 1]} : vector<2x128xf32> to vector<2x32xf32>
    %53 = math.tanh %52 : vector<2x32xf32>
    %54 = vector.extract_strided_slice %51 {offsets = [0, 32], sizes = [2, 32], strides = [1, 1]} : vector<2x96xf32> to vector<2x32xf32>
    %55 = arith.mulf %54, %21 : vector<2x32xf32>
    %56 = vector.extract_strided_slice %51 {offsets = [0, 0], sizes = [2, 32], strides = [1, 1]} : vector<2x96xf32> to vector<2x32xf32>
    %57 = arith.mulf %56, %53 : vector<2x32xf32>
    %58 = arith.addf %55, %57 : vector<2x32xf32>
    %59 = vector.extract_strided_slice %51 {offsets = [0, 64], sizes = [2, 32], strides = [1, 1]} : vector<2x96xf32> to vector<2x32xf32>
    %60 = math.tanh %58 : vector<2x32xf32>
    %61 = arith.mulf %59, %60 : vector<2x32xf32>
    %c0_34 = arith.constant 0 : index
    %c0_35 = arith.constant 0 : index
    %62 = vector.load %arg23[%c0_34, %c0_35] : memref<16x32xf32, #tpu.memory_space<vmem>>, vector<2x32xf32>
    tpu.vector_store %arg23[%c0_34, %c0_35], %61 {strides = array<i32>} : memref<16x32xf32, #tpu.memory_space<vmem>>, vector<2x32xf32>,
    %c2 = arith.constant 2 : index
    %c0_36 = arith.constant 0 : index
    %63 = vector.load %arg22[%c2, %c0_36] : memref<16x128xf32, #tpu.memory_space<vmem>>, vector<2x128xf32>
    %cst_37 = arith.constant dense<0.000000e+00> : vector<2x128xf32>
    %64 = tpu.matmul %40, %5, %cst_37 {dimension_numbers = #tpu.dot_dimension_numbers<[1], [0], [0], [1], [0, 0, 1, 1], [], []>} : vector<2x32xf32>, vector<32x128xf32>, vector<2x128xf32> -> vector<2x128xf32>
    %65 = arith.addf %63, %64 : vector<2x128xf32>
    %66 = vector.extract_strided_slice %65 {offsets = [0, 0], sizes = [2, 96], strides = [1, 1]} : vector<2x128xf32> to vector<2x96xf32>
    %67 = arith.negf %66 : vector<2x96xf32>
    %68 = math.exp %67 : vector<2x96xf32>
    %cst_38 = arith.constant 1.000000e+00 : f32
    %69 = vector.broadcast %cst_38 : f32 to vector<2x96xf32>
    %70 = arith.addf %69, %68 : vector<2x96xf32>
    %71 = arith.divf %69, %70 : vector<2x96xf32>
    %72 = vector.extract_strided_slice %65 {offsets = [0, 96], sizes = [2, 32], strides = [1, 1]} : vector<2x128xf32> to vector<2x32xf32>
    %73 = math.tanh %72 : vector<2x32xf32>
    %74 = vector.extract_strided_slice %71 {offsets = [0, 32], sizes = [2, 32], strides = [1, 1]} : vector<2x96xf32> to vector<2x32xf32>
    %75 = arith.mulf %74, %37 : vector<2x32xf32>
    %76 = vector.extract_strided_slice %71 {offsets = [0, 0], sizes = [2, 32], strides = [1, 1]} : vector<2x96xf32> to vector<2x32xf32>
    %77 = arith.mulf %76, %73 : vector<2x32xf32>
    %78 = arith.addf %75, %77 : vector<2x32xf32>
    %79 = vector.extract_strided_slice %71 {offsets = [0, 64], sizes = [2, 32], strides = [1, 1]} : vector<2x96xf32> to vector<2x32xf32>
    %80 = math.tanh %78 : vector<2x32xf32>
    %81 = arith.mulf %79, %80 : vector<2x32xf32>
    %cst_39 = arith.constant dense<0.000000e+00> : vector<2x128xf32>
    %82 = tpu.matmul %81, %4, %cst_39 {dimension_numbers = #tpu.dot_dimension_numbers<[1], [0], [0], [1], [0, 0, 1, 1], [], []>} : vector<2x32xf32>, vector<32x128xf32>, vector<2x128xf32> -> vector<2x128xf32>
    %cst_40 = arith.constant dense<0.000000e+00> : vector<2x128xf32>
    %83 = tpu.matmul %61, %6, %cst_40 {dimension_numbers = #tpu.dot_dimension_numbers<[1], [0], [0], [1], [0, 0, 1, 1], [], []>} : vector<2x32xf32>, vector<32x128xf32>, vector<2x128xf32> -> vector<2x128xf32>
    %84 = arith.addf %82, %83 : vector<2x128xf32>
    %85 = vector.broadcast %8 : vector<1x128xf32> to vector<2x128xf32>
    %86 = arith.addf %84, %85 : vector<2x128xf32>
    %87 = vector.extract_strided_slice %86 {offsets = [0, 0], sizes = [2, 96], strides = [1, 1]} : vector<2x128xf32> to vector<2x96xf32>
    %88 = arith.negf %87 : vector<2x96xf32>
    %89 = math.exp %88 : vector<2x96xf32>
    %cst_41 = arith.constant 1.000000e+00 : f32
    %90 = vector.broadcast %cst_41 : f32 to vector<2x96xf32>
    %91 = arith.addf %90, %89 : vector<2x96xf32>
    %92 = arith.divf %90, %91 : vector<2x96xf32>
    %93 = vector.extract_strided_slice %86 {offsets = [0, 96], sizes = [2, 32], strides = [1, 1]} : vector<2x128xf32> to vector<2x32xf32>
    %94 = math.tanh %93 : vector<2x32xf32>
    %95 = vector.extract_strided_slice %92 {offsets = [0, 32], sizes = [2, 32], strides = [1, 1]} : vector<2x96xf32> to vector<2x32xf32>
    %96 = arith.mulf %95, %58 : vector<2x32xf32>
    %97 = vector.extract_strided_slice %92 {offsets = [0, 0], sizes = [2, 32], strides = [1, 1]} : vector<2x96xf32> to vector<2x32xf32>
    %98 = arith.mulf %97, %94 : vector<2x32xf32>
    %99 = arith.addf %96, %98 : vector<2x32xf32>
    %100 = vector.extract_strided_slice %92 {offsets = [0, 64], sizes = [2, 32], strides = [1, 1]} : vector<2x96xf32> to vector<2x32xf32>
    %101 = math.tanh %99 : vector<2x32xf32>
    %102 = arith.mulf %100, %101 : vector<2x32xf32>
    %c2_42 = arith.constant 2 : index
    %c0_43 = arith.constant 0 : index
    %103 = vector.load %arg23[%c2_42, %c0_43] : memref<16x32xf32, #tpu.memory_space<vmem>>, vector<2x32xf32>
    tpu.vector_store %arg23[%c2_42, %c0_43], %102 {strides = array<i32>} : memref<16x32xf32, #tpu.memory_space<vmem>>, vector<2x32xf32>,
    %c4 = arith.constant 4 : index
    %c0_44 = arith.constant 0 : index
    %104 = vector.load %arg22[%c4, %c0_44] : memref<16x128xf32, #tpu.memory_space<vmem>>, vector<2x128xf32>
    %cst_45 = arith.constant dense<0.000000e+00> : vector<2x128xf32>
    %105 = tpu.matmul %81, %5, %cst_45 {dimension_numbers = #tpu.dot_dimension_numbers<[1], [0], [0], [1], [0, 0, 1, 1], [], []>} : vector<2x32xf32>, vector<32x128xf32>, vector<2x128xf32> -> vector<2x128xf32>
    %106 = arith.addf %104, %105 : vector<2x128xf32>
    %107 = vector.extract_strided_slice %106 {offsets = [0, 0], sizes = [2, 96], strides = [1, 1]} : vector<2x128xf32> to vector<2x96xf32>
    %108 = arith.negf %107 : vector<2x96xf32>
    %109 = math.exp %108 : vector<2x96xf32>
    %cst_46 = arith.constant 1.000000e+00 : f32
    %110 = vector.broadcast %cst_46 : f32 to vector<2x96xf32>
    %111 = arith.addf %110, %109 : vector<2x96xf32>
    %112 = arith.divf %110, %111 : vector<2x96xf32>
    %113 = vector.extract_strided_slice %106 {offsets = [0, 96], sizes = [2, 32], strides = [1, 1]} : vector<2x128xf32> to vector<2x32xf32>
    %114 = math.tanh %113 : vector<2x32xf32>
    %115 = vector.extract_strided_slice %112 {offsets = [0, 32], sizes = [2, 32], strides = [1, 1]} : vector<2x96xf32> to vector<2x32xf32>
    %116 = arith.mulf %115, %78 : vector<2x32xf32>
    %117 = vector.extract_strided_slice %112 {offsets = [0, 0], sizes = [2, 32], strides = [1, 1]} : vector<2x96xf32> to vector<2x32xf32>
    %118 = arith.mulf %117, %114 : vector<2x32xf32>
    %119 = arith.addf %116, %118 : vector<2x32xf32>
    %120 = vector.extract_strided_slice %112 {offsets = [0, 64], sizes = [2, 32], strides = [1, 1]} : vector<2x96xf32> to vector<2x32xf32>
    %121 = math.tanh %119 : vector<2x32xf32>
    %122 = arith.mulf %120, %121 : vector<2x32xf32>
    %cst_47 = arith.constant dense<0.000000e+00> : vector<2x128xf32>
    %123 = tpu.matmul %122, %4, %cst_47 {dimension_numbers = #tpu.dot_dimension_numbers<[1], [0], [0], [1], [0, 0, 1, 1], [], []>} : vector<2x32xf32>, vector<32x128xf32>, vector<2x128xf32> -> vector<2x128xf32>
    %cst_48 = arith.constant dense<0.000000e+00> : vector<2x128xf32>
    %124 = tpu.matmul %102, %6, %cst_48 {dimension_numbers = #tpu.dot_dimension_numbers<[1], [0], [0], [1], [0, 0, 1, 1], [], []>} : vector<2x32xf32>, vector<32x128xf32>, vector<2x128xf32> -> vector<2x128xf32>
    %125 = arith.addf %123, %124 : vector<2x128xf32>
    %126 = vector.broadcast %8 : vector<1x128xf32> to vector<2x128xf32>
    %127 = arith.addf %125, %126 : vector<2x128xf32>
    %128 = vector.extract_strided_slice %127 {offsets = [0, 0], sizes = [2, 96], strides = [1, 1]} : vector<2x128xf32> to vector<2x96xf32>
    %129 = arith.negf %128 : vector<2x96xf32>
    %130 = math.exp %129 : vector<2x96xf32>
    %cst_49 = arith.constant 1.000000e+00 : f32
    %131 = vector.broadcast %cst_49 : f32 to vector<2x96xf32>
    %132 = arith.addf %131, %130 : vector<2x96xf32>
    %133 = arith.divf %131, %132 : vector<2x96xf32>
    %134 = vector.extract_strided_slice %127 {offsets = [0, 96], sizes = [2, 32], strides = [1, 1]} : vector<2x128xf32> to vector<2x32xf32>
    %135 = math.tanh %134 : vector<2x32xf32>
    %136 = vector.extract_strided_slice %133 {offsets = [0, 32], sizes = [2, 32], strides = [1, 1]} : vector<2x96xf32> to vector<2x32xf32>
    %137 = arith.mulf %136, %99 : vector<2x32xf32>
    %138 = vector.extract_strided_slice %133 {offsets = [0, 0], sizes = [2, 32], strides = [1, 1]} : vector<2x96xf32> to vector<2x32xf32>
    %139 = arith.mulf %138, %135 : vector<2x32xf32>
    %140 = arith.addf %137, %139 : vector<2x32xf32>
    %141 = vector.extract_strided_slice %133 {offsets = [0, 64], sizes = [2, 32], strides = [1, 1]} : vector<2x96xf32> to vector<2x32xf32>
    %142 = math.tanh %140 : vector<2x32xf32>
    %143 = arith.mulf %141, %142 : vector<2x32xf32>
    %c4_50 = arith.constant 4 : index
    %c0_51 = arith.constant 0 : index
    %144 = vector.load %arg23[%c4_50, %c0_51] : memref<16x32xf32, #tpu.memory_space<vmem>>, vector<2x32xf32>
    tpu.vector_store %arg23[%c4_50, %c0_51], %143 {strides = array<i32>} : memref<16x32xf32, #tpu.memory_space<vmem>>, vector<2x32xf32>,
    %c6 = arith.constant 6 : index
    %c0_52 = arith.constant 0 : index
    %145 = vector.load %arg22[%c6, %c0_52] : memref<16x128xf32, #tpu.memory_space<vmem>>, vector<2x128xf32>
    %cst_53 = arith.constant dense<0.000000e+00> : vector<2x128xf32>
    %146 = tpu.matmul %122, %5, %cst_53 {dimension_numbers = #tpu.dot_dimension_numbers<[1], [0], [0], [1], [0, 0, 1, 1], [], []>} : vector<2x32xf32>, vector<32x128xf32>, vector<2x128xf32> -> vector<2x128xf32>
    %147 = arith.addf %145, %146 : vector<2x128xf32>
    %148 = vector.extract_strided_slice %147 {offsets = [0, 0], sizes = [2, 96], strides = [1, 1]} : vector<2x128xf32> to vector<2x96xf32>
    %149 = arith.negf %148 : vector<2x96xf32>
    %150 = math.exp %149 : vector<2x96xf32>
    %cst_54 = arith.constant 1.000000e+00 : f32
    %151 = vector.broadcast %cst_54 : f32 to vector<2x96xf32>
    %152 = arith.addf %151, %150 : vector<2x96xf32>
    %153 = arith.divf %151, %152 : vector<2x96xf32>
    %154 = vector.extract_strided_slice %147 {offsets = [0, 96], sizes = [2, 32], strides = [1, 1]} : vector<2x128xf32> to vector<2x32xf32>
    %155 = math.tanh %154 : vector<2x32xf32>
    %156 = vector.extract_strided_slice %153 {offsets = [0, 32], sizes = [2, 32], strides = [1, 1]} : vector<2x96xf32> to vector<2x32xf32>
    %157 = arith.mulf %156, %119 : vector<2x32xf32>
    %158 = vector.extract_strided_slice %153 {offsets = [0, 0], sizes = [2, 32], strides = [1, 1]} : vector<2x96xf32> to vector<2x32xf32>
    %159 = arith.mulf %158, %155 : vector<2x32xf32>
    %160 = arith.addf %157, %159 : vector<2x32xf32>
    %161 = vector.extract_strided_slice %153 {offsets = [0, 64], sizes = [2, 32], strides = [1, 1]} : vector<2x96xf32> to vector<2x32xf32>
    %162 = math.tanh %160 : vector<2x32xf32>
    %163 = arith.mulf %161, %162 : vector<2x32xf32>
    %cst_55 = arith.constant dense<0.000000e+00> : vector<2x128xf32>
    %164 = tpu.matmul %163, %4, %cst_55 {dimension_numbers = #tpu.dot_dimension_numbers<[1], [0], [0], [1], [0, 0, 1, 1], [], []>} : vector<2x32xf32>, vector<32x128xf32>, vector<2x128xf32> -> vector<2x128xf32>
    %cst_56 = arith.constant dense<0.000000e+00> : vector<2x128xf32>
    %165 = tpu.matmul %143, %6, %cst_56 {dimension_numbers = #tpu.dot_dimension_numbers<[1], [0], [0], [1], [0, 0, 1, 1], [], []>} : vector<2x32xf32>, vector<32x128xf32>, vector<2x128xf32> -> vector<2x128xf32>
    %166 = arith.addf %164, %165 : vector<2x128xf32>
    %167 = vector.broadcast %8 : vector<1x128xf32> to vector<2x128xf32>
    %168 = arith.addf %166, %167 : vector<2x128xf32>
    %169 = vector.extract_strided_slice %168 {offsets = [0, 0], sizes = [2, 96], strides = [1, 1]} : vector<2x128xf32> to vector<2x96xf32>
    %170 = arith.negf %169 : vector<2x96xf32>
    %171 = math.exp %170 : vector<2x96xf32>
    %cst_57 = arith.constant 1.000000e+00 : f32
    %172 = vector.broadcast %cst_57 : f32 to vector<2x96xf32>
    %173 = arith.addf %172, %171 : vector<2x96xf32>
    %174 = arith.divf %172, %173 : vector<2x96xf32>
    %175 = vector.extract_strided_slice %168 {offsets = [0, 96], sizes = [2, 32], strides = [1, 1]} : vector<2x128xf32> to vector<2x32xf32>
    %176 = math.tanh %175 : vector<2x32xf32>
    %177 = vector.extract_strided_slice %174 {offsets = [0, 32], sizes = [2, 32], strides = [1, 1]} : vector<2x96xf32> to vector<2x32xf32>
    %178 = arith.mulf %177, %140 : vector<2x32xf32>
    %179 = vector.extract_strided_slice %174 {offsets = [0, 0], sizes = [2, 32], strides = [1, 1]} : vector<2x96xf32> to vector<2x32xf32>
    %180 = arith.mulf %179, %176 : vector<2x32xf32>
    %181 = arith.addf %178, %180 : vector<2x32xf32>
    %182 = vector.extract_strided_slice %174 {offsets = [0, 64], sizes = [2, 32], strides = [1, 1]} : vector<2x96xf32> to vector<2x32xf32>
    %183 = math.tanh %181 : vector<2x32xf32>
    %184 = arith.mulf %182, %183 : vector<2x32xf32>
    %c6_58 = arith.constant 6 : index
    %c0_59 = arith.constant 0 : index
    %185 = vector.load %arg23[%c6_58, %c0_59] : memref<16x32xf32, #tpu.memory_space<vmem>>, vector<2x32xf32>
    tpu.vector_store %arg23[%c6_58, %c0_59], %184 {strides = array<i32>} : memref<16x32xf32, #tpu.memory_space<vmem>>, vector<2x32xf32>,
    %c8 = arith.constant 8 : index
    %c0_60 = arith.constant 0 : index
    %186 = vector.load %arg22[%c8, %c0_60] : memref<16x128xf32, #tpu.memory_space<vmem>>, vector<2x128xf32>
    %cst_61 = arith.constant dense<0.000000e+00> : vector<2x128xf32>
    %187 = tpu.matmul %163, %5, %cst_61 {dimension_numbers = #tpu.dot_dimension_numbers<[1], [0], [0], [1], [0, 0, 1, 1], [], []>} : vector<2x32xf32>, vector<32x128xf32>, vector<2x128xf32> -> vector<2x128xf32>
    %188 = arith.addf %186, %187 : vector<2x128xf32>
    %189 = vector.extract_strided_slice %188 {offsets = [0, 0], sizes = [2, 96], strides = [1, 1]} : vector<2x128xf32> to vector<2x96xf32>
    %190 = arith.negf %189 : vector<2x96xf32>
    %191 = math.exp %190 : vector<2x96xf32>
    %cst_62 = arith.constant 1.000000e+00 : f32
    %192 = vector.broadcast %cst_62 : f32 to vector<2x96xf32>
    %193 = arith.addf %192, %191 : vector<2x96xf32>
    %194 = arith.divf %192, %193 : vector<2x96xf32>
    %195 = vector.extract_strided_slice %188 {offsets = [0, 96], sizes = [2, 32], strides = [1, 1]} : vector<2x128xf32> to vector<2x32xf32>
    %196 = math.tanh %195 : vector<2x32xf32>
    %197 = vector.extract_strided_slice %194 {offsets = [0, 32], sizes = [2, 32], strides = [1, 1]} : vector<2x96xf32> to vector<2x32xf32>
    %198 = arith.mulf %197, %160 : vector<2x32xf32>
    %199 = vector.extract_strided_slice %194 {offsets = [0, 0], sizes = [2, 32], strides = [1, 1]} : vector<2x96xf32> to vector<2x32xf32>
    %200 = arith.mulf %199, %196 : vector<2x32xf32>
    %201 = arith.addf %198, %200 : vector<2x32xf32>
    %202 = vector.extract_strided_slice %194 {offsets = [0, 64], sizes = [2, 32], strides = [1, 1]} : vector<2x96xf32> to vector<2x32xf32>
    %203 = math.tanh %201 : vector<2x32xf32>
    %204 = arith.mulf %202, %203 : vector<2x32xf32>
    %cst_63 = arith.constant dense<0.000000e+00> : vector<2x128xf32>
    %205 = tpu.matmul %204, %4, %cst_63 {dimension_numbers = #tpu.dot_dimension_numbers<[1], [0], [0], [1], [0, 0, 1, 1], [], []>} : vector<2x32xf32>, vector<32x128xf32>, vector<2x128xf32> -> vector<2x128xf32>
    %cst_64 = arith.constant dense<0.000000e+00> : vector<2x128xf32>
    %206 = tpu.matmul %184, %6, %cst_64 {dimension_numbers = #tpu.dot_dimension_numbers<[1], [0], [0], [1], [0, 0, 1, 1], [], []>} : vector<2x32xf32>, vector<32x128xf32>, vector<2x128xf32> -> vector<2x128xf32>
    %207 = arith.addf %205, %206 : vector<2x128xf32>
    %208 = vector.broadcast %8 : vector<1x128xf32> to vector<2x128xf32>
    %209 = arith.addf %207, %208 : vector<2x128xf32>
    %210 = vector.extract_strided_slice %209 {offsets = [0, 0], sizes = [2, 96], strides = [1, 1]} : vector<2x128xf32> to vector<2x96xf32>
    %211 = arith.negf %210 : vector<2x96xf32>
    %212 = math.exp %211 : vector<2x96xf32>
    %cst_65 = arith.constant 1.000000e+00 : f32
    %213 = vector.broadcast %cst_65 : f32 to vector<2x96xf32>
    %214 = arith.addf %213, %212 : vector<2x96xf32>
    %215 = arith.divf %213, %214 : vector<2x96xf32>
    %216 = vector.extract_strided_slice %209 {offsets = [0, 96], sizes = [2, 32], strides = [1, 1]} : vector<2x128xf32> to vector<2x32xf32>
    %217 = math.tanh %216 : vector<2x32xf32>
    %218 = vector.extract_strided_slice %215 {offsets = [0, 32], sizes = [2, 32], strides = [1, 1]} : vector<2x96xf32> to vector<2x32xf32>
    %219 = arith.mulf %218, %181 : vector<2x32xf32>
    %220 = vector.extract_strided_slice %215 {offsets = [0, 0], sizes = [2, 32], strides = [1, 1]} : vector<2x96xf32> to vector<2x32xf32>
    %221 = arith.mulf %220, %217 : vector<2x32xf32>
    %222 = arith.addf %219, %221 : vector<2x32xf32>
    %223 = vector.extract_strided_slice %215 {offsets = [0, 64], sizes = [2, 32], strides = [1, 1]} : vector<2x96xf32> to vector<2x32xf32>
    %224 = math.tanh %222 : vector<2x32xf32>
    %225 = arith.mulf %223, %224 : vector<2x32xf32>
    %c8_66 = arith.constant 8 : index
    %c0_67 = arith.constant 0 : index
    %226 = vector.load %arg23[%c8_66, %c0_67] : memref<16x32xf32, #tpu.memory_space<vmem>>, vector<2x32xf32>
    tpu.vector_store %arg23[%c8_66, %c0_67], %225 {strides = array<i32>} : memref<16x32xf32, #tpu.memory_space<vmem>>, vector<2x32xf32>,
    %c10 = arith.constant 10 : index
    %c0_68 = arith.constant 0 : index
    %227 = vector.load %arg22[%c10, %c0_68] : memref<16x128xf32, #tpu.memory_space<vmem>>, vector<2x128xf32>
    %cst_69 = arith.constant dense<0.000000e+00> : vector<2x128xf32>
    %228 = tpu.matmul %204, %5, %cst_69 {dimension_numbers = #tpu.dot_dimension_numbers<[1], [0], [0], [1], [0, 0, 1, 1], [], []>} : vector<2x32xf32>, vector<32x128xf32>, vector<2x128xf32> -> vector<2x128xf32>
    %229 = arith.addf %227, %228 : vector<2x128xf32>
    %230 = vector.extract_strided_slice %229 {offsets = [0, 0], sizes = [2, 96], strides = [1, 1]} : vector<2x128xf32> to vector<2x96xf32>
    %231 = arith.negf %230 : vector<2x96xf32>
    %232 = math.exp %231 : vector<2x96xf32>
    %cst_70 = arith.constant 1.000000e+00 : f32
    %233 = vector.broadcast %cst_70 : f32 to vector<2x96xf32>
    %234 = arith.addf %233, %232 : vector<2x96xf32>
    %235 = arith.divf %233, %234 : vector<2x96xf32>
    %236 = vector.extract_strided_slice %229 {offsets = [0, 96], sizes = [2, 32], strides = [1, 1]} : vector<2x128xf32> to vector<2x32xf32>
    %237 = math.tanh %236 : vector<2x32xf32>
    %238 = vector.extract_strided_slice %235 {offsets = [0, 32], sizes = [2, 32], strides = [1, 1]} : vector<2x96xf32> to vector<2x32xf32>
    %239 = arith.mulf %238, %201 : vector<2x32xf32>
    %240 = vector.extract_strided_slice %235 {offsets = [0, 0], sizes = [2, 32], strides = [1, 1]} : vector<2x96xf32> to vector<2x32xf32>
    %241 = arith.mulf %240, %237 : vector<2x32xf32>
    %242 = arith.addf %239, %241 : vector<2x32xf32>
    %243 = vector.extract_strided_slice %235 {offsets = [0, 64], sizes = [2, 32], strides = [1, 1]} : vector<2x96xf32> to vector<2x32xf32>
    %244 = math.tanh %242 : vector<2x32xf32>
    %245 = arith.mulf %243, %244 : vector<2x32xf32>
    %cst_71 = arith.constant dense<0.000000e+00> : vector<2x128xf32>
    %246 = tpu.matmul %245, %4, %cst_71 {dimension_numbers = #tpu.dot_dimension_numbers<[1], [0], [0], [1], [0, 0, 1, 1], [], []>} : vector<2x32xf32>, vector<32x128xf32>, vector<2x128xf32> -> vector<2x128xf32>
    %cst_72 = arith.constant dense<0.000000e+00> : vector<2x128xf32>
    %247 = tpu.matmul %225, %6, %cst_72 {dimension_numbers = #tpu.dot_dimension_numbers<[1], [0], [0], [1], [0, 0, 1, 1], [], []>} : vector<2x32xf32>, vector<32x128xf32>, vector<2x128xf32> -> vector<2x128xf32>
    %248 = arith.addf %246, %247 : vector<2x128xf32>
    %249 = vector.broadcast %8 : vector<1x128xf32> to vector<2x128xf32>
    %250 = arith.addf %248, %249 : vector<2x128xf32>
    %251 = vector.extract_strided_slice %250 {offsets = [0, 0], sizes = [2, 96], strides = [1, 1]} : vector<2x128xf32> to vector<2x96xf32>
    %252 = arith.negf %251 : vector<2x96xf32>
    %253 = math.exp %252 : vector<2x96xf32>
    %cst_73 = arith.constant 1.000000e+00 : f32
    %254 = vector.broadcast %cst_73 : f32 to vector<2x96xf32>
    %255 = arith.addf %254, %253 : vector<2x96xf32>
    %256 = arith.divf %254, %255 : vector<2x96xf32>
    %257 = vector.extract_strided_slice %250 {offsets = [0, 96], sizes = [2, 32], strides = [1, 1]} : vector<2x128xf32> to vector<2x32xf32>
    %258 = math.tanh %257 : vector<2x32xf32>
    %259 = vector.extract_strided_slice %256 {offsets = [0, 32], sizes = [2, 32], strides = [1, 1]} : vector<2x96xf32> to vector<2x32xf32>
    %260 = arith.mulf %259, %222 : vector<2x32xf32>
    %261 = vector.extract_strided_slice %256 {offsets = [0, 0], sizes = [2, 32], strides = [1, 1]} : vector<2x96xf32> to vector<2x32xf32>
    %262 = arith.mulf %261, %258 : vector<2x32xf32>
    %263 = arith.addf %260, %262 : vector<2x32xf32>
    %264 = vector.extract_strided_slice %256 {offsets = [0, 64], sizes = [2, 32], strides = [1, 1]} : vector<2x96xf32> to vector<2x32xf32>
    %265 = math.tanh %263 : vector<2x32xf32>
    %266 = arith.mulf %264, %265 : vector<2x32xf32>
    %c10_74 = arith.constant 10 : index
    %c0_75 = arith.constant 0 : index
    %267 = vector.load %arg23[%c10_74, %c0_75] : memref<16x32xf32, #tpu.memory_space<vmem>>, vector<2x32xf32>
    tpu.vector_store %arg23[%c10_74, %c0_75], %266 {strides = array<i32>} : memref<16x32xf32, #tpu.memory_space<vmem>>, vector<2x32xf32>,
    %c12 = arith.constant 12 : index
    %c0_76 = arith.constant 0 : index
    %268 = vector.load %arg22[%c12, %c0_76] : memref<16x128xf32, #tpu.memory_space<vmem>>, vector<2x128xf32>
    %cst_77 = arith.constant dense<0.000000e+00> : vector<2x128xf32>
    %269 = tpu.matmul %245, %5, %cst_77 {dimension_numbers = #tpu.dot_dimension_numbers<[1], [0], [0], [1], [0, 0, 1, 1], [], []>} : vector<2x32xf32>, vector<32x128xf32>, vector<2x128xf32> -> vector<2x128xf32>
    %270 = arith.addf %268, %269 : vector<2x128xf32>
    %271 = vector.extract_strided_slice %270 {offsets = [0, 0], sizes = [2, 96], strides = [1, 1]} : vector<2x128xf32> to vector<2x96xf32>
    %272 = arith.negf %271 : vector<2x96xf32>
    %273 = math.exp %272 : vector<2x96xf32>
    %cst_78 = arith.constant 1.000000e+00 : f32
    %274 = vector.broadcast %cst_78 : f32 to vector<2x96xf32>
    %275 = arith.addf %274, %273 : vector<2x96xf32>
    %276 = arith.divf %274, %275 : vector<2x96xf32>
    %277 = vector.extract_strided_slice %270 {offsets = [0, 96], sizes = [2, 32], strides = [1, 1]} : vector<2x128xf32> to vector<2x32xf32>
    %278 = math.tanh %277 : vector<2x32xf32>
    %279 = vector.extract_strided_slice %276 {offsets = [0, 32], sizes = [2, 32], strides = [1, 1]} : vector<2x96xf32> to vector<2x32xf32>
    %280 = arith.mulf %279, %242 : vector<2x32xf32>
    %281 = vector.extract_strided_slice %276 {offsets = [0, 0], sizes = [2, 32], strides = [1, 1]} : vector<2x96xf32> to vector<2x32xf32>
    %282 = arith.mulf %281, %278 : vector<2x32xf32>
    %283 = arith.addf %280, %282 : vector<2x32xf32>
    %284 = vector.extract_strided_slice %276 {offsets = [0, 64], sizes = [2, 32], strides = [1, 1]} : vector<2x96xf32> to vector<2x32xf32>
    %285 = math.tanh %283 : vector<2x32xf32>
    %286 = arith.mulf %284, %285 : vector<2x32xf32>
    %cst_79 = arith.constant dense<0.000000e+00> : vector<2x128xf32>
    %287 = tpu.matmul %286, %4, %cst_79 {dimension_numbers = #tpu.dot_dimension_numbers<[1], [0], [0], [1], [0, 0, 1, 1], [], []>} : vector<2x32xf32>, vector<32x128xf32>, vector<2x128xf32> -> vector<2x128xf32>
    %cst_80 = arith.constant dense<0.000000e+00> : vector<2x128xf32>
    %288 = tpu.matmul %266, %6, %cst_80 {dimension_numbers = #tpu.dot_dimension_numbers<[1], [0], [0], [1], [0, 0, 1, 1], [], []>} : vector<2x32xf32>, vector<32x128xf32>, vector<2x128xf32> -> vector<2x128xf32>
    %289 = arith.addf %287, %288 : vector<2x128xf32>
    %290 = vector.broadcast %8 : vector<1x128xf32> to vector<2x128xf32>
    %291 = arith.addf %289, %290 : vector<2x128xf32>
    %292 = vector.extract_strided_slice %291 {offsets = [0, 0], sizes = [2, 96], strides = [1, 1]} : vector<2x128xf32> to vector<2x96xf32>
    %293 = arith.negf %292 : vector<2x96xf32>
    %294 = math.exp %293 : vector<2x96xf32>
    %cst_81 = arith.constant 1.000000e+00 : f32
    %295 = vector.broadcast %cst_81 : f32 to vector<2x96xf32>
    %296 = arith.addf %295, %294 : vector<2x96xf32>
    %297 = arith.divf %295, %296 : vector<2x96xf32>
    %298 = vector.extract_strided_slice %291 {offsets = [0, 96], sizes = [2, 32], strides = [1, 1]} : vector<2x128xf32> to vector<2x32xf32>
    %299 = math.tanh %298 : vector<2x32xf32>
    %300 = vector.extract_strided_slice %297 {offsets = [0, 32], sizes = [2, 32], strides = [1, 1]} : vector<2x96xf32> to vector<2x32xf32>
    %301 = arith.mulf %300, %263 : vector<2x32xf32>
    %302 = vector.extract_strided_slice %297 {offsets = [0, 0], sizes = [2, 32], strides = [1, 1]} : vector<2x96xf32> to vector<2x32xf32>
    %303 = arith.mulf %302, %299 : vector<2x32xf32>
    %304 = arith.addf %301, %303 : vector<2x32xf32>
    %305 = vector.extract_strided_slice %297 {offsets = [0, 64], sizes = [2, 32], strides = [1, 1]} : vector<2x96xf32> to vector<2x32xf32>
    %306 = math.tanh %304 : vector<2x32xf32>
    %307 = arith.mulf %305, %306 : vector<2x32xf32>
    %c12_82 = arith.constant 12 : index
    %c0_83 = arith.constant 0 : index
    %308 = vector.load %arg23[%c12_82, %c0_83] : memref<16x32xf32, #tpu.memory_space<vmem>>, vector<2x32xf32>
    tpu.vector_store %arg23[%c12_82, %c0_83], %307 {strides = array<i32>} : memref<16x32xf32, #tpu.memory_space<vmem>>, vector<2x32xf32>,
    %c14 = arith.constant 14 : index
    %c0_84 = arith.constant 0 : index
    %309 = vector.load %arg22[%c14, %c0_84] : memref<16x128xf32, #tpu.memory_space<vmem>>, vector<2x128xf32>
    %cst_85 = arith.constant dense<0.000000e+00> : vector<2x128xf32>
    %310 = tpu.matmul %286, %5, %cst_85 {dimension_numbers = #tpu.dot_dimension_numbers<[1], [0], [0], [1], [0, 0, 1, 1], [], []>} : vector<2x32xf32>, vector<32x128xf32>, vector<2x128xf32> -> vector<2x128xf32>
    %311 = arith.addf %309, %310 : vector<2x128xf32>
    %312 = vector.extract_strided_slice %311 {offsets = [0, 0], sizes = [2, 96], strides = [1, 1]} : vector<2x128xf32> to vector<2x96xf32>
    %313 = arith.negf %312 : vector<2x96xf32>
    %314 = math.exp %313 : vector<2x96xf32>
    %cst_86 = arith.constant 1.000000e+00 : f32
    %315 = vector.broadcast %cst_86 : f32 to vector<2x96xf32>
    %316 = arith.addf %315, %314 : vector<2x96xf32>
    %317 = arith.divf %315, %316 : vector<2x96xf32>
    %318 = vector.extract_strided_slice %311 {offsets = [0, 96], sizes = [2, 32], strides = [1, 1]} : vector<2x128xf32> to vector<2x32xf32>
    %319 = math.tanh %318 : vector<2x32xf32>
    %320 = vector.extract_strided_slice %317 {offsets = [0, 32], sizes = [2, 32], strides = [1, 1]} : vector<2x96xf32> to vector<2x32xf32>
    %321 = arith.mulf %320, %283 : vector<2x32xf32>
    %322 = vector.extract_strided_slice %317 {offsets = [0, 0], sizes = [2, 32], strides = [1, 1]} : vector<2x96xf32> to vector<2x32xf32>
    %323 = arith.mulf %322, %319 : vector<2x32xf32>
    %324 = arith.addf %321, %323 : vector<2x32xf32>
    %325 = vector.extract_strided_slice %317 {offsets = [0, 64], sizes = [2, 32], strides = [1, 1]} : vector<2x96xf32> to vector<2x32xf32>
    %326 = math.tanh %324 : vector<2x32xf32>
    %327 = arith.mulf %325, %326 : vector<2x32xf32>
    %cst_87 = arith.constant dense<0.000000e+00> : vector<2x128xf32>
    %328 = tpu.matmul %327, %4, %cst_87 {dimension_numbers = #tpu.dot_dimension_numbers<[1], [0], [0], [1], [0, 0, 1, 1], [], []>} : vector<2x32xf32>, vector<32x128xf32>, vector<2x128xf32> -> vector<2x128xf32>
    %cst_88 = arith.constant dense<0.000000e+00> : vector<2x128xf32>
    %329 = tpu.matmul %307, %6, %cst_88 {dimension_numbers = #tpu.dot_dimension_numbers<[1], [0], [0], [1], [0, 0, 1, 1], [], []>} : vector<2x32xf32>, vector<32x128xf32>, vector<2x128xf32> -> vector<2x128xf32>
    %330 = arith.addf %328, %329 : vector<2x128xf32>
    %331 = vector.broadcast %8 : vector<1x128xf32> to vector<2x128xf32>
    %332 = arith.addf %330, %331 : vector<2x128xf32>
    %333 = vector.extract_strided_slice %332 {offsets = [0, 0], sizes = [2, 96], strides = [1, 1]} : vector<2x128xf32> to vector<2x96xf32>
    %334 = arith.negf %333 : vector<2x96xf32>
    %335 = math.exp %334 : vector<2x96xf32>
    %cst_89 = arith.constant 1.000000e+00 : f32
    %336 = vector.broadcast %cst_89 : f32 to vector<2x96xf32>
    %337 = arith.addf %336, %335 : vector<2x96xf32>
    %338 = arith.divf %336, %337 : vector<2x96xf32>
    %339 = vector.extract_strided_slice %332 {offsets = [0, 96], sizes = [2, 32], strides = [1, 1]} : vector<2x128xf32> to vector<2x32xf32>
    %340 = math.tanh %339 : vector<2x32xf32>
    %341 = vector.extract_strided_slice %338 {offsets = [0, 32], sizes = [2, 32], strides = [1, 1]} : vector<2x96xf32> to vector<2x32xf32>
    %342 = arith.mulf %341, %304 : vector<2x32xf32>
    %343 = vector.extract_strided_slice %338 {offsets = [0, 0], sizes = [2, 32], strides = [1, 1]} : vector<2x96xf32> to vector<2x32xf32>
    %344 = arith.mulf %343, %340 : vector<2x32xf32>
    %345 = arith.addf %342, %344 : vector<2x32xf32>
    %346 = vector.extract_strided_slice %338 {offsets = [0, 64], sizes = [2, 32], strides = [1, 1]} : vector<2x96xf32> to vector<2x32xf32>
    %347 = math.tanh %345 : vector<2x32xf32>
    %348 = arith.mulf %346, %347 : vector<2x32xf32>
    %c14_90 = arith.constant 14 : index
    %c0_91 = arith.constant 0 : index
    %349 = vector.load %arg23[%c14_90, %c0_91] : memref<16x32xf32, #tpu.memory_space<vmem>>, vector<2x32xf32>
    tpu.vector_store %arg23[%c14_90, %c0_91], %348 {strides = array<i32>} : memref<16x32xf32, #tpu.memory_space<vmem>>, vector<2x32xf32>,
    %c0_92 = arith.constant 0 : index
    %c0_93 = arith.constant 0 : index
    %c0_94 = arith.constant 0 : index
    %350 = vector.load %arg20[%c0_92, %c0_93, %c0_94] : memref<2x2x32xf32, #tpu.memory_space<vmem>>, vector<1x2x32xf32>
    %351 = vector.shape_cast %350 : vector<1x2x32xf32> to vector<2x32xf32>
    %352 = vector.shape_cast %327 : vector<2x32xf32> to vector<1x2x32xf32>
    tpu.vector_store %arg20[%c0_92, %c0_93, %c0_94], %352 {strides = array<i32>} : memref<2x2x32xf32, #tpu.memory_space<vmem>>, vector<1x2x32xf32>,
    %c0_95 = arith.constant 0 : index
    %c0_96 = arith.constant 0 : index
    %c0_97 = arith.constant 0 : index
    %353 = vector.load %arg21[%c0_95, %c0_96, %c0_97] : memref<2x2x32xf32, #tpu.memory_space<vmem>>, vector<1x2x32xf32>
    %354 = vector.shape_cast %353 : vector<1x2x32xf32> to vector<2x32xf32>
    %355 = vector.shape_cast %324 : vector<2x32xf32> to vector<1x2x32xf32>
    tpu.vector_store %arg21[%c0_95, %c0_96, %c0_97], %355 {strides = array<i32>} : memref<2x2x32xf32, #tpu.memory_space<vmem>>, vector<1x2x32xf32>,
    %c1_98 = arith.constant 1 : index
    %c0_99 = arith.constant 0 : index
    %c0_100 = arith.constant 0 : index
    %356 = vector.load %arg20[%c1_98, %c0_99, %c0_100] : memref<2x2x32xf32, #tpu.memory_space<vmem>>, vector<1x2x32xf32>
    %357 = vector.shape_cast %356 : vector<1x2x32xf32> to vector<2x32xf32>
    %358 = vector.shape_cast %348 : vector<2x32xf32> to vector<1x2x32xf32>
    tpu.vector_store %arg20[%c1_98, %c0_99, %c0_100], %358 {strides = array<i32>} : memref<2x2x32xf32, #tpu.memory_space<vmem>>, vector<1x2x32xf32>,
    %c1_101 = arith.constant 1 : index
    %c0_102 = arith.constant 0 : index
    %c0_103 = arith.constant 0 : index
    %359 = vector.load %arg21[%c1_101, %c0_102, %c0_103] : memref<2x2x32xf32, #tpu.memory_space<vmem>>, vector<1x2x32xf32>
    %360 = vector.shape_cast %359 : vector<1x2x32xf32> to vector<2x32xf32>
    %361 = vector.shape_cast %345 : vector<2x32xf32> to vector<1x2x32xf32>
    tpu.vector_store %arg21[%c1_101, %c0_102, %c0_103], %361 {strides = array<i32>} : memref<2x2x32xf32, #tpu.memory_space<vmem>>, vector<1x2x32xf32>,
    %c0_104 = arith.constant 0 : index
    %c0_105 = arith.constant 0 : index
    %362 = vector.load %arg23[%c0_104, %c0_105] : memref<16x32xf32, #tpu.memory_space<vmem>>, vector<16x32xf32>
    %c0_106 = arith.constant 0 : index
    %c0_107 = arith.constant 0 : index
    %363 = vector.load %arg11[%c0_106, %c0_107] : memref<32x128xf32, #tpu.memory_space<vmem>>, vector<32x128xf32>
    %cst_108 = arith.constant dense<0.000000e+00> : vector<16x128xf32>
    %364 = tpu.matmul %362, %363, %cst_108 {dimension_numbers = #tpu.dot_dimension_numbers<[1], [0], [0], [1], [0, 0, 1, 1], [], []>} : vector<16x32xf32>, vector<32x128xf32>, vector<16x128xf32> -> vector<16x128xf32>
    %c0_109 = arith.constant 0 : index
    %c0_110 = arith.constant 0 : index
    %365 = vector.load %arg12[%c0_109, %c0_110] : memref<1x128xf32, #tpu.memory_space<vmem>>, vector<1x128xf32>
    %366 = vector.broadcast %365 : vector<1x128xf32> to vector<16x128xf32>
    %367 = arith.addf %364, %366 : vector<16x128xf32>
    %c0_111 = arith.constant 0 : index
    %c0_112 = arith.constant 0 : index
    %368 = vector.load %arg13[%c0_111, %c0_112] : memref<32x128xf32, #tpu.memory_space<vmem>>, vector<32x128xf32>
    %cst_113 = arith.constant dense<0.000000e+00> : vector<16x128xf32>
    %369 = tpu.matmul %362, %368, %cst_113 {dimension_numbers = #tpu.dot_dimension_numbers<[1], [0], [0], [1], [0, 0, 1, 1], [], []>} : vector<16x32xf32>, vector<32x128xf32>, vector<16x128xf32> -> vector<16x128xf32>
    %c0_114 = arith.constant 0 : index
    %c0_115 = arith.constant 0 : index
    %370 = vector.load %arg14[%c0_114, %c0_115] : memref<1x128xf32, #tpu.memory_space<vmem>>, vector<1x128xf32>
    %371 = vector.broadcast %370 : vector<1x128xf32> to vector<16x128xf32>
    %372 = arith.addf %369, %371 : vector<16x128xf32>
    %cst_116 = arith.constant 0.000000e+00 : f32
    %373 = vector.broadcast %cst_116 : f32 to vector<16x128xf32>
    %374 = arith.maximumf %372, %373 : vector<16x128xf32>
    %375 = vector.broadcast %cst_116 : f32 to vector<16x128xf32>
    %376 = arith.subf %372, %375 : vector<16x128xf32>
    %377 = arith.cmpf one, %376, %376 : vector<16x128xf32>
    %378 = vector.broadcast %cst_116 : f32 to vector<16x128xf32>
    %379 = arith.addf %372, %378 : vector<16x128xf32>
    %380 = math.absf %376 : vector<16x128xf32>
    %cst_117 = arith.constant 0.000000e+00 : f32
    %381 = vector.broadcast %cst_117 : f32 to vector<16x128xf32>
    %382 = arith.subf %381, %380 : vector<16x128xf32>
    %383 = math.exp %382 : vector<16x128xf32>
    %384 = math.log1p %383 : vector<16x128xf32>
    %385 = arith.addf %374, %384 : vector<16x128xf32>
    %386 = arith.select %377, %379, %385 : vector<16x128xi1>, vector<16x128xf32>
    %387 = math.sqrt %386 : vector<16x128xf32>
    %c0_118 = arith.constant 0 : index
    %c0_119 = arith.constant 0 : index
    %388 = vector.load %arg2[%c0_118, %c0_119] : memref<16x128xf32, #tpu.memory_space<vmem>>, vector<16x128xf32>
    %389 = arith.mulf %387, %388 : vector<16x128xf32>
    %390 = arith.addf %367, %389 : vector<16x128xf32>
    %c0_120 = arith.constant 0 : index
    %c0_121 = arith.constant 0 : index
    %391 = vector.load %arg15[%c0_120, %c0_121] : memref<128x128xf32, #tpu.memory_space<vmem>>, vector<128x128xf32>
    %cst_122 = arith.constant dense<0.000000e+00> : vector<16x128xf32>
    %392 = tpu.matmul %390, %391, %cst_122 {dimension_numbers = #tpu.dot_dimension_numbers<[1], [0], [0], [1], [0, 0, 1, 1], [], []>} : vector<16x128xf32>, vector<128x128xf32>, vector<16x128xf32> -> vector<16x128xf32>
    %c0_123 = arith.constant 0 : index
    %c0_124 = arith.constant 0 : index
    %393 = vector.load %arg16[%c0_123, %c0_124] : memref<1x128xf32, #tpu.memory_space<vmem>>, vector<1x128xf32>
    %394 = vector.broadcast %393 : vector<1x128xf32> to vector<16x128xf32>
    %395 = arith.addf %392, %394 : vector<16x128xf32>
    %c0_125 = arith.constant 0 : index
    %c0_126 = arith.constant 0 : index
    %396 = vector.load %arg17[%c0_125, %c0_126] : memref<16x128xf32, #tpu.memory_space<vmem>>, vector<16x128xf32>
    tpu.vector_store %arg17[%c0_125, %c0_126], %395 {strides = array<i32>} : memref<16x128xf32, #tpu.memory_space<vmem>>, vector<16x128xf32>,
    %c0_127 = arith.constant 0 : index
    %c0_128 = arith.constant 0 : index
    %397 = vector.load %arg18[%c0_127, %c0_128] : memref<16x128xf32, #tpu.memory_space<vmem>>, vector<16x128xf32>
    tpu.vector_store %arg18[%c0_127, %c0_128], %367 {strides = array<i32>} : memref<16x128xf32, #tpu.memory_space<vmem>>, vector<16x128xf32>,
    %c0_129 = arith.constant 0 : index
    %c0_130 = arith.constant 0 : index
    %398 = vector.load %arg19[%c0_129, %c0_130] : memref<16x128xf32, #tpu.memory_space<vmem>>, vector<16x128xf32>
    tpu.vector_store %arg19[%c0_129, %c0_130], %386 {strides = array<i32>} : memref<16x128xf32, #tpu.memory_space<vmem>>, vector<16x128xf32>,
    return
  }
  func.func @transform_0(%arg0: i32) -> (i32, i32) {
    %c0_i32 = arith.constant 0 : i32
    %c0_i32_0 = arith.constant 0 : i32
    return %arg0, %c0_i32 : i32, i32
  }
  func.func @transform_1(%arg0: i32) -> (i32, i32) {
    %c0_i32 = arith.constant 0 : i32
    %c0_i32_0 = arith.constant 0 : i32
    return %arg0, %c0_i32 : i32, i32
  }
  func.func @transform_2(%arg0: i32) -> (i32, i32, i32) {
    %c0_i32 = arith.constant 0 : i32
    %c0_i32_0 = arith.constant 0 : i32
    %c0_i32_1 = arith.constant 0 : i32
    %c0_i32_2 = arith.constant 0 : i32
    return %c0_i32, %c0_i32_0, %c0_i32_1 : i32, i32, i32
  }
  func.func @transform_3(%arg0: i32) -> (i32, i32, i32) {
    %c0_i32 = arith.constant 0 : i32
    %c0_i32_0 = arith.constant 0 : i32
    %c0_i32_1 = arith.constant 0 : i32
    %c0_i32_2 = arith.constant 0 : i32
    return %c0_i32, %c0_i32_0, %c0_i32_1 : i32, i32, i32
  }
  func.func @transform_4(%arg0: i32) -> (i32, i32) {
    %c0_i32 = arith.constant 0 : i32
    %c0_i32_0 = arith.constant 0 : i32
    %c0_i32_1 = arith.constant 0 : i32
    return %c0_i32, %c0_i32_0 : i32, i32
  }
  func.func @transform_5(%arg0: i32) -> (i32, i32) {
    %c0_i32 = arith.constant 0 : i32
    %c0_i32_0 = arith.constant 0 : i32
    %c0_i32_1 = arith.constant 0 : i32
    return %c0_i32, %c0_i32_0 : i32, i32
  }
  func.func @transform_6(%arg0: i32) -> (i32, i32) {
    %c0_i32 = arith.constant 0 : i32
    %c0_i32_0 = arith.constant 0 : i32
    %c0_i32_1 = arith.constant 0 : i32
    return %c0_i32, %c0_i32_0 : i32, i32
  }
  func.func @transform_7(%arg0: i32) -> (i32, i32) {
    %c0_i32 = arith.constant 0 : i32
    %c0_i32_0 = arith.constant 0 : i32
    %c0_i32_1 = arith.constant 0 : i32
    return %c0_i32, %c0_i32_0 : i32, i32
  }
  func.func @transform_8(%arg0: i32) -> (i32, i32) {
    %c0_i32 = arith.constant 0 : i32
    %c0_i32_0 = arith.constant 0 : i32
    %c0_i32_1 = arith.constant 0 : i32
    return %c0_i32, %c0_i32_0 : i32, i32
  }
  func.func @transform_9(%arg0: i32) -> (i32, i32) {
    %c0_i32 = arith.constant 0 : i32
    %c0_i32_0 = arith.constant 0 : i32
    %c0_i32_1 = arith.constant 0 : i32
    return %c0_i32, %c0_i32_0 : i32, i32
  }
  func.func @transform_10(%arg0: i32) -> (i32, i32) {
    %c0_i32 = arith.constant 0 : i32
    %c0_i32_0 = arith.constant 0 : i32
    %c0_i32_1 = arith.constant 0 : i32
    return %c0_i32, %c0_i32_0 : i32, i32
  }
  func.func @transform_11(%arg0: i32) -> (i32, i32) {
    %c0_i32 = arith.constant 0 : i32
    %c0_i32_0 = arith.constant 0 : i32
    %c0_i32_1 = arith.constant 0 : i32
    return %c0_i32, %c0_i32_0 : i32, i32
  }
  func.func @transform_12(%arg0: i32) -> (i32, i32) {
    %c0_i32 = arith.constant 0 : i32
    %c0_i32_0 = arith.constant 0 : i32
    %c0_i32_1 = arith.constant 0 : i32
    return %c0_i32, %c0_i32_0 : i32, i32
  }
  func.func @transform_13(%arg0: i32) -> (i32, i32) {
    %c0_i32 = arith.constant 0 : i32
    %c0_i32_0 = arith.constant 0 : i32
    %c0_i32_1 = arith.constant 0 : i32
    return %c0_i32, %c0_i32_0 : i32, i32
  }
  func.func @transform_14(%arg0: i32) -> (i32, i32) {
    %c0_i32 = arith.constant 0 : i32
    %c0_i32_0 = arith.constant 0 : i32
    %c0_i32_1 = arith.constant 0 : i32
    return %c0_i32, %c0_i32_0 : i32, i32
  }
  func.func @transform_15(%arg0: i32) -> (i32, i32) {
    %c0_i32 = arith.constant 0 : i32
    %c0_i32_0 = arith.constant 0 : i32
    %c0_i32_1 = arith.constant 0 : i32
    return %c0_i32, %c0_i32_0 : i32, i32
  }
  func.func @transform_16(%arg0: i32) -> (i32, i32) {
    %c0_i32 = arith.constant 0 : i32
    %c0_i32_0 = arith.constant 0 : i32
    return %arg0, %c0_i32 : i32, i32
  }
  func.func @transform_17(%arg0: i32) -> (i32, i32) {
    %c0_i32 = arith.constant 0 : i32
    %c0_i32_0 = arith.constant 0 : i32
    return %arg0, %c0_i32 : i32, i32
  }
  func.func @transform_18(%arg0: i32) -> (i32, i32) {
    %c0_i32 = arith.constant 0 : i32
    %c0_i32_0 = arith.constant 0 : i32
    return %arg0, %c0_i32 : i32, i32
  }
}

</mosaic_0001>

<llo_original>
// kernel: sequential_variational_ib_forward.1
$region0: #{sequential_variational_ib_forward.1}
  #allocation0 [shape = 'u32[]', space=smem, size = 0x4, offset = 0x4, fixed_abs, tag = 'smem constant byte address 0x4 - core index']
  #allocation1 [shape = 'u32[72,128]{1,0:T(1,128)}', space=vmem, size = 0x9000, scoped, tag = 'internal scratch']
  #allocation2 [shape = 'f32[2,2,32]{2,1,0:T(2,128)}', space=vmem, size = 0x800, scoped, tag = 'scratch operand']
  #allocation3 [shape = 'f32[2,2,32]{2,1,0:T(2,128)}', space=vmem, size = 0x800, scoped, tag = 'scratch operand']
  #allocation4 [shape = 'f32[16,128]{1,0:T(8,128)}', space=vmem, size = 0x2000, scoped, tag = 'scratch operand']
  #allocation5 [shape = 'f32[16,32]{1,0:T(8,128)}', space=vmem, size = 0x2000, scoped, tag = 'scratch operand']
  %s0 = inlined_call_operand.vmem [shape: f32[32,32], index: 0, kind: input, shape index: {}]
  %s1 = inlined_call_operand.vmem [shape: f32[32,128], index: 1, kind: input, shape index: {}]
  %s2 = inlined_call_operand.vmem [shape: f32[2,2,32], index: 2, kind: input, shape index: {}]
  %s3 = inlined_call_operand.vmem [shape: f32[2,2,32], index: 3, kind: input, shape index: {}]
  %s4 = inlined_call_operand.vmem [shape: f32[32,128], index: 4, kind: input, shape index: {}]
  %s5 = inlined_call_operand.vmem [shape: f32[32,128], index: 5, kind: input, shape index: {}]
  %s6 = inlined_call_operand.vmem [shape: f32[1,128], index: 6, kind: input, shape index: {}]
  %s7 = inlined_call_operand.vmem [shape: f32[32,128], index: 7, kind: input, shape index: {}]
  %s8 = inlined_call_operand.vmem [shape: f32[32,128], index: 8, kind: input, shape index: {}]
  %s9 = inlined_call_operand.vmem [shape: f32[1,128], index: 9, kind: input, shape index: {}]
  %s10 = inlined_call_operand.vmem [shape: f32[32,128], index: 10, kind: input, shape index: {}]
  %s11 = inlined_call_operand.vmem [shape: f32[1,128], index: 11, kind: input, shape index: {}]
  %s12 = inlined_call_operand.vmem [shape: f32[32,128], index: 12, kind: input, shape index: {}]
  %s13 = inlined_call_operand.vmem [shape: f32[1,128], index: 13, kind: input, shape index: {}]
  %s14 = inlined_call_operand.vmem [shape: f32[128,128], index: 14, kind: input, shape index: {}]
  %s15 = inlined_call_operand.vmem [shape: f32[1,128], index: 15, kind: input, shape index: {}]
  %s16 = inlined_call_operand.vmem [shape: f32[32,128], index: 16, kind: output, shape index: {0}]
  %s17 = inlined_call_operand.vmem [shape: f32[32,128], index: 17, kind: output, shape index: {1}]
  %s18 = inlined_call_operand.vmem [shape: f32[32,128], index: 18, kind: output, shape index: {2}]
  %19 = xla_tuple %s16, %s17, %s18
  %s20 = sld [smem:[#allocation0]]
  $region117: #{sequential_variational_ib_forward.1} parent=0
    _
  %s22 = ssub.s32 1, %s20
  %s23 = scalar_select 0, %s22, %s20
  loop: start=0, step=1, limit=4
  $region2: #{sequential_variational_ib_forward.1} parent=0 // loop_pre_header
    _
  $region3: #{sequential_variational_ib_forward.1} parent=0 // loop_header
    %s25 = sphi 0, %s29
    %p26 = scmp.ge.s32.totalorder %s25, 4
    %s35 = sphi 0, %s37
    %s38 = sphi 0, %s35
    %s39 = sphi 0, %s38
    %s55 = sphi 0, %s39
    %s61 = sphi 0, %s63
    %s64 = sphi 0, %s61
    %s65 = sphi 0, %s64
    %s81 = sphi 0, %s65
    %s85 = sphi 0, %s85
    %s87 = sphi 0, %s85
    %s88 = sphi 0, %s87
    %s102 = sphi 0, %s88
    %s106 = sphi 0, %s106
    %s108 = sphi 0, %s106
    %s109 = sphi 0, %s108
    %s123 = sphi 0, %s109
    %s127 = sphi 0, %s127
    %s129 = sphi 0, %s127
    %s130 = sphi 0, %s129
    %s144 = sphi 0, %s130
    %s148 = sphi 0, %s148
    %s150 = sphi 0, %s148
    %s151 = sphi 0, %s150
    %s165 = sphi 0, %s151
    %s169 = sphi 0, %s169
    %s171 = sphi 0, %s169
    %s172 = sphi 0, %s171
    %s186 = sphi 0, %s172
    %s190 = sphi 0, %s190
    %s192 = sphi 0, %s190
    %s193 = sphi 0, %s192
    %s207 = sphi 0, %s193
    %s211 = sphi 0, %s211
    %s213 = sphi 0, %s211
    %s214 = sphi 0, %s213
    %s228 = sphi 0, %s214
    %s232 = sphi 0, %s232
    %s234 = sphi 0, %s232
    %s235 = sphi 0, %s234
    %s249 = sphi 0, %s235
    %s253 = sphi 0, %s253
    %s255 = sphi 0, %s253
    %s256 = sphi 0, %s255
    %s270 = sphi 0, %s256
    %s274 = sphi 0, %s274
    %s276 = sphi 0, %s274
    %s277 = sphi 0, %s276
    %s291 = sphi 0, %s277
    %s295 = sphi 0, %s295
    %s297 = sphi 0, %s295
    %s298 = sphi 0, %s297
    %s312 = sphi 0, %s298
    %s316 = sphi 0, %s316
    %s318 = sphi 0, %s316
    %s319 = sphi 0, %s318
    %s333 = sphi 0, %s319
    %s337 = sphi 0, %s337
    %s339 = sphi 0, %s337
    %s340 = sphi 0, %s339
    %s354 = sphi 0, %s340
    %s358 = sphi 0, %s358
    %s360 = sphi 0, %s358
    %s361 = sphi 0, %s360
    %s375 = sphi 0, %s361
    %s381 = sphi 0, %s383
    %s384 = sphi 0, %s381
    %s385 = sphi 0, %s384
    %s401 = sphi 0, %s385
    %s407 = sphi 0, %s409
    %s410 = sphi 0, %s407
    %s411 = sphi 0, %s410
    %s427 = sphi 0, %s411
    %s433 = sphi 0, %s435
    %s436 = sphi 0, %s433
    %s437 = sphi 0, %s436
    %s453 = sphi 0, %s437
  $region4: #{sequential_variational_ib_forward.1} parent=0 // loop_header_branch
    %28 = sbr.rel (%p26) target = $region8
  $region5: #{sequential_variational_ib_forward.1} parent=0 // loop_body
    %s30 = ssub.s32 %s25, 1
    %s31 = ssub.s32 %s25, 2
    %s32 = sadd.s32 %s25, 1
    %s33 = ssub.s32 %s25, %s32
    %p34 = scmp.eq.s32.totalorder %s33, 0
    %s36 = sadd.s32 %s35, 1
    %s37 = scalar_select %p34, %s35, %s36
    %p40 = pneg %p34
    %p41 = scmp.eq.s32.totalorder %s25, 1
    %p42 = por %p40, %p41
    %p43 = scmp.ne.s32.totalorder %s35, %s38
    %p44 = scmp.eq.s32.totalorder %s25, 0
    %p45 = por %p43, %p44
    %p46 = scmp.ne.s32.totalorder %s35, %s38
    %p47 = scmp.eq.s32.totalorder %s30, 1
    %p48 = por %p46, %p47
    %p49 = scmp.ne.s32.totalorder %s38, %s39
    %p50 = scmp.eq.s32.totalorder %s30, 0
    %p51 = por %p49, %p50
    %p52 = scmp.ne.s32.totalorder %s38, %s39
    %p53 = scmp.eq.s32.totalorder %s31, 1
    %p54 = por %p52, %p53
    %p56 = scmp.ne.s32.totalorder %s39, %s55
    %p57 = scmp.eq.s32.totalorder %s31, 0
    %p58 = por %p56, %p57
    %s59 = ssub.s32 %s25, %s32
    %p60 = scmp.eq.s32.totalorder %s59, 0
    %s62 = sadd.s32 %s61, 1
    %s63 = scalar_select %p60, %s61, %s62
    %p66 = pneg %p60
    %p67 = scmp.eq.s32.totalorder %s25, 1
    %p68 = por %p66, %p67
    %p69 = scmp.ne.s32.totalorder %s61, %s64
    %p70 = scmp.eq.s32.totalorder %s25, 0
    %p71 = por %p69, %p70
    %p72 = scmp.ne.s32.totalorder %s61, %s64
    %p73 = scmp.eq.s32.totalorder %s30, 1
    %p74 = por %p72, %p73
    %p75 = scmp.ne.s32.totalorder %s64, %s65
    %p76 = scmp.eq.s32.totalorder %s30, 0
    %p77 = por %p75, %p76
    %p78 = scmp.ne.s32.totalorder %s64, %s65
    %p79 = scmp.eq.s32.totalorder %s31, 1
    %p80 = por %p78, %p79
    %p82 = scmp.ne.s32.totalorder %s65, %s81
    %p83 = scmp.eq.s32.totalorder %s31, 0
    %p84 = por %p82, %p83
    %s86 = sadd.s32 %s85, 1
    %p89 = scmp.eq.s32.totalorder %s25, 1
    %p90 = scmp.ne.s32.totalorder %s85, %s87
    %p91 = scmp.eq.s32.totalorder %s25, 0
    %p92 = por %p90, %p91
    %p93 = scmp.ne.s32.totalorder %s85, %s87
    %p94 = scmp.eq.s32.totalorder %s30, 1
    %p95 = por %p93, %p94
    %p96 = scmp.ne.s32.totalorder %s87, %s88
    %p97 = scmp.eq.s32.totalorder %s30, 0
    %p98 = por %p96, %p97
    %p99 = scmp.ne.s32.totalorder %s87, %s88
    %p100 = scmp.eq.s32.totalorder %s31, 1
    %p101 = por %p99, %p100
    %p103 = scmp.ne.s32.totalorder %s88, %s102
    %p104 = scmp.eq.s32.totalorder %s31, 0
    %p105 = por %p103, %p104
    %s107 = sadd.s32 %s106, 1
    %p110 = scmp.eq.s32.totalorder %s25, 1
    %p111 = scmp.ne.s32.totalorder %s106, %s108
    %p112 = scmp.eq.s32.totalorder %s25, 0
    %p113 = por %p111, %p112
    %p114 = scmp.ne.s32.totalorder %s106, %s108
    %p115 = scmp.eq.s32.totalorder %s30, 1
    %p116 = por %p114, %p115
    %p117 = scmp.ne.s32.totalorder %s108, %s109
    %p118 = scmp.eq.s32.totalorder %s30, 0
    %p119 = por %p117, %p118
    %p120 = scmp.ne.s32.totalorder %s108, %s109
    %p121 = scmp.eq.s32.totalorder %s31, 1
    %p122 = por %p120, %p121
    %p124 = scmp.ne.s32.totalorder %s109, %s123
    %p125 = scmp.eq.s32.totalorder %s31, 0
    %p126 = por %p124, %p125
    %s128 = sadd.s32 %s127, 1
    %p131 = scmp.eq.s32.totalorder %s25, 1
    %p132 = scmp.ne.s32.totalorder %s127, %s129
    %p133 = scmp.eq.s32.totalorder %s25, 0
    %p134 = por %p132, %p133
    %p135 = scmp.ne.s32.totalorder %s127, %s129
    %p136 = scmp.eq.s32.totalorder %s30, 1
    %p137 = por %p135, %p136
    %p138 = scmp.ne.s32.totalorder %s129, %s130
    %p139 = scmp.eq.s32.totalorder %s30, 0
    %p140 = por %p138, %p139
    %p141 = scmp.ne.s32.totalorder %s129, %s130
    %p142 = scmp.eq.s32.totalorder %s31, 1
    %p143 = por %p141, %p142
    %p145 = scmp.ne.s32.totalorder %s130, %s144
    %p146 = scmp.eq.s32.totalorder %s31, 0
    %p147 = por %p145, %p146
    %s149 = sadd.s32 %s148, 1
    %p152 = scmp.eq.s32.totalorder %s25, 1
    %p153 = scmp.ne.s32.totalorder %s148, %s150
    %p154 = scmp.eq.s32.totalorder %s25, 0
    %p155 = por %p153, %p154
    %p156 = scmp.ne.s32.totalorder %s148, %s150
    %p157 = scmp.eq.s32.totalorder %s30, 1
    %p158 = por %p156, %p157
    %p159 = scmp.ne.s32.totalorder %s150, %s151
    %p160 = scmp.eq.s32.totalorder %s30, 0
    %p161 = por %p159, %p160
    %p162 = scmp.ne.s32.totalorder %s150, %s151
    %p163 = scmp.eq.s32.totalorder %s31, 1
    %p164 = por %p162, %p163
    %p166 = scmp.ne.s32.totalorder %s151, %s165
    %p167 = scmp.eq.s32.totalorder %s31, 0
    %p168 = por %p166, %p167
    %s170 = sadd.s32 %s169, 1
    %p173 = scmp.eq.s32.totalorder %s25, 1
    %p174 = scmp.ne.s32.totalorder %s169, %s171
    %p175 = scmp.eq.s32.totalorder %s25, 0
    %p176 = por %p174, %p175
    %p177 = scmp.ne.s32.totalorder %s169, %s171
    %p178 = scmp.eq.s32.totalorder %s30, 1
    %p179 = por %p177, %p178
    %p180 = scmp.ne.s32.totalorder %s171, %s172
    %p181 = scmp.eq.s32.totalorder %s30, 0
    %p182 = por %p180, %p181
    %p183 = scmp.ne.s32.totalorder %s171, %s172
    %p184 = scmp.eq.s32.totalorder %s31, 1
    %p185 = por %p183, %p184
    %p187 = scmp.ne.s32.totalorder %s172, %s186
    %p188 = scmp.eq.s32.totalorder %s31, 0
    %p189 = por %p187, %p188
    %s191 = sadd.s32 %s190, 1
    %p194 = scmp.eq.s32.totalorder %s25, 1
    %p195 = scmp.ne.s32.totalorder %s190, %s192
    %p196 = scmp.eq.s32.totalorder %s25, 0
    %p197 = por %p195, %p196
    %p198 = scmp.ne.s32.totalorder %s190, %s192
    %p199 = scmp.eq.s32.totalorder %s30, 1
    %p200 = por %p198, %p199
    %p201 = scmp.ne.s32.totalorder %s192, %s193
    %p202 = scmp.eq.s32.totalorder %s30, 0
    %p203 = por %p201, %p202
    %p204 = scmp.ne.s32.totalorder %s192, %s193
    %p205 = scmp.eq.s32.totalorder %s31, 1
    %p206 = por %p204, %p205
    %p208 = scmp.ne.s32.totalorder %s193, %s207
    %p209 = scmp.eq.s32.totalorder %s31, 0
    %p210 = por %p208, %p209
    %s212 = sadd.s32 %s211, 1
    %p215 = scmp.eq.s32.totalorder %s25, 1
    %p216 = scmp.ne.s32.totalorder %s211, %s213
    %p217 = scmp.eq.s32.totalorder %s25, 0
    %p218 = por %p216, %p217
    %p219 = scmp.ne.s32.totalorder %s211, %s213
    %p220 = scmp.eq.s32.totalorder %s30, 1
    %p221 = por %p219, %p220
    %p222 = scmp.ne.s32.totalorder %s213, %s214
    %p223 = scmp.eq.s32.totalorder %s30, 0
    %p224 = por %p222, %p223
    %p225 = scmp.ne.s32.totalorder %s213, %s214
    %p226 = scmp.eq.s32.totalorder %s31, 1
    %p227 = por %p225, %p226
    %p229 = scmp.ne.s32.totalorder %s214, %s228
    %p230 = scmp.eq.s32.totalorder %s31, 0
    %p231 = por %p229, %p230
    %s233 = sadd.s32 %s232, 1
    %p236 = scmp.eq.s32.totalorder %s25, 1
    %p237 = scmp.ne.s32.totalorder %s232, %s234
    %p238 = scmp.eq.s32.totalorder %s25, 0
    %p239 = por %p237, %p238
    %p240 = scmp.ne.s32.totalorder %s232, %s234
    %p241 = scmp.eq.s32.totalorder %s30, 1
    %p242 = por %p240, %p241
    %p243 = scmp.ne.s32.totalorder %s234, %s235
    %p244 = scmp.eq.s32.totalorder %s30, 0
    %p245 = por %p243, %p244
    %p246 = scmp.ne.s32.totalorder %s234, %s235
    %p247 = scmp.eq.s32.totalorder %s31, 1
    %p248 = por %p246, %p247
    %p250 = scmp.ne.s32.totalorder %s235, %s249
    %p251 = scmp.eq.s32.totalorder %s31, 0
    %p252 = por %p250, %p251
    %s254 = sadd.s32 %s253, 1
    %p257 = scmp.eq.s32.totalorder %s25, 1
    %p258 = scmp.ne.s32.totalorder %s253, %s255
    %p259 = scmp.eq.s32.totalorder %s25, 0
    %p260 = por %p258, %p259
    %p261 = scmp.ne.s32.totalorder %s253, %s255
    %p262 = scmp.eq.s32.totalorder %s30, 1
    %p263 = por %p261, %p262
    %p264 = scmp.ne.s32.totalorder %s255, %s256
    %p265 = scmp.eq.s32.totalorder %s30, 0
    %p266 = por %p264, %p265
    %p267 = scmp.ne.s32.totalorder %s255, %s256
    %p268 = scmp.eq.s32.totalorder %s31, 1
    %p269 = por %p267, %p268
    %p271 = scmp.ne.s32.totalorder %s256, %s270
    %p272 = scmp.eq.s32.totalorder %s31, 0
    %p273 = por %p271, %p272
    %s275 = sadd.s32 %s274, 1
    %p278 = scmp.eq.s32.totalorder %s25, 1
    %p279 = scmp.ne.s32.totalorder %s274, %s276
    %p280 = scmp.eq.s32.totalorder %s25, 0
    %p281 = por %p279, %p280
    %p282 = scmp.ne.s32.totalorder %s274, %s276
    %p283 = scmp.eq.s32.totalorder %s30, 1
    %p284 = por %p282, %p283
    %p285 = scmp.ne.s32.totalorder %s276, %s277
    %p286 = scmp.eq.s32.totalorder %s30, 0
    %p287 = por %p285, %p286
    %p288 = scmp.ne.s32.totalorder %s276, %s277
    %p289 = scmp.eq.s32.totalorder %s31, 1
    %p290 = por %p288, %p289
    %p292 = scmp.ne.s32.totalorder %s277, %s291
    %p293 = scmp.eq.s32.totalorder %s31, 0
    %p294 = por %p292, %p293
    %s296 = sadd.s32 %s295, 1
    %p299 = scmp.eq.s32.totalorder %s25, 1
    %p300 = scmp.ne.s32.totalorder %s295, %s297
    %p301 = scmp.eq.s32.totalorder %s25, 0
    %p302 = por %p300, %p301
    %p303 = scmp.ne.s32.totalorder %s295, %s297
    %p304 = scmp.eq.s32.totalorder %s30, 1
    %p305 = por %p303, %p304
    %p306 = scmp.ne.s32.totalorder %s297, %s298
    %p307 = scmp.eq.s32.totalorder %s30, 0
    %p308 = por %p306, %p307
    %p309 = scmp.ne.s32.totalorder %s297, %s298
    %p310 = scmp.eq.s32.totalorder %s31, 1
    %p311 = por %p309, %p310
    %p313 = scmp.ne.s32.totalorder %s298, %s312
    %p314 = scmp.eq.s32.totalorder %s31, 0
    %p315 = por %p313, %p314
    %s317 = sadd.s32 %s316, 1
    %p320 = scmp.eq.s32.totalorder %s25, 1
    %p321 = scmp.ne.s32.totalorder %s316, %s318
    %p322 = scmp.eq.s32.totalorder %s25, 0
    %p323 = por %p321, %p322
    %p324 = scmp.ne.s32.totalorder %s316, %s318
    %p325 = scmp.eq.s32.totalorder %s30, 1
    %p326 = por %p324, %p325
    %p327 = scmp.ne.s32.totalorder %s318, %s319
    %p328 = scmp.eq.s32.totalorder %s30, 0
    %p329 = por %p327, %p328
    %p330 = scmp.ne.s32.totalorder %s318, %s319
    %p331 = scmp.eq.s32.totalorder %s31, 1
    %p332 = por %p330, %p331
    %p334 = scmp.ne.s32.totalorder %s319, %s333
    %p335 = scmp.eq.s32.totalorder %s31, 0
    %p336 = por %p334, %p335
    %s338 = sadd.s32 %s337, 1
    %p341 = scmp.eq.s32.totalorder %s25, 1
    %p342 = scmp.ne.s32.totalorder %s337, %s339
    %p343 = scmp.eq.s32.totalorder %s25, 0
    %p344 = por %p342, %p343
    %p345 = scmp.ne.s32.totalorder %s337, %s339
    %p346 = scmp.eq.s32.totalorder %s30, 1
    %p347 = por %p345, %p346
    %p348 = scmp.ne.s32.totalorder %s339, %s340
    %p349 = scmp.eq.s32.totalorder %s30, 0
    %p350 = por %p348, %p349
    %p351 = scmp.ne.s32.totalorder %s339, %s340
    %p352 = scmp.eq.s32.totalorder %s31, 1
    %p353 = por %p351, %p352
    %p355 = scmp.ne.s32.totalorder %s340, %s354
    %p356 = scmp.eq.s32.totalorder %s31, 0
    %p357 = por %p355, %p356
    %s359 = sadd.s32 %s358, 1
    %p362 = scmp.eq.s32.totalorder %s25, 1
    %p363 = scmp.ne.s32.totalorder %s358, %s360
    %p364 = scmp.eq.s32.totalorder %s25, 0
    %p365 = por %p363, %p364
    %p366 = scmp.ne.s32.totalorder %s358, %s360
    %p367 = scmp.eq.s32.totalorder %s30, 1
    %p368 = por %p366, %p367
    %p369 = scmp.ne.s32.totalorder %s360, %s361
    %p370 = scmp.eq.s32.totalorder %s30, 0
    %p371 = por %p369, %p370
    %p372 = scmp.ne.s32.totalorder %s360, %s361
    %p373 = scmp.eq.s32.totalorder %s31, 1
    %p374 = por %p372, %p373
    %p376 = scmp.ne.s32.totalorder %s361, %s375
    %p377 = scmp.eq.s32.totalorder %s31, 0
    %p378 = por %p376, %p377
    %s379 = ssub.s32 %s25, %s32
    %p380 = scmp.eq.s32.totalorder %s379, 0
    %s382 = sadd.s32 %s381, 1
    %s383 = scalar_select %p380, %s381, %s382
    %p386 = pneg %p380
    %p387 = scmp.eq.s32.totalorder %s25, 1
    %p388 = por %p386, %p387
    %p389 = scmp.ne.s32.totalorder %s381, %s384
    %p390 = scmp.eq.s32.totalorder %s25, 0
    %p391 = por %p389, %p390
    %p392 = scmp.ne.s32.totalorder %s381, %s384
    %p393 = scmp.eq.s32.totalorder %s30, 1
    %p394 = por %p392, %p393
    %p395 = scmp.ne.s32.totalorder %s384, %s385
    %p396 = scmp.eq.s32.totalorder %s30, 0
    %p397 = por %p395, %p396
    %p398 = scmp.ne.s32.totalorder %s384, %s385
    %p399 = scmp.eq.s32.totalorder %s31, 1
    %p400 = por %p398, %p399
    %p402 = scmp.ne.s32.totalorder %s385, %s401
    %p403 = scmp.eq.s32.totalorder %s31, 0
    %p404 = por %p402, %p403
    %s405 = ssub.s32 %s25, %s32
    %p406 = scmp.eq.s32.totalorder %s405, 0
    %s408 = sadd.s32 %s407, 1
    %s409 = scalar_select %p406, %s407, %s408
    %p412 = pneg %p406
    %p413 = scmp.eq.s32.totalorder %s25, 1
    %p414 = por %p412, %p413
    %p415 = scmp.ne.s32.totalorder %s407, %s410
    %p416 = scmp.eq.s32.totalorder %s25, 0
    %p417 = por %p415, %p416
    %p418 = scmp.ne.s32.totalorder %s407, %s410
    %p419 = scmp.eq.s32.totalorder %s30, 1
    %p420 = por %p418, %p419
    %p421 = scmp.ne.s32.totalorder %s410, %s411
    %p422 = scmp.eq.s32.totalorder %s30, 0
    %p423 = por %p421, %p422
    %p424 = scmp.ne.s32.totalorder %s410, %s411
    %p425 = scmp.eq.s32.totalorder %s31, 1
    %p426 = por %p424, %p425
    %p428 = scmp.ne.s32.totalorder %s411, %s427
    %p429 = scmp.eq.s32.totalorder %s31, 0
    %p430 = por %p428, %p429
    %s431 = ssub.s32 %s25, %s32
    %p432 = scmp.eq.s32.totalorder %s431, 0
    %s434 = sadd.s32 %s433, 1
    %s435 = scalar_select %p432, %s433, %s434
    %p438 = pneg %p432
    %p439 = scmp.eq.s32.totalorder %s25, 1
    %p440 = por %p438, %p439
    %p441 = scmp.ne.s32.totalorder %s433, %s436
    %p442 = scmp.eq.s32.totalorder %s25, 0
    %p443 = por %p441, %p442
    %p444 = scmp.ne.s32.totalorder %s433, %s436
    %p445 = scmp.eq.s32.totalorder %s30, 1
    %p446 = por %p444, %p445
    %p447 = scmp.ne.s32.totalorder %s436, %s437
    %p448 = scmp.eq.s32.totalorder %s30, 0
    %p449 = por %p447, %p448
    %p450 = scmp.ne.s32.totalorder %s436, %s437
    %p451 = scmp.eq.s32.totalorder %s31, 1
    %p452 = por %p450, %p451
    %p454 = scmp.ne.s32.totalorder %s437, %s453
    %p455 = scmp.eq.s32.totalorder %s31, 0
    %p456 = por %p454, %p455
    %p457 = scmp.le.s32.totalorder 1, %s25
    %p458 = scmp.lt.s32.totalorder %s25, 3
    %p459 = pnand %p457, %p458
    %p460 = pneg %p459
    // Predicated region
    $region9: #{sequential_variational_ib_forward.1} parent=5 // pred_check
      _
    $region10: #{sequential_variational_ib_forward.1} parent=5 // pred_check_branch
      %462 = sbr.rel (%p459) target = $region12
    $region11: #{sequential_variational_ib_forward.1} parent=5 // pred_region
      %s463 = ssub.s32 %s25, 1
      // Predicated region
      $region13: #{sequential_variational_ib_forward.1} parent=11 // pred_check
        %p464 = pneg %p98
      $region14: #{sequential_variational_ib_forward.1} parent=11 // pred_check_branch
        %466 = sbr.rel (%p464) target = $region16
      $region15: #{sequential_variational_ib_forward.1} parent=11 // pred_region
        _
      $region16: #{sequential_variational_ib_forward.1} parent=11 // pred_fallthru
        _
      // Predicated region
      $region17: #{sequential_variational_ib_forward.1} parent=11 // pred_check
        %p467 = pneg %p119
      $region18: #{sequential_variational_ib_forward.1} parent=11 // pred_check_branch
        %469 = sbr.rel (%p467) target = $region20
      $region19: #{sequential_variational_ib_forward.1} parent=11 // pred_region
        _
      $region20: #{sequential_variational_ib_forward.1} parent=11 // pred_fallthru
        _
      // Predicated region
      $region21: #{sequential_variational_ib_forward.1} parent=11 // pred_check
        %p470 = pneg %p140
      $region22: #{sequential_variational_ib_forward.1} parent=11 // pred_check_branch
        %472 = sbr.rel (%p470) target = $region24
      $region23: #{sequential_variational_ib_forward.1} parent=11 // pred_region
        _
      $region24: #{sequential_variational_ib_forward.1} parent=11 // pred_fallthru
        _
      // Predicated region
      $region25: #{sequential_variational_ib_forward.1} parent=11 // pred_check
        %p473 = pneg %p161
      $region26: #{sequential_variational_ib_forward.1} parent=11 // pred_check_branch
        %475 = sbr.rel (%p473) target = $region28
      $region27: #{sequential_variational_ib_forward.1} parent=11 // pred_region
        _
      $region28: #{sequential_variational_ib_forward.1} parent=11 // pred_fallthru
        _
      // Predicated region
      $region29: #{sequential_variational_ib_forward.1} parent=11 // pred_check
        %p476 = pneg %p182
      $region30: #{sequential_variational_ib_forward.1} parent=11 // pred_check_branch
        %478 = sbr.rel (%p476) target = $region32
      $region31: #{sequential_variational_ib_forward.1} parent=11 // pred_region
        _
      $region32: #{sequential_variational_ib_forward.1} parent=11 // pred_fallthru
        _
      // Predicated region
      $region33: #{sequential_variational_ib_forward.1} parent=11 // pred_check
        %p479 = pneg %p203
      $region34: #{sequential_variational_ib_forward.1} parent=11 // pred_check_branch
        %481 = sbr.rel (%p479) target = $region36
      $region35: #{sequential_variational_ib_forward.1} parent=11 // pred_region
        _
      $region36: #{sequential_variational_ib_forward.1} parent=11 // pred_fallthru
        _
      // Predicated region
      $region37: #{sequential_variational_ib_forward.1} parent=11 // pred_check
        %p482 = pneg %p224
      $region38: #{sequential_variational_ib_forward.1} parent=11 // pred_check_branch
        %484 = sbr.rel (%p482) target = $region40
      $region39: #{sequential_variational_ib_forward.1} parent=11 // pred_region
        _
      $region40: #{sequential_variational_ib_forward.1} parent=11 // pred_fallthru
        _
      // Predicated region
      $region41: #{sequential_variational_ib_forward.1} parent=11 // pred_check
        %p485 = pneg %p245
      $region42: #{sequential_variational_ib_forward.1} parent=11 // pred_check_branch
        %487 = sbr.rel (%p485) target = $region44
      $region43: #{sequential_variational_ib_forward.1} parent=11 // pred_region
        _
      $region44: #{sequential_variational_ib_forward.1} parent=11 // pred_fallthru
        _
      // Predicated region
      $region45: #{sequential_variational_ib_forward.1} parent=11 // pred_check
        %p488 = pneg %p266
      $region46: #{sequential_variational_ib_forward.1} parent=11 // pred_check_branch
        %490 = sbr.rel (%p488) target = $region48
      $region47: #{sequential_variational_ib_forward.1} parent=11 // pred_region
        _
      $region48: #{sequential_variational_ib_forward.1} parent=11 // pred_fallthru
        _
      // Predicated region
      $region49: #{sequential_variational_ib_forward.1} parent=11 // pred_check
        %p491 = pneg %p287
      $region50: #{sequential_variational_ib_forward.1} parent=11 // pred_check_branch
        %493 = sbr.rel (%p491) target = $region52
      $region51: #{sequential_variational_ib_forward.1} parent=11 // pred_region
        _
      $region52: #{sequential_variational_ib_forward.1} parent=11 // pred_fallthru
        _
      // Predicated region
      $region53: #{sequential_variational_ib_forward.1} parent=11 // pred_check
        %p494 = pneg %p308
      $region54: #{sequential_variational_ib_forward.1} parent=11 // pred_check_branch
        %496 = sbr.rel (%p494) target = $region56
      $region55: #{sequential_variational_ib_forward.1} parent=11 // pred_region
        _
      $region56: #{sequential_variational_ib_forward.1} parent=11 // pred_fallthru
        _
      // Predicated region
      $region57: #{sequential_variational_ib_forward.1} parent=11 // pred_check
        %p497 = pneg %p329
      $region58: #{sequential_variational_ib_forward.1} parent=11 // pred_check_branch
        %499 = sbr.rel (%p497) target = $region60
      $region59: #{sequential_variational_ib_forward.1} parent=11 // pred_region
        _
      $region60: #{sequential_variational_ib_forward.1} parent=11 // pred_fallthru
        _
      // Predicated region
      $region61: #{sequential_variational_ib_forward.1} parent=11 // pred_check
        %p500 = pneg %p350
      $region62: #{sequential_variational_ib_forward.1} parent=11 // pred_check_branch
        %502 = sbr.rel (%p500) target = $region64
      $region63: #{sequential_variational_ib_forward.1} parent=11 // pred_region
        _
      $region64: #{sequential_variational_ib_forward.1} parent=11 // pred_fallthru
        _
      // Predicated region
      $region65: #{sequential_variational_ib_forward.1} parent=11 // pred_check
        %p503 = pneg %p371
      $region66: #{sequential_variational_ib_forward.1} parent=11 // pred_check_branch
        %505 = sbr.rel (%p503) target = $region68
      $region67: #{sequential_variational_ib_forward.1} parent=11 // pred_region
        _
      $region68: #{sequential_variational_ib_forward.1} parent=11 // pred_fallthru
        _
    $region12: #{sequential_variational_ib_forward.1} parent=5 // pred_fallthru
      _
    %p506 = scmp.lt.s32.totalorder %s25, 2
    // Predicated region
    $region69: #{sequential_variational_ib_forward.1} parent=5 // pred_check
      %p507 = pneg %p506
    $region70: #{sequential_variational_ib_forward.1} parent=5 // pred_check_branch
      %509 = sbr.rel (%p507) target = $region72
    $region71: #{sequential_variational_ib_forward.1} parent=5 // pred_region
      // Predicated region
      $region73: #{sequential_variational_ib_forward.1} parent=71 // pred_check
        %p510 = pneg %p45
      $region74: #{sequential_variational_ib_forward.1} parent=71 // pred_check_branch
        %512 = sbr.rel (%p510) target = $region76
      $region75: #{sequential_variational_ib_forward.1} parent=71 // pred_region
        %s513 = smul.u32 2, %s25
        %p514 = scmp.lt.s32.totalorder %s513, 3
        %s515 = scalar_select %p514, %s513, 3
        %s516 = smul.addr %s515, 8
        %s517 = scalar_lea.vmem %s0, %s516
        %s518 = smul.u32 2, %s25
      $region76: #{sequential_variational_ib_forward.1} parent=71 // pred_fallthru
        _
      // Predicated region
      $region77: #{sequential_variational_ib_forward.1} parent=71 // pred_check
        %p519 = pneg %p71
      $region78: #{sequential_variational_ib_forward.1} parent=71 // pred_check_branch
        %521 = sbr.rel (%p519) target = $region80
      $region79: #{sequential_variational_ib_forward.1} parent=71 // pred_region
        %s522 = smul.u32 2, %s25
        %p523 = scmp.lt.s32.totalorder %s522, 3
        %s524 = scalar_select %p523, %s522, 3
        %s525 = smul.addr %s524, 8
        %s526 = scalar_lea.vmem %s1, %s525
        %s527 = smul.u32 2, %s25
      $region80: #{sequential_variational_ib_forward.1} parent=71 // pred_fallthru
        _
    $region72: #{sequential_variational_ib_forward.1} parent=5 // pred_fallthru
      _
    %p528 = scmp.le.s32.totalorder 1, %s25
    %p529 = scmp.lt.s32.totalorder %s25, 3
    %p530 = pnand %p528, %p529
    %p531 = pneg %p530
    // Predicated region
    $region81: #{sequential_variational_ib_forward.1} parent=5 // pred_check
      _
    $region82: #{sequential_variational_ib_forward.1} parent=5 // pred_check_branch
      %533 = sbr.rel (%p530) target = $region84
    $region83: #{sequential_variational_ib_forward.1} parent=5 // pred_region
      %s534 = ssub.s32 %s25, 1
      %s535 = smul.u32 2, %s30
      %p536 = scmp.lt.s32.totalorder %s535, 3
      %s537 = scalar_select %p536, %s535, 3
      %s538 = smul.addr %s537, 8
      %s539 = scalar_lea.vmem %s0, %s538
      %p540 = pneg %p51
      %p541 = pneg %p48
      %s542 = smul.u32 2, %s30
      %p543 = scmp.lt.s32.totalorder %s542, 3
      %s544 = scalar_select %p543, %s542, 3
      %s545 = smul.addr %s544, 8
      %s546 = scalar_lea.vmem %s1, %s545
      %p547 = pneg %p77
      %p548 = pneg %p74
      %p549 = pneg %p98
      %p550 = pneg %p95
      %p551 = pneg %p119
      %p552 = pneg %p116
      %p553 = pneg %p140
      %p554 = pneg %p137
      %p555 = pneg %p161
      %p556 = pneg %p158
      %p557 = pneg %p182
      %p558 = pneg %p179
      %p559 = pneg %p203
      %p560 = pneg %p200
      %p561 = pneg %p224
      %p562 = pneg %p221
      %p563 = pneg %p245
      %p564 = pneg %p242
      %p565 = pneg %p266
      %p566 = pneg %p263
      %p567 = pneg %p287
      %p568 = pneg %p284
      %p569 = pneg %p308
      %p570 = pneg %p305
      %p571 = pneg %p329
      %p572 = pneg %p326
      %p573 = pneg %p350
      %p574 = pneg %p347
      %p575 = pneg %p371
      %p576 = pneg %p368
      %p577 = pneg %p397
      %p578 = pneg %p394
      %s579 = smul.u32 2, %s30
      %p580 = scmp.lt.s32.totalorder %s579, 3
      %s581 = scalar_select %p580, %s579, 3
      %s582 = smul.addr %s581, 8
      %s583 = scalar_lea.vmem %s16, %s582
      %p584 = pneg %p423
      %p585 = pneg %p420
      %s586 = smul.u32 2, %s30
      %p587 = scmp.lt.s32.totalorder %s586, 3
      %s588 = scalar_select %p587, %s586, 3
      %s589 = smul.addr %s588, 8
      %s590 = scalar_lea.vmem %s17, %s589
      %p591 = pneg %p449
      %p592 = pneg %p446
      %s593 = smul.u32 2, %s30
      %p594 = scmp.lt.s32.totalorder %s593, 3
      %s595 = scalar_select %p594, %s593, 3
      %s596 = smul.addr %s595, 8
      %s597 = scalar_lea.vmem %s18, %s596
      %s598 = smul.u32 2, %s30
      %p599 = scmp.lt.s32.totalorder %s598, 3
      %s600 = scalar_select %p599, %s598, 3
      %s601 = smul.addr %s600, 8
      %s602 = scalar_lea.vmem %s0, %s601
      %s603 = smul.u32 2, %s30
      %s604 = smul.u32 2, %s30
      %p605 = scmp.lt.s32.totalorder %s604, 3
      %s606 = scalar_select %p605, %s604, 3
      %s607 = smul.addr %s606, 8
      %s608 = scalar_lea.vmem %s1, %s607
      %s609 = smul.u32 2, %s30
      %s610 = smul.u32 2, %s30
      %p611 = scmp.lt.s32.totalorder %s610, 3
      %s612 = scalar_select %p611, %s610, 3
      %s613 = smul.addr %s612, 8
      %s614 = scalar_lea.vmem %s16, %s613
      %s615 = smul.u32 2, %s30
      %s616 = smul.u32 2, %s30
      %p617 = scmp.lt.s32.totalorder %s616, 3
      %s618 = scalar_select %p617, %s616, 3
      %s619 = smul.addr %s618, 8
      %s620 = scalar_lea.vmem %s17, %s619
      %s621 = smul.u32 2, %s30
      %s622 = smul.u32 2, %s30
      %p623 = scmp.lt.s32.totalorder %s622, 3
      %s624 = scalar_select %p623, %s622, 3
      %s625 = smul.addr %s624, 8
      %s626 = scalar_lea.vmem %s18, %s625
      %s627 = smul.u32 2, %s30
      %p628 = scmp.eq.s32.totalorder %s30, 0
      // Predicated region
      $region85: #{sequential_variational_ib_forward.1} parent=83 // pred_check
        %p629 = pneg %p628
      $region86: #{sequential_variational_ib_forward.1} parent=83 // pred_check_branch
        %631 = sbr.rel (%p629) target = $region88
      $region87: #{sequential_variational_ib_forward.1} parent=83 // pred_region
        %v632 = vld [vmem:[%s2] sm:$0x3]
        %v633 = vld [vmem:[%s2 + $0x2] sm:$0x3]
        %vm634 = vcmask 254976
        %635 = vst.msk [vmem:[#allocation2] sm:$0x3] %vm634, %v632
        %636 = vst.msk [vmem:[#allocation2 + $0x2] sm:$0x3] %vm634, %v633
        %v637 = vld [vmem:[%s3] sm:$0x3]
        %v638 = vld [vmem:[%s3 + $0x2] sm:$0x3]
        %639 = vst.msk [vmem:[#allocation3] sm:$0x3] %vm634, %v637
        %640 = vst.msk [vmem:[#allocation3 + $0x2] sm:$0x3] %vm634, %v638
      $region88: #{sequential_variational_ib_forward.1} parent=83 // pred_fallthru
        _
      %v641 = vld [vmem:[%s4] sm:$0xff]
      %v642 = vld [vmem:[%s4 + $0x8] sm:$0xff]
      %v643 = vld [vmem:[%s4 + $0x10] sm:$0xff]
      %v644 = vld [vmem:[%s4 + $0x18] sm:$0xff]
      %v645 = vld [vmem:[%s7] sm:$0xff]
      %v646 = vld [vmem:[%s7 + $0x8] sm:$0xff]
      %v647 = vld [vmem:[%s7 + $0x10] sm:$0xff]
      %v648 = vld [vmem:[%s7 + $0x18] sm:$0xff]
      %v649 = vld [vmem:[%s5] sm:$0xff]
      %v650 = vld [vmem:[%s5 + $0x8] sm:$0xff]
      %v651 = vld [vmem:[%s5 + $0x10] sm:$0xff]
      %v652 = vld [vmem:[%s5 + $0x18] sm:$0xff]
      %v653 = vld [vmem:[%s8] sm:$0xff]
      %v654 = vld [vmem:[%s8 + $0x8] sm:$0xff]
      %v655 = vld [vmem:[%s8 + $0x10] sm:$0xff]
      %v656 = vld [vmem:[%s8 + $0x18] sm:$0xff]
      %v657 = vld [vmem:[%s6] sm:$0x1]
      %v658 = vld [vmem:[%s9] sm:$0x1]
      %v659 = vld [vmem:[%s602] sm:$0xff]
      %v660 = vld [vmem:[%s602 + $0x8] sm:$0xff]
      %v662 = vperm.slane %v657, 0
      %vm664 = vcmask 261120
      %v666 = vsel %vm664, %v659, 0
      %v669 = vsel %vm664, %v660, 0
      %671 = vmatpush.msra.mxu0 0.0
      %672 = vmatpush.msra.mxu0 0.0
      %673 = vmatpush.msra.mxu0 0.0
      %674 = vmatpush.msra.mxu0 0.0
      %675 = vmatpush.msra.mxu0 0.0
      %676 = vmatpush.msra.mxu0 0.0
      %677 = vmatpush.msra.mxu0 0.0
      %678 = vmatpush.msra.mxu0 0.0
      %679 = vmatpush.msra.mxu0 0.0
      %680 = vmatpush.msra.mxu0 0.0
      %681 = vmatpush.msra.mxu0 0.0
      %682 = vmatpush.msra.mxu0 0.0
      %683 = vmatpush.msra.mxu0 %v644
      %684 = vmatpush.msra.mxu0 %v643
      %685 = vmatpush.msra.mxu0 %v642
      %686 = vmatpush.msra.mxu0 %v641
      %687 = vmatmul.f32.gmra.mxu0 %v666
      %v688 = vpop.f32.mrf.mxu0
      %v689 = vadd.f32 %v662, %v688
      %690 = vmatmul.f32.gmra.mxu0 %v669
      %v691 = vpop.f32.mrf.mxu0
      %v692 = vadd.f32 %v662, %v691
      %693 = vdwg.mxu0
      %694 = vst [vmem:[#allocation4] sm:$0xff] %v689
      %695 = vst [vmem:[#allocation4 + $0x8] sm:$0xff] %v692
      %v696 = vld [vmem:[#allocation2] sm:$0x3]
      %s697 = scalar_lea.vmem [#allocation2], 2
      %v698 = vld [vmem:[%s697] sm:$0x3]
      %v699 = vld [vmem:[#allocation3] sm:$0x3]
      %s700 = scalar_lea.vmem [#allocation3], 2
      %v701 = vld [vmem:[%s700] sm:$0x3]
      %v702 = vld [vmem:[#allocation4] sm:$0x3]
      %v704 = vsel %vm664, %v696, 0
      %706 = vmatpush.msra.mxu0 0.0
      %707 = vmatpush.msra.mxu0 0.0
      %708 = vmatpush.msra.mxu0 0.0
      %709 = vmatpush.msra.mxu0 0.0
      %710 = vmatpush.msra.mxu0 0.0
      %711 = vmatpush.msra.mxu0 0.0
      %712 = vmatpush.msra.mxu0 0.0
      %713 = vmatpush.msra.mxu0 0.0
      %714 = vmatpush.msra.mxu0 0.0
      %715 = vmatpush.msra.mxu0 0.0
      %716 = vmatpush.msra.mxu0 0.0
      %717 = vmatpush.msra.mxu0 0.0
      %718 = vmatpush.msra.mxu0 %v652
      %719 = vmatpush.msra.mxu0 %v651
      %720 = vmatpush.msra.mxu0 %v650
      %721 = vmatpush.msra.mxu0 %v649
      %722 = vmatmul.f32.gmra.mxu0 %v704
      %v723 = vpop.f32.mrf.mxu0
      %v724 = vadd.f32 0.0, %v723
      %725 = vdwg.mxu0
      %v726 = vadd.f32 %v702, %v724
      %v727 = vxor.u32 %v726, 2147483648
      %v728 = vmul.f32 %v727, 1.442695
      %v729 = vpow.pop %v728
      %v730 = vadd.f32 %v729, 1.0
      %v731 = vrcp.pop %v730
      %v732 = vmul.f32 %v730, %v731
      %v733 = vsub.f32 1.0, %v732
      %v734 = vmul.f32 %v731, %v733
      %v735 = vadd.f32 %v731, %v734
      %vm736 = vweird.f32 %v730
      %vm737 = vweird.f32 %v731
      %vm738 = vmor %vm736, %vm737
      %v739 = vsel %vm738, %v731, %v735
      %v740 = vand.u32 2147483647, %v730
      %vm741 = vcmp.eq.f32.partialorder %v740, 8.507059e+37
      %v742 = vand.u32 %v730, 2147483648
      %v743 = vor.u32 1.1754944e-38, %v742
      %v744 = vsel %vm741, %v743, %v739
      %v745 = vmul.f32 1.0, %v744
      %v746 = vtanh.pop %v726
      %748 = vrot.lane.b32.xlu0 %v699, 32
      %v749 = vpop.permute.xlu0 %748
      %v751 = vmul.f32 %v745, %v749
      %753 = vrot.lane.b32.xlu0 %v746, 32
      %v754 = vpop.permute.xlu0 %753
      %v756 = vmul.f32 %v745, %v754
      %758 = vrot.lane.b32.xlu0 %v756, 32
      %v759 = vpop.permute.xlu0 %758
      %v761 = vadd.f32 %v751, %v759
      %v762 = vtanh.pop %v761
      %764 = vrot.lane.b32.xlu0 %v762, 32
      %v765 = vpop.permute.xlu0 %764
      %v767 = vmul.f32 %v745, %v765
      %v769 = vsel %vm664, %v698, 0
      %771 = vmatpush.msra.mxu0 0.0
      %772 = vmatpush.msra.mxu0 0.0
      %773 = vmatpush.msra.mxu0 0.0
      %774 = vmatpush.msra.mxu0 0.0
      %775 = vmatpush.msra.mxu0 0.0
      %776 = vmatpush.msra.mxu0 0.0
      %777 = vmatpush.msra.mxu0 0.0
      %778 = vmatpush.msra.mxu0 0.0
      %779 = vmatpush.msra.mxu0 0.0
      %780 = vmatpush.msra.mxu0 0.0
      %781 = vmatpush.msra.mxu0 0.0
      %782 = vmatpush.msra.mxu0 0.0
      %783 = vmatpush.msra.mxu0 %v656
      %784 = vmatpush.msra.mxu0 %v655
      %785 = vmatpush.msra.mxu0 %v654
      %786 = vmatpush.msra.mxu0 %v653
      %787 = vmatmul.f32.gmra.mxu0 %v769
      %v788 = vpop.f32.mrf.mxu0
      %v789 = vadd.f32 0.0, %v788
      %790 = vdwg.mxu0
      %792 = vrot.lane.b32.xlu0 %v767, 64
      %v793 = vpop.permute.xlu0 %792
      %v794 = vsel %vm664, %v793, 0
      %796 = vmatpush.msra.mxu0 0.0
      %797 = vmatpush.msra.mxu0 0.0
      %798 = vmatpush.msra.mxu0 0.0
      %799 = vmatpush.msra.mxu0 0.0
      %800 = vmatpush.msra.mxu0 0.0
      %801 = vmatpush.msra.mxu0 0.0
      %802 = vmatpush.msra.mxu0 0.0
      %803 = vmatpush.msra.mxu0 0.0
      %804 = vmatpush.msra.mxu0 0.0
      %805 = vmatpush.msra.mxu0 0.0
      %806 = vmatpush.msra.mxu0 0.0
      %807 = vmatpush.msra.mxu0 0.0
      %808 = vmatpush.msra.mxu0 %v648
      %809 = vmatpush.msra.mxu0 %v647
      %810 = vmatpush.msra.mxu0 %v646
      %811 = vmatpush.msra.mxu0 %v645
      %812 = vmatmul.f32.gmra.mxu0 %v794
      %v813 = vpop.f32.mrf.mxu0
      %v814 = vadd.f32 %v789, %v813
      %815 = vdwg.mxu0
      %v817 = vperm.slane %v658, 0
      %v819 = vadd.f32 %v814, %v817
      %v820 = vxor.u32 %v819, 2147483648
      %v821 = vmul.f32 %v820, 1.442695
      %v822 = vpow.pop %v821
      %v823 = vadd.f32 %v822, 1.0
      %v824 = vrcp.pop %v823
      %v825 = vmul.f32 %v823, %v824
      %v826 = vsub.f32 1.0, %v825
      %v827 = vmul.f32 %v824, %v826
      %v828 = vadd.f32 %v824, %v827
      %vm829 = vweird.f32 %v823
      %vm830 = vweird.f32 %v824
      %vm831 = vmor %vm829, %vm830
      %v832 = vsel %vm831, %v824, %v828
      %v833 = vand.u32 2147483647, %v823
      %vm834 = vcmp.eq.f32.partialorder %v833, 8.507059e+37
      %v835 = vand.u32 %v823, 2147483648
      %v836 = vor.u32 1.1754944e-38, %v835
      %v837 = vsel %vm834, %v836, %v832
      %v838 = vmul.f32 1.0, %v837
      %v839 = vtanh.pop %v819
      %841 = vrot.lane.b32.xlu0 %v701, 32
      %v842 = vpop.permute.xlu0 %841
      %v844 = vmul.f32 %v838, %v842
      %846 = vrot.lane.b32.xlu0 %v839, 32
      %v847 = vpop.permute.xlu0 %846
      %v849 = vmul.f32 %v838, %v847
      %851 = vrot.lane.b32.xlu0 %v849, 32
      %v852 = vpop.permute.xlu0 %851
      %v854 = vadd.f32 %v844, %v852
      %v855 = vtanh.pop %v854
      %857 = vrot.lane.b32.xlu0 %v855, 32
      %v858 = vpop.permute.xlu0 %857
      %v860 = vmul.f32 %v838, %v858
      %862 = vrot.lane.b32.xlu0 %v860, 64
      %v863 = vpop.permute.xlu0 %862
      %vm865 = vcmask 254976
      %866 = vst.msk [vmem:[#allocation5] sm:$0x3] %vm865, %v863
      %v867 = vld [vmem:[#allocation4 + $0x2] sm:$0x3]
      %868 = vmatpush.msra.mxu0 0.0
      %869 = vmatpush.msra.mxu0 0.0
      %870 = vmatpush.msra.mxu0 0.0
      %871 = vmatpush.msra.mxu0 0.0
      %872 = vmatpush.msra.mxu0 0.0
      %873 = vmatpush.msra.mxu0 0.0
      %874 = vmatpush.msra.mxu0 0.0
      %875 = vmatpush.msra.mxu0 0.0
      %876 = vmatpush.msra.mxu0 0.0
      %877 = vmatpush.msra.mxu0 0.0
      %878 = vmatpush.msra.mxu0 0.0
      %879 = vmatpush.msra.mxu0 0.0
      %880 = vmatpush.msra.mxu0 %v652
      %881 = vmatpush.msra.mxu0 %v651
      %882 = vmatpush.msra.mxu0 %v650
      %883 = vmatpush.msra.mxu0 %v649
      %884 = vmatmul.f32.gmra.mxu0 %v794
      %v885 = vpop.f32.mrf.mxu0
      %v886 = vadd.f32 0.0, %v885
      %887 = vdwg.mxu0
      %v888 = vadd.f32 %v867, %v886
      %v889 = vxor.u32 %v888, 2147483648
      %v890 = vmul.f32 %v889, 1.442695
      %v891 = vpow.pop %v890
      %v892 = vadd.f32 %v891, 1.0
      %v893 = vrcp.pop %v892
      %v894 = vmul.f32 %v892, %v893
      %v895 = vsub.f32 1.0, %v894
      %v896 = vmul.f32 %v893, %v895
      %v897 = vadd.f32 %v893, %v896
      %vm898 = vweird.f32 %v892
      %vm899 = vweird.f32 %v893
      %vm900 = vmor %vm898, %vm899
      %v901 = vsel %vm900, %v893, %v897
      %v902 = vand.u32 2147483647, %v892
      %vm903 = vcmp.eq.f32.partialorder %v902, 8.507059e+37
      %v904 = vand.u32 %v892, 2147483648
      %v905 = vor.u32 1.1754944e-38, %v904
      %v906 = vsel %vm903, %v905, %v901
      %v907 = vmul.f32 1.0, %v906
      %v908 = vtanh.pop %v888
      %v909 = vmul.f32 %v907, %v761
      %911 = vrot.lane.b32.xlu0 %v908, 32
      %v912 = vpop.permute.xlu0 %911
      %v914 = vmul.f32 %v907, %v912
      %916 = vrot.lane.b32.xlu0 %v914, 32
      %v917 = vpop.permute.xlu0 %916
      %v919 = vadd.f32 %v909, %v917
      %v920 = vtanh.pop %v919
      %922 = vrot.lane.b32.xlu0 %v920, 32
      %v923 = vpop.permute.xlu0 %922
      %v925 = vmul.f32 %v907, %v923
      %v926 = vsel %vm664, %v863, 0
      %928 = vmatpush.msra.mxu0 0.0
      %929 = vmatpush.msra.mxu0 0.0
      %930 = vmatpush.msra.mxu0 0.0
      %931 = vmatpush.msra.mxu0 0.0
      %932 = vmatpush.msra.mxu0 0.0
      %933 = vmatpush.msra.mxu0 0.0
      %934 = vmatpush.msra.mxu0 0.0
      %935 = vmatpush.msra.mxu0 0.0
      %936 = vmatpush.msra.mxu0 0.0
      %937 = vmatpush.msra.mxu0 0.0
      %938 = vmatpush.msra.mxu0 0.0
      %939 = vmatpush.msra.mxu0 0.0
      %940 = vmatpush.msra.mxu0 %v656
      %941 = vmatpush.msra.mxu0 %v655
      %942 = vmatpush.msra.mxu0 %v654
      %943 = vmatpush.msra.mxu0 %v653
      %944 = vmatmul.f32.gmra.mxu0 %v926
      %v945 = vpop.f32.mrf.mxu0
      %v946 = vadd.f32 0.0, %v945
      %947 = vdwg.mxu0
      %949 = vrot.lane.b32.xlu0 %v925, 64
      %v950 = vpop.permute.xlu0 %949
      %v951 = vsel %vm664, %v950, 0
      %953 = vmatpush.msra.mxu0 0.0
      %954 = vmatpush.msra.mxu0 0.0
      %955 = vmatpush.msra.mxu0 0.0
      %956 = vmatpush.msra.mxu0 0.0
      %957 = vmatpush.msra.mxu0 0.0
      %958 = vmatpush.msra.mxu0 0.0
      %959 = vmatpush.msra.mxu0 0.0
      %960 = vmatpush.msra.mxu0 0.0
      %961 = vmatpush.msra.mxu0 0.0
      %962 = vmatpush.msra.mxu0 0.0
      %963 = vmatpush.msra.mxu0 0.0
      %964 = vmatpush.msra.mxu0 0.0
      %965 = vmatpush.msra.mxu0 %v648
      %966 = vmatpush.msra.mxu0 %v647
      %967 = vmatpush.msra.mxu0 %v646
      %968 = vmatpush.msra.mxu0 %v645
      %969 = vmatmul.f32.gmra.mxu0 %v951
      %v970 = vpop.f32.mrf.mxu0
      %v971 = vadd.f32 %v946, %v970
      %972 = vdwg.mxu0
      %v973 = vadd.f32 %v971, %v817
      %v974 = vxor.u32 %v973, 2147483648
      %v975 = vmul.f32 %v974, 1.442695
      %v976 = vpow.pop %v975
      %v977 = vadd.f32 %v976, 1.0
      %v978 = vrcp.pop %v977
      %v979 = vmul.f32 %v977, %v978
      %v980 = vsub.f32 1.0, %v979
      %v981 = vmul.f32 %v978, %v980
      %v982 = vadd.f32 %v978, %v981
      %vm983 = vweird.f32 %v977
      %vm984 = vweird.f32 %v978
      %vm985 = vmor %vm983, %vm984
      %v986 = vsel %vm985, %v978, %v982
      %v987 = vand.u32 2147483647, %v977
      %vm988 = vcmp.eq.f32.partialorder %v987, 8.507059e+37
      %v989 = vand.u32 %v977, 2147483648
      %v990 = vor.u32 1.1754944e-38, %v989
      %v991 = vsel %vm988, %v990, %v986
      %v992 = vmul.f32 1.0, %v991
      %v993 = vtanh.pop %v973
      %v994 = vmul.f32 %v992, %v854
      %996 = vrot.lane.b32.xlu0 %v993, 32
      %v997 = vpop.permute.xlu0 %996
      %v999 = vmul.f32 %v992, %v997
      %1001 = vrot.lane.b32.xlu0 %v999, 32
      %v1002 = vpop.permute.xlu0 %1001
      %v1004 = vadd.f32 %v994, %v1002
      %v1005 = vtanh.pop %v1004
      %1007 = vrot.lane.b32.xlu0 %v1005, 32
      %v1008 = vpop.permute.xlu0 %1007
      %v1010 = vmul.f32 %v992, %v1008
      %1012 = vrot.lane.b32.xlu0 %v1010, 64
      %v1013 = vpop.permute.xlu0 %1012
      %1015 = vst.msk [vmem:[#allocation5 + $0x2] sm:$0x3] %vm865, %v1013
      %v1016 = vld [vmem:[#allocation4 + $0x4] sm:$0x3]
      %1017 = vmatpush.msra.mxu0 0.0
      %1018 = vmatpush.msra.mxu0 0.0
      %1019 = vmatpush.msra.mxu0 0.0
      %1020 = vmatpush.msra.mxu0 0.0
      %1021 = vmatpush.msra.mxu0 0.0
      %1022 = vmatpush.msra.mxu0 0.0
      %1023 = vmatpush.msra.mxu0 0.0
      %1024 = vmatpush.msra.mxu0 0.0
      %1025 = vmatpush.msra.mxu0 0.0
      %1026 = vmatpush.msra.mxu0 0.0
      %1027 = vmatpush.msra.mxu0 0.0
      %1028 = vmatpush.msra.mxu0 0.0
      %1029 = vmatpush.msra.mxu0 %v652
      %1030 = vmatpush.msra.mxu0 %v651
      %1031 = vmatpush.msra.mxu0 %v650
      %1032 = vmatpush.msra.mxu0 %v649
      %1033 = vmatmul.f32.gmra.mxu0 %v951
      %v1034 = vpop.f32.mrf.mxu0
      %v1035 = vadd.f32 0.0, %v1034
      %1036 = vdwg.mxu0
      %v1037 = vadd.f32 %v1016, %v1035
      %v1038 = vxor.u32 %v1037, 2147483648
      %v1039 = vmul.f32 %v1038, 1.442695
      %v1040 = vpow.pop %v1039
      %v1041 = vadd.f32 %v1040, 1.0
      %v1042 = vrcp.pop %v1041
      %v1043 = vmul.f32 %v1041, %v1042
      %v1044 = vsub.f32 1.0, %v1043
      %v1045 = vmul.f32 %v1042, %v1044
      %v1046 = vadd.f32 %v1042, %v1045
      %vm1047 = vweird.f32 %v1041
      %vm1048 = vweird.f32 %v1042
      %vm1049 = vmor %vm1047, %vm1048
      %v1050 = vsel %vm1049, %v1042, %v1046
      %v1051 = vand.u32 2147483647, %v1041
      %vm1052 = vcmp.eq.f32.partialorder %v1051, 8.507059e+37
      %v1053 = vand.u32 %v1041, 2147483648
      %v1054 = vor.u32 1.1754944e-38, %v1053
      %v1055 = vsel %vm1052, %v1054, %v1050
      %v1056 = vmul.f32 1.0, %v1055
      %v1057 = vtanh.pop %v1037
      %v1058 = vmul.f32 %v1056, %v919
      %1060 = vrot.lane.b32.xlu0 %v1057, 32
      %v1061 = vpop.permute.xlu0 %1060
      %v1063 = vmul.f32 %v1056, %v1061
      %1065 = vrot.lane.b32.xlu0 %v1063, 32
      %v1066 = vpop.permute.xlu0 %1065
      %v1068 = vadd.f32 %v1058, %v1066
      %v1069 = vtanh.pop %v1068
      %1071 = vrot.lane.b32.xlu0 %v1069, 32
      %v1072 = vpop.permute.xlu0 %1071
      %v1074 = vmul.f32 %v1056, %v1072
      %v1075 = vsel %vm664, %v1013, 0
      %1077 = vmatpush.msra.mxu0 0.0
      %1078 = vmatpush.msra.mxu0 0.0
      %1079 = vmatpush.msra.mxu0 0.0
      %1080 = vmatpush.msra.mxu0 0.0
      %1081 = vmatpush.msra.mxu0 0.0
      %1082 = vmatpush.msra.mxu0 0.0
      %1083 = vmatpush.msra.mxu0 0.0
      %1084 = vmatpush.msra.mxu0 0.0
      %1085 = vmatpush.msra.mxu0 0.0
      %1086 = vmatpush.msra.mxu0 0.0
      %1087 = vmatpush.msra.mxu0 0.0
      %1088 = vmatpush.msra.mxu0 0.0
      %1089 = vmatpush.msra.mxu0 %v656
      %1090 = vmatpush.msra.mxu0 %v655
      %1091 = vmatpush.msra.mxu0 %v654
      %1092 = vmatpush.msra.mxu0 %v653
      %1093 = vmatmul.f32.gmra.mxu0 %v1075
      %v1094 = vpop.f32.mrf.mxu0
      %v1095 = vadd.f32 0.0, %v1094
      %1096 = vdwg.mxu0
      %1098 = vrot.lane.b32.xlu0 %v1074, 64
      %v1099 = vpop.permute.xlu0 %1098
      %v1100 = vsel %vm664, %v1099, 0
      %1102 = vmatpush.msra.mxu0 0.0
      %1103 = vmatpush.msra.mxu0 0.0
      %1104 = vmatpush.msra.mxu0 0.0
      %1105 = vmatpush.msra.mxu0 0.0
      %1106 = vmatpush.msra.mxu0 0.0
      %1107 = vmatpush.msra.mxu0 0.0
      %1108 = vmatpush.msra.mxu0 0.0
      %1109 = vmatpush.msra.mxu0 0.0
      %1110 = vmatpush.msra.mxu0 0.0
      %1111 = vmatpush.msra.mxu0 0.0
      %1112 = vmatpush.msra.mxu0 0.0
      %1113 = vmatpush.msra.mxu0 0.0
      %1114 = vmatpush.msra.mxu0 %v648
      %1115 = vmatpush.msra.mxu0 %v647
      %1116 = vmatpush.msra.mxu0 %v646
      %1117 = vmatpush.msra.mxu0 %v645
      %1118 = vmatmul.f32.gmra.mxu0 %v1100
      %v1119 = vpop.f32.mrf.mxu0
      %v1120 = vadd.f32 %v1095, %v1119
      %1121 = vdwg.mxu0
      %v1122 = vadd.f32 %v1120, %v817
      %v1123 = vxor.u32 %v1122, 2147483648
      %v1124 = vmul.f32 %v1123, 1.442695
      %v1125 = vpow.pop %v1124
      %v1126 = vadd.f32 %v1125, 1.0
      %v1127 = vrcp.pop %v1126
      %v1128 = vmul.f32 %v1126, %v1127
      %v1129 = vsub.f32 1.0, %v1128
      %v1130 = vmul.f32 %v1127, %v1129
      %v1131 = vadd.f32 %v1127, %v1130
      %vm1132 = vweird.f32 %v1126
      %vm1133 = vweird.f32 %v1127
      %vm1134 = vmor %vm1132, %vm1133
      %v1135 = vsel %vm1134, %v1127, %v1131
      %v1136 = vand.u32 2147483647, %v1126
      %vm1137 = vcmp.eq.f32.partialorder %v1136, 8.507059e+37
      %v1138 = vand.u32 %v1126, 2147483648
      %v1139 = vor.u32 1.1754944e-38, %v1138
      %v1140 = vsel %vm1137, %v1139, %v1135
      %v1141 = vmul.f32 1.0, %v1140
      %v1142 = vtanh.pop %v1122
      %v1143 = vmul.f32 %v1141, %v1004
      %1145 = vrot.lane.b32.xlu0 %v1142, 32
      %v1146 = vpop.permute.xlu0 %1145
      %v1148 = vmul.f32 %v1141, %v1146
      %1150 = vrot.lane.b32.xlu0 %v1148, 32
      %v1151 = vpop.permute.xlu0 %1150
      %v1153 = vadd.f32 %v1143, %v1151
      %v1154 = vtanh.pop %v1153
      %1156 = vrot.lane.b32.xlu0 %v1154, 32
      %v1157 = vpop.permute.xlu0 %1156
      %v1159 = vmul.f32 %v1141, %v1157
      %1161 = vrot.lane.b32.xlu0 %v1159, 64
      %v1162 = vpop.permute.xlu0 %1161
      %1164 = vst.msk [vmem:[#allocation5 + $0x4] sm:$0x3] %vm865, %v1162
      %v1165 = vld [vmem:[#allocation4 + $0x6] sm:$0x3]
      %1166 = vmatpush.msra.mxu0 0.0
      %1167 = vmatpush.msra.mxu0 0.0
      %1168 = vmatpush.msra.mxu0 0.0
      %1169 = vmatpush.msra.mxu0 0.0
      %1170 = vmatpush.msra.mxu0 0.0
      %1171 = vmatpush.msra.mxu0 0.0
      %1172 = vmatpush.msra.mxu0 0.0
      %1173 = vmatpush.msra.mxu0 0.0
      %1174 = vmatpush.msra.mxu0 0.0
      %1175 = vmatpush.msra.mxu0 0.0
      %1176 = vmatpush.msra.mxu0 0.0
      %1177 = vmatpush.msra.mxu0 0.0
      %1178 = vmatpush.msra.mxu0 %v652
      %1179 = vmatpush.msra.mxu0 %v651
      %1180 = vmatpush.msra.mxu0 %v650
      %1181 = vmatpush.msra.mxu0 %v649
      %1182 = vmatmul.f32.gmra.mxu0 %v1100
      %v1183 = vpop.f32.mrf.mxu0
      %v1184 = vadd.f32 0.0, %v1183
      %1185 = vdwg.mxu0
      %v1186 = vadd.f32 %v1165, %v1184
      %v1187 = vxor.u32 %v1186, 2147483648
      %v1188 = vmul.f32 %v1187, 1.442695
      %v1189 = vpow.pop %v1188
      %v1190 = vadd.f32 %v1189, 1.0
      %v1191 = vrcp.pop %v1190
      %v1192 = vmul.f32 %v1190, %v1191
      %v1193 = vsub.f32 1.0, %v1192
      %v1194 = vmul.f32 %v1191, %v1193
      %v1195 = vadd.f32 %v1191, %v1194
      %vm1196 = vweird.f32 %v1190
      %vm1197 = vweird.f32 %v1191
      %vm1198 = vmor %vm1196, %vm1197
      %v1199 = vsel %vm1198, %v1191, %v1195
      %v1200 = vand.u32 2147483647, %v1190
      %vm1201 = vcmp.eq.f32.partialorder %v1200, 8.507059e+37
      %v1202 = vand.u32 %v1190, 2147483648
      %v1203 = vor.u32 1.1754944e-38, %v1202
      %v1204 = vsel %vm1201, %v1203, %v1199
      %v1205 = vmul.f32 1.0, %v1204
      %v1206 = vtanh.pop %v1186
      %v1207 = vmul.f32 %v1205, %v1068
      %1209 = vrot.lane.b32.xlu0 %v1206, 32
      %v1210 = vpop.permute.xlu0 %1209
      %v1212 = vmul.f32 %v1205, %v1210
      %1214 = vrot.lane.b32.xlu0 %v1212, 32
      %v1215 = vpop.permute.xlu0 %1214
      %v1217 = vadd.f32 %v1207, %v1215
      %v1218 = vtanh.pop %v1217
      %1220 = vrot.lane.b32.xlu0 %v1218, 32
      %v1221 = vpop.permute.xlu0 %1220
      %v1223 = vmul.f32 %v1205, %v1221
      %v1224 = vsel %vm664, %v1162, 0
      %1226 = vmatpush.msra.mxu0 0.0
      %1227 = vmatpush.msra.mxu0 0.0
      %1228 = vmatpush.msra.mxu0 0.0
      %1229 = vmatpush.msra.mxu0 0.0
      %1230 = vmatpush.msra.mxu0 0.0
      %1231 = vmatpush.msra.mxu0 0.0
      %1232 = vmatpush.msra.mxu0 0.0
      %1233 = vmatpush.msra.mxu0 0.0
      %1234 = vmatpush.msra.mxu0 0.0
      %1235 = vmatpush.msra.mxu0 0.0
      %1236 = vmatpush.msra.mxu0 0.0
      %1237 = vmatpush.msra.mxu0 0.0
      %1238 = vmatpush.msra.mxu0 %v656
      %1239 = vmatpush.msra.mxu0 %v655
      %1240 = vmatpush.msra.mxu0 %v654
      %1241 = vmatpush.msra.mxu0 %v653
      %1242 = vmatmul.f32.gmra.mxu0 %v1224
      %v1243 = vpop.f32.mrf.mxu0
      %v1244 = vadd.f32 0.0, %v1243
      %1245 = vdwg.mxu0
      %1247 = vrot.lane.b32.xlu0 %v1223, 64
      %v1248 = vpop.permute.xlu0 %1247
      %v1249 = vsel %vm664, %v1248, 0
      %1251 = vmatpush.msra.mxu0 0.0
      %1252 = vmatpush.msra.mxu0 0.0
      %1253 = vmatpush.msra.mxu0 0.0
      %1254 = vmatpush.msra.mxu0 0.0
      %1255 = vmatpush.msra.mxu0 0.0
      %1256 = vmatpush.msra.mxu0 0.0
      %1257 = vmatpush.msra.mxu0 0.0
      %1258 = vmatpush.msra.mxu0 0.0
      %1259 = vmatpush.msra.mxu0 0.0
      %1260 = vmatpush.msra.mxu0 0.0
      %1261 = vmatpush.msra.mxu0 0.0
      %1262 = vmatpush.msra.mxu0 0.0
      %1263 = vmatpush.msra.mxu0 %v648
      %1264 = vmatpush.msra.mxu0 %v647
      %1265 = vmatpush.msra.mxu0 %v646
      %1266 = vmatpush.msra.mxu0 %v645
      %1267 = vmatmul.f32.gmra.mxu0 %v1249
      %v1268 = vpop.f32.mrf.mxu0
      %v1269 = vadd.f32 %v1244, %v1268
      %1270 = vdwg.mxu0
      %v1271 = vadd.f32 %v1269, %v817
      %v1272 = vxor.u32 %v1271, 2147483648
      %v1273 = vmul.f32 %v1272, 1.442695
      %v1274 = vpow.pop %v1273
      %v1275 = vadd.f32 %v1274, 1.0
      %v1276 = vrcp.pop %v1275
      %v1277 = vmul.f32 %v1275, %v1276
      %v1278 = vsub.f32 1.0, %v1277
      %v1279 = vmul.f32 %v1276, %v1278
      %v1280 = vadd.f32 %v1276, %v1279
      %vm1281 = vweird.f32 %v1275
      %vm1282 = vweird.f32 %v1276
      %vm1283 = vmor %vm1281, %vm1282
      %v1284 = vsel %vm1283, %v1276, %v1280
      %v1285 = vand.u32 2147483647, %v1275
      %vm1286 = vcmp.eq.f32.partialorder %v1285, 8.507059e+37
      %v1287 = vand.u32 %v1275, 2147483648
      %v1288 = vor.u32 1.1754944e-38, %v1287
      %v1289 = vsel %vm1286, %v1288, %v1284
      %v1290 = vmul.f32 1.0, %v1289
      %v1291 = vtanh.pop %v1271
      %v1292 = vmul.f32 %v1290, %v1153
      %1294 = vrot.lane.b32.xlu0 %v1291, 32
      %v1295 = vpop.permute.xlu0 %1294
      %v1297 = vmul.f32 %v1290, %v1295
      %1299 = vrot.lane.b32.xlu0 %v1297, 32
      %v1300 = vpop.permute.xlu0 %1299
      %v1302 = vadd.f32 %v1292, %v1300
      %v1303 = vtanh.pop %v1302
      %1305 = vrot.lane.b32.xlu0 %v1303, 32
      %v1306 = vpop.permute.xlu0 %1305
      %v1308 = vmul.f32 %v1290, %v1306
      %1310 = vrot.lane.b32.xlu0 %v1308, 64
      %v1311 = vpop.permute.xlu0 %1310
      %1313 = vst.msk [vmem:[#allocation5 + $0x6] sm:$0x3] %vm865, %v1311
      %v1314 = vld [vmem:[#allocation4 + $0x8] sm:$0x3]
      %1315 = vmatpush.msra.mxu0 0.0
      %1316 = vmatpush.msra.mxu0 0.0
      %1317 = vmatpush.msra.mxu0 0.0
      %1318 = vmatpush.msra.mxu0 0.0
      %1319 = vmatpush.msra.mxu0 0.0
      %1320 = vmatpush.msra.mxu0 0.0
      %1321 = vmatpush.msra.mxu0 0.0
      %1322 = vmatpush.msra.mxu0 0.0
      %1323 = vmatpush.msra.mxu0 0.0
      %1324 = vmatpush.msra.mxu0 0.0
      %1325 = vmatpush.msra.mxu0 0.0
      %1326 = vmatpush.msra.mxu0 0.0
      %1327 = vmatpush.msra.mxu0 %v652
      %1328 = vmatpush.msra.mxu0 %v651
      %1329 = vmatpush.msra.mxu0 %v650
      %1330 = vmatpush.msra.mxu0 %v649
      %1331 = vmatmul.f32.gmra.mxu0 %v1249
      %v1332 = vpop.f32.mrf.mxu0
      %v1333 = vadd.f32 0.0, %v1332
      %1334 = vdwg.mxu0
      %v1335 = vadd.f32 %v1314, %v1333
      %v1336 = vxor.u32 %v1335, 2147483648
      %v1337 = vmul.f32 %v1336, 1.442695
      %v1338 = vpow.pop %v1337
      %v1339 = vadd.f32 %v1338, 1.0
      %v1340 = vrcp.pop %v1339
      %v1341 = vmul.f32 %v1339, %v1340
      %v1342 = vsub.f32 1.0, %v1341
      %v1343 = vmul.f32 %v1340, %v1342
      %v1344 = vadd.f32 %v1340, %v1343
      %vm1345 = vweird.f32 %v1339
      %vm1346 = vweird.f32 %v1340
      %vm1347 = vmor %vm1345, %vm1346
      %v1348 = vsel %vm1347, %v1340, %v1344
      %v1349 = vand.u32 2147483647, %v1339
      %vm1350 = vcmp.eq.f32.partialorder %v1349, 8.507059e+37
      %v1351 = vand.u32 %v1339, 2147483648
      %v1352 = vor.u32 1.1754944e-38, %v1351
      %v1353 = vsel %vm1350, %v1352, %v1348
      %v1354 = vmul.f32 1.0, %v1353
      %v1355 = vtanh.pop %v1335
      %v1356 = vmul.f32 %v1354, %v1217
      %1358 = vrot.lane.b32.xlu0 %v1355, 32
      %v1359 = vpop.permute.xlu0 %1358
      %v1361 = vmul.f32 %v1354, %v1359
      %1363 = vrot.lane.b32.xlu0 %v1361, 32
      %v1364 = vpop.permute.xlu0 %1363
      %v1366 = vadd.f32 %v1356, %v1364
      %v1367 = vtanh.pop %v1366
      %1369 = vrot.lane.b32.xlu0 %v1367, 32
      %v1370 = vpop.permute.xlu0 %1369
      %v1372 = vmul.f32 %v1354, %v1370
      %v1373 = vsel %vm664, %v1311, 0
      %1375 = vmatpush.msra.mxu0 0.0
      %1376 = vmatpush.msra.mxu0 0.0
      %1377 = vmatpush.msra.mxu0 0.0
      %1378 = vmatpush.msra.mxu0 0.0
      %1379 = vmatpush.msra.mxu0 0.0
      %1380 = vmatpush.msra.mxu0 0.0
      %1381 = vmatpush.msra.mxu0 0.0
      %1382 = vmatpush.msra.mxu0 0.0
      %1383 = vmatpush.msra.mxu0 0.0
      %1384 = vmatpush.msra.mxu0 0.0
      %1385 = vmatpush.msra.mxu0 0.0
      %1386 = vmatpush.msra.mxu0 0.0
      %1387 = vmatpush.msra.mxu0 %v656
      %1388 = vmatpush.msra.mxu0 %v655
      %1389 = vmatpush.msra.mxu0 %v654
      %1390 = vmatpush.msra.mxu0 %v653
      %1391 = vmatmul.f32.gmra.mxu0 %v1373
      %v1392 = vpop.f32.mrf.mxu0
      %v1393 = vadd.f32 0.0, %v1392
      %1394 = vdwg.mxu0
      %1396 = vrot.lane.b32.xlu0 %v1372, 64
      %v1397 = vpop.permute.xlu0 %1396
      %v1398 = vsel %vm664, %v1397, 0
      %1400 = vmatpush.msra.mxu0 0.0
      %1401 = vmatpush.msra.mxu0 0.0
      %1402 = vmatpush.msra.mxu0 0.0
      %1403 = vmatpush.msra.mxu0 0.0
      %1404 = vmatpush.msra.mxu0 0.0
      %1405 = vmatpush.msra.mxu0 0.0
      %1406 = vmatpush.msra.mxu0 0.0
      %1407 = vmatpush.msra.mxu0 0.0
      %1408 = vmatpush.msra.mxu0 0.0
      %1409 = vmatpush.msra.mxu0 0.0
      %1410 = vmatpush.msra.mxu0 0.0
      %1411 = vmatpush.msra.mxu0 0.0
      %1412 = vmatpush.msra.mxu0 %v648
      %1413 = vmatpush.msra.mxu0 %v647
      %1414 = vmatpush.msra.mxu0 %v646
      %1415 = vmatpush.msra.mxu0 %v645
      %1416 = vmatmul.f32.gmra.mxu0 %v1398
      %v1417 = vpop.f32.mrf.mxu0
      %v1418 = vadd.f32 %v1393, %v1417
      %1419 = vdwg.mxu0
      %v1420 = vadd.f32 %v1418, %v817
      %v1421 = vxor.u32 %v1420, 2147483648
      %v1422 = vmul.f32 %v1421, 1.442695
      %v1423 = vpow.pop %v1422
      %v1424 = vadd.f32 %v1423, 1.0
      %v1425 = vrcp.pop %v1424
      %v1426 = vmul.f32 %v1424, %v1425
      %v1427 = vsub.f32 1.0, %v1426
      %v1428 = vmul.f32 %v1425, %v1427
      %v1429 = vadd.f32 %v1425, %v1428
      %vm1430 = vweird.f32 %v1424
      %vm1431 = vweird.f32 %v1425
      %vm1432 = vmor %vm1430, %vm1431
      %v1433 = vsel %vm1432, %v1425, %v1429
      %v1434 = vand.u32 2147483647, %v1424
      %vm1435 = vcmp.eq.f32.partialorder %v1434, 8.507059e+37
      %v1436 = vand.u32 %v1424, 2147483648
      %v1437 = vor.u32 1.1754944e-38, %v1436
      %v1438 = vsel %vm1435, %v1437, %v1433
      %v1439 = vmul.f32 1.0, %v1438
      %v1440 = vtanh.pop %v1420
      %v1441 = vmul.f32 %v1439, %v1302
      %1443 = vrot.lane.b32.xlu0 %v1440, 32
      %v1444 = vpop.permute.xlu0 %1443
      %v1446 = vmul.f32 %v1439, %v1444
      %1448 = vrot.lane.b32.xlu0 %v1446, 32
      %v1449 = vpop.permute.xlu0 %1448
      %v1451 = vadd.f32 %v1441, %v1449
      %v1452 = vtanh.pop %v1451
      %1454 = vrot.lane.b32.xlu0 %v1452, 32
      %v1455 = vpop.permute.xlu0 %1454
      %v1457 = vmul.f32 %v1439, %v1455
      %1459 = vrot.lane.b32.xlu0 %v1457, 64
      %v1460 = vpop.permute.xlu0 %1459
      %1462 = vst.msk [vmem:[#allocation5 + $0x8] sm:$0x3] %vm865, %v1460
      %v1463 = vld [vmem:[#allocation4 + $0xa] sm:$0x3]
      %1464 = vmatpush.msra.mxu0 0.0
      %1465 = vmatpush.msra.mxu0 0.0
      %1466 = vmatpush.msra.mxu0 0.0
      %1467 = vmatpush.msra.mxu0 0.0
      %1468 = vmatpush.msra.mxu0 0.0
      %1469 = vmatpush.msra.mxu0 0.0
      %1470 = vmatpush.msra.mxu0 0.0
      %1471 = vmatpush.msra.mxu0 0.0
      %1472 = vmatpush.msra.mxu0 0.0
      %1473 = vmatpush.msra.mxu0 0.0
      %1474 = vmatpush.msra.mxu0 0.0
      %1475 = vmatpush.msra.mxu0 0.0
      %1476 = vmatpush.msra.mxu0 %v652
      %1477 = vmatpush.msra.mxu0 %v651
      %1478 = vmatpush.msra.mxu0 %v650
      %1479 = vmatpush.msra.mxu0 %v649
      %1480 = vmatmul.f32.gmra.mxu0 %v1398
      %v1481 = vpop.f32.mrf.mxu0
      %v1482 = vadd.f32 0.0, %v1481
      %1483 = vdwg.mxu0
      %v1484 = vadd.f32 %v1463, %v1482
      %v1485 = vxor.u32 %v1484, 2147483648
      %v1486 = vmul.f32 %v1485, 1.442695
      %v1487 = vpow.pop %v1486
      %v1488 = vadd.f32 %v1487, 1.0
      %v1489 = vrcp.pop %v1488
      %v1490 = vmul.f32 %v1488, %v1489
      %v1491 = vsub.f32 1.0, %v1490
      %v1492 = vmul.f32 %v1489, %v1491
      %v1493 = vadd.f32 %v1489, %v1492
      %vm1494 = vweird.f32 %v1488
      %vm1495 = vweird.f32 %v1489
      %vm1496 = vmor %vm1494, %vm1495
      %v1497 = vsel %vm1496, %v1489, %v1493
      %v1498 = vand.u32 2147483647, %v1488
      %vm1499 = vcmp.eq.f32.partialorder %v1498, 8.507059e+37
      %v1500 = vand.u32 %v1488, 2147483648
      %v1501 = vor.u32 1.1754944e-38, %v1500
      %v1502 = vsel %vm1499, %v1501, %v1497
      %v1503 = vmul.f32 1.0, %v1502
      %v1504 = vtanh.pop %v1484
      %v1505 = vmul.f32 %v1503, %v1366
      %1507 = vrot.lane.b32.xlu0 %v1504, 32
      %v1508 = vpop.permute.xlu0 %1507
      %v1510 = vmul.f32 %v1503, %v1508
      %1512 = vrot.lane.b32.xlu0 %v1510, 32
      %v1513 = vpop.permute.xlu0 %1512
      %v1515 = vadd.f32 %v1505, %v1513
      %v1516 = vtanh.pop %v1515
      %1518 = vrot.lane.b32.xlu0 %v1516, 32
      %v1519 = vpop.permute.xlu0 %1518
      %v1521 = vmul.f32 %v1503, %v1519
      %v1522 = vsel %vm664, %v1460, 0
      %1524 = vmatpush.msra.mxu0 0.0
      %1525 = vmatpush.msra.mxu0 0.0
      %1526 = vmatpush.msra.mxu0 0.0
      %1527 = vmatpush.msra.mxu0 0.0
      %1528 = vmatpush.msra.mxu0 0.0
      %1529 = vmatpush.msra.mxu0 0.0
      %1530 = vmatpush.msra.mxu0 0.0
      %1531 = vmatpush.msra.mxu0 0.0
      %1532 = vmatpush.msra.mxu0 0.0
      %1533 = vmatpush.msra.mxu0 0.0
      %1534 = vmatpush.msra.mxu0 0.0
      %1535 = vmatpush.msra.mxu0 0.0
      %1536 = vmatpush.msra.mxu0 %v656
      %1537 = vmatpush.msra.mxu0 %v655
      %1538 = vmatpush.msra.mxu0 %v654
      %1539 = vmatpush.msra.mxu0 %v653
      %1540 = vmatmul.f32.gmra.mxu0 %v1522
      %v1541 = vpop.f32.mrf.mxu0
      %v1542 = vadd.f32 0.0, %v1541
      %1543 = vdwg.mxu0
      %1545 = vrot.lane.b32.xlu0 %v1521, 64
      %v1546 = vpop.permute.xlu0 %1545
      %v1547 = vsel %vm664, %v1546, 0
      %1549 = vmatpush.msra.mxu0 0.0
      %1550 = vmatpush.msra.mxu0 0.0
      %1551 = vmatpush.msra.mxu0 0.0
      %1552 = vmatpush.msra.mxu0 0.0
      %1553 = vmatpush.msra.mxu0 0.0
      %1554 = vmatpush.msra.mxu0 0.0
      %1555 = vmatpush.msra.mxu0 0.0
      %1556 = vmatpush.msra.mxu0 0.0
      %1557 = vmatpush.msra.mxu0 0.0
      %1558 = vmatpush.msra.mxu0 0.0
      %1559 = vmatpush.msra.mxu0 0.0
      %1560 = vmatpush.msra.mxu0 0.0
      %1561 = vmatpush.msra.mxu0 %v648
      %1562 = vmatpush.msra.mxu0 %v647
      %1563 = vmatpush.msra.mxu0 %v646
      %1564 = vmatpush.msra.mxu0 %v645
      %1565 = vmatmul.f32.gmra.mxu0 %v1547
      %v1566 = vpop.f32.mrf.mxu0
      %v1567 = vadd.f32 %v1542, %v1566
      %1568 = vdwg.mxu0
      %v1569 = vadd.f32 %v1567, %v817
      %v1570 = vxor.u32 %v1569, 2147483648
      %v1571 = vmul.f32 %v1570, 1.442695
      %v1572 = vpow.pop %v1571
      %v1573 = vadd.f32 %v1572, 1.0
      %v1574 = vrcp.pop %v1573
      %v1575 = vmul.f32 %v1573, %v1574
      %v1576 = vsub.f32 1.0, %v1575
      %v1577 = vmul.f32 %v1574, %v1576
      %v1578 = vadd.f32 %v1574, %v1577
      %vm1579 = vweird.f32 %v1573
      %vm1580 = vweird.f32 %v1574
      %vm1581 = vmor %vm1579, %vm1580
      %v1582 = vsel %vm1581, %v1574, %v1578
      %v1583 = vand.u32 2147483647, %v1573
      %vm1584 = vcmp.eq.f32.partialorder %v1583, 8.507059e+37
      %v1585 = vand.u32 %v1573, 2147483648
      %v1586 = vor.u32 1.1754944e-38, %v1585
      %v1587 = vsel %vm1584, %v1586, %v1582
      %v1588 = vmul.f32 1.0, %v1587
      %v1589 = vtanh.pop %v1569
      %v1590 = vmul.f32 %v1588, %v1451
      %1592 = vrot.lane.b32.xlu0 %v1589, 32
      %v1593 = vpop.permute.xlu0 %1592
      %v1595 = vmul.f32 %v1588, %v1593
      %1597 = vrot.lane.b32.xlu0 %v1595, 32
      %v1598 = vpop.permute.xlu0 %1597
      %v1600 = vadd.f32 %v1590, %v1598
      %v1601 = vtanh.pop %v1600
      %1603 = vrot.lane.b32.xlu0 %v1601, 32
      %v1604 = vpop.permute.xlu0 %1603
      %v1606 = vmul.f32 %v1588, %v1604
      %1608 = vrot.lane.b32.xlu0 %v1606, 64
      %v1609 = vpop.permute.xlu0 %1608
      %1611 = vst.msk [vmem:[#allocation5 + $0xa] sm:$0x3] %vm865, %v1609
      %v1612 = vld [vmem:[#allocation4 + $0xc] sm:$0x3]
      %1613 = vmatpush.msra.mxu0 0.0
      %1614 = vmatpush.msra.mxu0 0.0
      %1615 = vmatpush.msra.mxu0 0.0
      %1616 = vmatpush.msra.mxu0 0.0
      %1617 = vmatpush.msra.mxu0 0.0
      %1618 = vmatpush.msra.mxu0 0.0
      %1619 = vmatpush.msra.mxu0 0.0
      %1620 = vmatpush.msra.mxu0 0.0
      %1621 = vmatpush.msra.mxu0 0.0
      %1622 = vmatpush.msra.mxu0 0.0
      %1623 = vmatpush.msra.mxu0 0.0
      %1624 = vmatpush.msra.mxu0 0.0
      %1625 = vmatpush.msra.mxu0 %v652
      %1626 = vmatpush.msra.mxu0 %v651
      %1627 = vmatpush.msra.mxu0 %v650
      %1628 = vmatpush.msra.mxu0 %v649
      %1629 = vmatmul.f32.gmra.mxu0 %v1547
      %v1630 = vpop.f32.mrf.mxu0
      %v1631 = vadd.f32 0.0, %v1630
      %1632 = vdwg.mxu0
      %v1633 = vadd.f32 %v1612, %v1631
      %v1634 = vxor.u32 %v1633, 2147483648
      %v1635 = vmul.f32 %v1634, 1.442695
      %v1636 = vpow.pop %v1635
      %v1637 = vadd.f32 %v1636, 1.0
      %v1638 = vrcp.pop %v1637
      %v1639 = vmul.f32 %v1637, %v1638
      %v1640 = vsub.f32 1.0, %v1639
      %v1641 = vmul.f32 %v1638, %v1640
      %v1642 = vadd.f32 %v1638, %v1641
      %vm1643 = vweird.f32 %v1637
      %vm1644 = vweird.f32 %v1638
      %vm1645 = vmor %vm1643, %vm1644
      %v1646 = vsel %vm1645, %v1638, %v1642
      %v1647 = vand.u32 2147483647, %v1637
      %vm1648 = vcmp.eq.f32.partialorder %v1647, 8.507059e+37
      %v1649 = vand.u32 %v1637, 2147483648
      %v1650 = vor.u32 1.1754944e-38, %v1649
      %v1651 = vsel %vm1648, %v1650, %v1646
      %v1652 = vmul.f32 1.0, %v1651
      %v1653 = vtanh.pop %v1633
      %v1654 = vmul.f32 %v1652, %v1515
      %1656 = vrot.lane.b32.xlu0 %v1653, 32
      %v1657 = vpop.permute.xlu0 %1656
      %v1659 = vmul.f32 %v1652, %v1657
      %1661 = vrot.lane.b32.xlu0 %v1659, 32
      %v1662 = vpop.permute.xlu0 %1661
      %v1664 = vadd.f32 %v1654, %v1662
      %v1665 = vtanh.pop %v1664
      %1667 = vrot.lane.b32.xlu0 %v1665, 32
      %v1668 = vpop.permute.xlu0 %1667
      %v1670 = vmul.f32 %v1652, %v1668
      %v1671 = vsel %vm664, %v1609, 0
      %1673 = vmatpush.msra.mxu0 0.0
      %1674 = vmatpush.msra.mxu0 0.0
      %1675 = vmatpush.msra.mxu0 0.0
      %1676 = vmatpush.msra.mxu0 0.0
      %1677 = vmatpush.msra.mxu0 0.0
      %1678 = vmatpush.msra.mxu0 0.0
      %1679 = vmatpush.msra.mxu0 0.0
      %1680 = vmatpush.msra.mxu0 0.0
      %1681 = vmatpush.msra.mxu0 0.0
      %1682 = vmatpush.msra.mxu0 0.0
      %1683 = vmatpush.msra.mxu0 0.0
      %1684 = vmatpush.msra.mxu0 0.0
      %1685 = vmatpush.msra.mxu0 %v656
      %1686 = vmatpush.msra.mxu0 %v655
      %1687 = vmatpush.msra.mxu0 %v654
      %1688 = vmatpush.msra.mxu0 %v653
      %1689 = vmatmul.f32.gmra.mxu0 %v1671
      %v1690 = vpop.f32.mrf.mxu0
      %v1691 = vadd.f32 0.0, %v1690
      %1692 = vdwg.mxu0
      %1694 = vrot.lane.b32.xlu0 %v1670, 64
      %v1695 = vpop.permute.xlu0 %1694
      %v1696 = vsel %vm664, %v1695, 0
      %1698 = vmatpush.msra.mxu0 0.0
      %1699 = vmatpush.msra.mxu0 0.0
      %1700 = vmatpush.msra.mxu0 0.0
      %1701 = vmatpush.msra.mxu0 0.0
      %1702 = vmatpush.msra.mxu0 0.0
      %1703 = vmatpush.msra.mxu0 0.0
      %1704 = vmatpush.msra.mxu0 0.0
      %1705 = vmatpush.msra.mxu0 0.0
      %1706 = vmatpush.msra.mxu0 0.0
      %1707 = vmatpush.msra.mxu0 0.0
      %1708 = vmatpush.msra.mxu0 0.0
      %1709 = vmatpush.msra.mxu0 0.0
      %1710 = vmatpush.msra.mxu0 %v648
      %1711 = vmatpush.msra.mxu0 %v647
      %1712 = vmatpush.msra.mxu0 %v646
      %1713 = vmatpush.msra.mxu0 %v645
      %1714 = vmatmul.f32.gmra.mxu0 %v1696
      %v1715 = vpop.f32.mrf.mxu0
      %v1716 = vadd.f32 %v1691, %v1715
      %1717 = vdwg.mxu0
      %v1718 = vadd.f32 %v1716, %v817
      %v1719 = vxor.u32 %v1718, 2147483648
      %v1720 = vmul.f32 %v1719, 1.442695
      %v1721 = vpow.pop %v1720
      %v1722 = vadd.f32 %v1721, 1.0
      %v1723 = vrcp.pop %v1722
      %v1724 = vmul.f32 %v1722, %v1723
      %v1725 = vsub.f32 1.0, %v1724
      %v1726 = vmul.f32 %v1723, %v1725
      %v1727 = vadd.f32 %v1723, %v1726
      %vm1728 = vweird.f32 %v1722
      %vm1729 = vweird.f32 %v1723
      %vm1730 = vmor %vm1728, %vm1729
      %v1731 = vsel %vm1730, %v1723, %v1727
      %v1732 = vand.u32 2147483647, %v1722
      %vm1733 = vcmp.eq.f32.partialorder %v1732, 8.507059e+37
      %v1734 = vand.u32 %v1722, 2147483648
      %v1735 = vor.u32 1.1754944e-38, %v1734
      %v1736 = vsel %vm1733, %v1735, %v1731
      %v1737 = vmul.f32 1.0, %v1736
      %v1738 = vtanh.pop %v1718
      %v1739 = vmul.f32 %v1737, %v1600
      %1741 = vrot.lane.b32.xlu0 %v1738, 32
      %v1742 = vpop.permute.xlu0 %1741
      %v1744 = vmul.f32 %v1737, %v1742
      %1746 = vrot.lane.b32.xlu0 %v1744, 32
      %v1747 = vpop.permute.xlu0 %1746
      %v1749 = vadd.f32 %v1739, %v1747
      %v1750 = vtanh.pop %v1749
      %1752 = vrot.lane.b32.xlu0 %v1750, 32
      %v1753 = vpop.permute.xlu0 %1752
      %v1755 = vmul.f32 %v1737, %v1753
      %1757 = vrot.lane.b32.xlu0 %v1755, 64
      %v1758 = vpop.permute.xlu0 %1757
      %1760 = vst.msk [vmem:[#allocation5 + $0xc] sm:$0x3] %vm865, %v1758
      %v1761 = vld [vmem:[#allocation4 + $0xe] sm:$0x3]
      %1762 = vmatpush.msra.mxu0 0.0
      %1763 = vmatpush.msra.mxu0 0.0
      %1764 = vmatpush.msra.mxu0 0.0
      %1765 = vmatpush.msra.mxu0 0.0
      %1766 = vmatpush.msra.mxu0 0.0
      %1767 = vmatpush.msra.mxu0 0.0
      %1768 = vmatpush.msra.mxu0 0.0
      %1769 = vmatpush.msra.mxu0 0.0
      %1770 = vmatpush.msra.mxu0 0.0
      %1771 = vmatpush.msra.mxu0 0.0
      %1772 = vmatpush.msra.mxu0 0.0
      %1773 = vmatpush.msra.mxu0 0.0
      %1774 = vmatpush.msra.mxu0 %v652
      %1775 = vmatpush.msra.mxu0 %v651
      %1776 = vmatpush.msra.mxu0 %v650
      %1777 = vmatpush.msra.mxu0 %v649
      %1778 = vmatmul.f32.gmra.mxu0 %v1696
      %v1779 = vpop.f32.mrf.mxu0
      %v1780 = vadd.f32 0.0, %v1779
      %1781 = vdwg.mxu0
      %v1782 = vadd.f32 %v1761, %v1780
      %v1783 = vxor.u32 %v1782, 2147483648
      %v1784 = vmul.f32 %v1783, 1.442695
      %v1785 = vpow.pop %v1784
      %v1786 = vadd.f32 %v1785, 1.0
      %v1787 = vrcp.pop %v1786
      %v1788 = vmul.f32 %v1786, %v1787
      %v1789 = vsub.f32 1.0, %v1788
      %v1790 = vmul.f32 %v1787, %v1789
      %v1791 = vadd.f32 %v1787, %v1790
      %vm1792 = vweird.f32 %v1786
      %vm1793 = vweird.f32 %v1787
      %vm1794 = vmor %vm1792, %vm1793
      %v1795 = vsel %vm1794, %v1787, %v1791
      %v1796 = vand.u32 2147483647, %v1786
      %vm1797 = vcmp.eq.f32.partialorder %v1796, 8.507059e+37
      %v1798 = vand.u32 %v1786, 2147483648
      %v1799 = vor.u32 1.1754944e-38, %v1798
      %v1800 = vsel %vm1797, %v1799, %v1795
      %v1801 = vmul.f32 1.0, %v1800
      %v1802 = vtanh.pop %v1782
      %v1803 = vmul.f32 %v1801, %v1664
      %1805 = vrot.lane.b32.xlu0 %v1802, 32
      %v1806 = vpop.permute.xlu0 %1805
      %v1808 = vmul.f32 %v1801, %v1806
      %1810 = vrot.lane.b32.xlu0 %v1808, 32
      %v1811 = vpop.permute.xlu0 %1810
      %v1813 = vadd.f32 %v1803, %v1811
      %v1814 = vtanh.pop %v1813
      %1816 = vrot.lane.b32.xlu0 %v1814, 32
      %v1817 = vpop.permute.xlu0 %1816
      %v1819 = vmul.f32 %v1801, %v1817
      %v1820 = vsel %vm664, %v1758, 0
      %1822 = vmatpush.msra.mxu0 0.0
      %1823 = vmatpush.msra.mxu0 0.0
      %1824 = vmatpush.msra.mxu0 0.0
      %1825 = vmatpush.msra.mxu0 0.0
      %1826 = vmatpush.msra.mxu0 0.0
      %1827 = vmatpush.msra.mxu0 0.0
      %1828 = vmatpush.msra.mxu0 0.0
      %1829 = vmatpush.msra.mxu0 0.0
      %1830 = vmatpush.msra.mxu0 0.0
      %1831 = vmatpush.msra.mxu0 0.0
      %1832 = vmatpush.msra.mxu0 0.0
      %1833 = vmatpush.msra.mxu0 0.0
      %1834 = vmatpush.msra.mxu0 %v656
      %1835 = vmatpush.msra.mxu0 %v655
      %1836 = vmatpush.msra.mxu0 %v654
      %1837 = vmatpush.msra.mxu0 %v653
      %1838 = vmatmul.f32.gmra.mxu0 %v1820
      %v1839 = vpop.f32.mrf.mxu0
      %v1840 = vadd.f32 0.0, %v1839
      %1841 = vdwg.mxu0
      %1843 = vrot.lane.b32.xlu0 %v1819, 64
      %v1844 = vpop.permute.xlu0 %1843
      %v1845 = vsel %vm664, %v1844, 0
      %1847 = vmatpush.msra.mxu0 0.0
      %1848 = vmatpush.msra.mxu0 0.0
      %1849 = vmatpush.msra.mxu0 0.0
      %1850 = vmatpush.msra.mxu0 0.0
      %1851 = vmatpush.msra.mxu0 0.0
      %1852 = vmatpush.msra.mxu0 0.0
      %1853 = vmatpush.msra.mxu0 0.0
      %1854 = vmatpush.msra.mxu0 0.0
      %1855 = vmatpush.msra.mxu0 0.0
      %1856 = vmatpush.msra.mxu0 0.0
      %1857 = vmatpush.msra.mxu0 0.0
      %1858 = vmatpush.msra.mxu0 0.0
      %1859 = vmatpush.msra.mxu0 %v648
      %1860 = vmatpush.msra.mxu0 %v647
      %1861 = vmatpush.msra.mxu0 %v646
      %1862 = vmatpush.msra.mxu0 %v645
      %1863 = vmatmul.f32.gmra.mxu0 %v1845
      %v1864 = vpop.f32.mrf.mxu0
      %v1865 = vadd.f32 %v1840, %v1864
      %1866 = vdwg.mxu0
      %v1867 = vadd.f32 %v1865, %v817
      %v1868 = vxor.u32 %v1867, 2147483648
      %v1869 = vmul.f32 %v1868, 1.442695
      %v1870 = vpow.pop %v1869
      %v1871 = vadd.f32 %v1870, 1.0
      %v1872 = vrcp.pop %v1871
      %v1873 = vmul.f32 %v1871, %v1872
      %v1874 = vsub.f32 1.0, %v1873
      %v1875 = vmul.f32 %v1872, %v1874
      %v1876 = vadd.f32 %v1872, %v1875
      %vm1877 = vweird.f32 %v1871
      %vm1878 = vweird.f32 %v1872
      %vm1879 = vmor %vm1877, %vm1878
      %v1880 = vsel %vm1879, %v1872, %v1876
      %v1881 = vand.u32 2147483647, %v1871
      %vm1882 = vcmp.eq.f32.partialorder %v1881, 8.507059e+37
      %v1883 = vand.u32 %v1871, 2147483648
      %v1884 = vor.u32 1.1754944e-38, %v1883
      %v1885 = vsel %vm1882, %v1884, %v1880
      %v1886 = vmul.f32 1.0, %v1885
      %v1887 = vtanh.pop %v1867
      %v1888 = vmul.f32 %v1886, %v1749
      %1890 = vrot.lane.b32.xlu0 %v1887, 32
      %v1891 = vpop.permute.xlu0 %1890
      %v1893 = vmul.f32 %v1886, %v1891
      %1895 = vrot.lane.b32.xlu0 %v1893, 32
      %v1896 = vpop.permute.xlu0 %1895
      %v1898 = vadd.f32 %v1888, %v1896
      %v1899 = vtanh.pop %v1898
      %1901 = vrot.lane.b32.xlu0 %v1899, 32
      %v1902 = vpop.permute.xlu0 %1901
      %v1904 = vmul.f32 %v1886, %v1902
      %1906 = vrot.lane.b32.xlu0 %v1904, 64
      %v1907 = vpop.permute.xlu0 %1906
      %1909 = vst.msk [vmem:[#allocation5 + $0xe] sm:$0x3] %vm865, %v1907
      %1911 = vst.msk [vmem:[#allocation2] sm:$0x3] %vm865, %v1844
      %1913 = vrot.lane.b32.xlu0 %v1813, 96
      %v1914 = vpop.permute.xlu0 %1913
      %1916 = vst.msk [vmem:[#allocation3] sm:$0x3] %vm865, %v1914
      %1917 = vst.msk [vmem:[%s697] sm:$0x3] %vm865, %v1907
      %1919 = vrot.lane.b32.xlu0 %v1898, 96
      %v1920 = vpop.permute.xlu0 %1919
      %1922 = vst.msk [vmem:[%s700] sm:$0x3] %vm865, %v1920
      %v1923 = vld [vmem:[#allocation5] sm:$0xff]
      %v1924 = vld [vmem:[#allocation5 + $0x8] sm:$0xff]
      %v1925 = vld [vmem:[%s10] sm:$0xff]
      %v1926 = vld [vmem:[%s10 + $0x8] sm:$0xff]
      %v1927 = vld [vmem:[%s10 + $0x10] sm:$0xff]
      %v1928 = vld [vmem:[%s10 + $0x18] sm:$0xff]
      %v1929 = vld [vmem:[%s11] sm:$0x1]
      %v1931 = vperm.slane %v1929, 0
      %v1934 = vsel %vm664, %v1923, 0
      %v1937 = vsel %vm664, %v1924, 0
      %1939 = vmatpush.msra.mxu0 0.0
      %1940 = vmatpush.msra.mxu0 0.0
      %1941 = vmatpush.msra.mxu0 0.0
      %1942 = vmatpush.msra.mxu0 0.0
      %1943 = vmatpush.msra.mxu0 0.0
      %1944 = vmatpush.msra.mxu0 0.0
      %1945 = vmatpush.msra.mxu0 0.0
      %1946 = vmatpush.msra.mxu0 0.0
      %1947 = vmatpush.msra.mxu0 0.0
      %1948 = vmatpush.msra.mxu0 0.0
      %1949 = vmatpush.msra.mxu0 0.0
      %1950 = vmatpush.msra.mxu0 0.0
      %1951 = vmatpush.msra.mxu0 %v1928
      %1952 = vmatpush.msra.mxu0 %v1927
      %1953 = vmatpush.msra.mxu0 %v1926
      %1954 = vmatpush.msra.mxu0 %v1925
      %1955 = vmatmul.f32.gmra.mxu0 %v1934
      %v1956 = vpop.f32.mrf.mxu0
      %v1957 = vadd.f32 %v1931, %v1956
      %1958 = vmatmul.f32.gmra.mxu0 %v1937
      %v1959 = vpop.f32.mrf.mxu0
      %v1960 = vadd.f32 %v1931, %v1959
      %1961 = vdwg.mxu0
      %v1962 = vld [vmem:[%s12] sm:$0xff]
      %v1963 = vld [vmem:[%s12 + $0x8] sm:$0xff]
      %v1964 = vld [vmem:[%s12 + $0x10] sm:$0xff]
      %v1965 = vld [vmem:[%s12 + $0x18] sm:$0xff]
      %v1966 = vld [vmem:[%s13] sm:$0x1]
      %v1968 = vperm.slane %v1966, 0
      %1970 = vmatpush.msra.mxu0 0.0
      %1971 = vmatpush.msra.mxu0 0.0
      %1972 = vmatpush.msra.mxu0 0.0
      %1973 = vmatpush.msra.mxu0 0.0
      %1974 = vmatpush.msra.mxu0 0.0
      %1975 = vmatpush.msra.mxu0 0.0
      %1976 = vmatpush.msra.mxu0 0.0
      %1977 = vmatpush.msra.mxu0 0.0
      %1978 = vmatpush.msra.mxu0 0.0
      %1979 = vmatpush.msra.mxu0 0.0
      %1980 = vmatpush.msra.mxu0 0.0
      %1981 = vmatpush.msra.mxu0 0.0
      %1982 = vmatpush.msra.mxu0 %v1965
      %1983 = vmatpush.msra.mxu0 %v1964
      %1984 = vmatpush.msra.mxu0 %v1963
      %1985 = vmatpush.msra.mxu0 %v1962
      %1986 = vmatmul.f32.gmra.mxu0 %v1934
      %v1987 = vpop.f32.mrf.mxu0
      %v1988 = vadd.f32 %v1968, %v1987
      %1989 = vmatmul.f32.gmra.mxu0 %v1937
      %v1990 = vpop.f32.mrf.mxu0
      %v1991 = vadd.f32 %v1968, %v1990
      %1992 = vdwg.mxu0
      %v1993 = vmax.f32 %v1988, 0.0
      %v1994 = vmax.f32 %v1991, 0.0
      %vm1995 = vcmp.ne.f32.partialorder %v1988, %v1988
      %vm1996 = vcmp.ne.f32.partialorder %v1991, %v1991
      %v1997 = vadd.f32 %v1988, 0.0
      %v1998 = vadd.f32 %v1991, 0.0
      %v1999 = vand.u32 2147483647, %v1988
      %v2000 = vand.u32 2147483647, %v1991
      %v2001 = vsub.f32 0.0, %v1999
      %v2002 = vsub.f32 0.0, %v2000
      %v2003 = vmul.f32 %v2001, 1.442695
      %v2004 = vpow.pop %v2003
      %v2005 = vmul.f32 %v2002, 1.442695
      %v2006 = vpow.pop %v2005
      %v2007 = vadd.f32 %v2004, 1.0
      %v2008 = vlog2.pop %v2007
      %v2009 = vmul.f32 %v2008, 0.6931472
      %v2010 = vmul.f32 -0.5, %v2004
      %v2011 = vadd.f32 %v2010, 1.0
      %v2012 = vmul.f32 %v2011, %v2004
      %v2013 = vand.u32 2147483647, %v2004
      %vm2014 = vcmp.lt.f32.partialorder %v2013, 0.0004427343
      %v2015 = vsel %vm2014, %v2012, %v2009
      %v2016 = vadd.f32 %v2006, 1.0
      %v2017 = vlog2.pop %v2016
      %v2018 = vmul.f32 %v2017, 0.6931472
      %v2019 = vmul.f32 -0.5, %v2006
      %v2020 = vadd.f32 %v2019, 1.0
      %v2021 = vmul.f32 %v2020, %v2006
      %v2022 = vand.u32 2147483647, %v2006
      %vm2023 = vcmp.lt.f32.partialorder %v2022, 0.0004427343
      %v2024 = vsel %vm2023, %v2021, %v2018
      %v2025 = vadd.f32 %v1993, %v2015
      %v2026 = vadd.f32 %v1994, %v2024
      %v2027 = vsel %vm1995, %v1997, %v2025
      %v2028 = vsel %vm1996, %v1998, %v2026
      %v2029 = vrsqrt.pop %v2027
      %v2030 = vmul.f32 %v2029, %v2027
      %v2031 = vmul.f32 %v2030, %v2029
      %v2032 = vmul.f32 0.5, %v2031
      %v2033 = vsub.f32 1.5, %v2032
      %v2034 = vmul.f32 %v2029, %v2033
      %v2035 = vmul.f32 %v2027, %v2034
      %vm2036 = vcmp.eq.f32.partialorder %v2027, inf
      %v2037 = vsel %vm2036, %v2027, %v2035
      %vm2038 = vcmp.eq.f32.partialorder %v2027, 0.0
      %v2039 = vand.u32 %v2027, 2147483648
      %v2040 = vsel %vm2038, %v2039, %v2037
      %v2041 = vrsqrt.pop %v2028
      %v2042 = vmul.f32 %v2041, %v2028
      %v2043 = vmul.f32 %v2042, %v2041
      %v2044 = vmul.f32 0.5, %v2043
      %v2045 = vsub.f32 1.5, %v2044
      %v2046 = vmul.f32 %v2041, %v2045
      %v2047 = vmul.f32 %v2028, %v2046
      %vm2048 = vcmp.eq.f32.partialorder %v2028, inf
      %v2049 = vsel %vm2048, %v2028, %v2047
      %vm2050 = vcmp.eq.f32.partialorder %v2028, 0.0
      %v2051 = vand.u32 %v2028, 2147483648
      %v2052 = vsel %vm2050, %v2051, %v2049
      %v2053 = vld [vmem:[%s608] sm:$0xff]
      %v2054 = vld [vmem:[%s608 + $0x8] sm:$0xff]
      %v2055 = vmul.f32 %v2040, %v2053
      %v2056 = vmul.f32 %v2052, %v2054
      %v2057 = vadd.f32 %v1957, %v2055
      %v2058 = vadd.f32 %v1960, %v2056
      %v2059 = vld [vmem:[%s14] sm:$0xff]
      %v2060 = vld [vmem:[%s14 + $0x8] sm:$0xff]
      %v2061 = vld [vmem:[%s14 + $0x10] sm:$0xff]
      %v2062 = vld [vmem:[%s14 + $0x18] sm:$0xff]
      %v2063 = vld [vmem:[%s14 + $0x20] sm:$0xff]
      %v2064 = vld [vmem:[%s14 + $0x28] sm:$0xff]
      %v2065 = vld [vmem:[%s14 + $0x30] sm:$0xff]
      %v2066 = vld [vmem:[%s14 + $0x38] sm:$0xff]
      %v2067 = vld [vmem:[%s14 + $0x40] sm:$0xff]
      %v2068 = vld [vmem:[%s14 + $0x48] sm:$0xff]
      %v2069 = vld [vmem:[%s14 + $0x50] sm:$0xff]
      %v2070 = vld [vmem:[%s14 + $0x58] sm:$0xff]
      %v2071 = vld [vmem:[%s14 + $0x60] sm:$0xff]
      %v2072 = vld [vmem:[%s14 + $0x68] sm:$0xff]
      %v2073 = vld [vmem:[%s14 + $0x70] sm:$0xff]
      %v2074 = vld [vmem:[%s14 + $0x78] sm:$0xff]
      %v2075 = vld [vmem:[%s15] sm:$0x1]
      %v2077 = vperm.slane %v2075, 0
      %2079 = vmatpush.msra.mxu0 %v2074
      %2080 = vmatpush.msra.mxu0 %v2073
      %2081 = vmatpush.msra.mxu0 %v2072
      %2082 = vmatpush.msra.mxu0 %v2071
      %2083 = vmatpush.msra.mxu0 %v2070
      %2084 = vmatpush.msra.mxu0 %v2069
      %2085 = vmatpush.msra.mxu0 %v2068
      %2086 = vmatpush.msra.mxu0 %v2067
      %2087 = vmatpush.msra.mxu0 %v2066
      %2088 = vmatpush.msra.mxu0 %v2065
      %2089 = vmatpush.msra.mxu0 %v2064
      %2090 = vmatpush.msra.mxu0 %v2063
      %2091 = vmatpush.msra.mxu0 %v2062
      %2092 = vmatpush.msra.mxu0 %v2061
      %2093 = vmatpush.msra.mxu0 %v2060
      %2094 = vmatpush.msra.mxu0 %v2059
      %2095 = vmatmul.f32.gmra.mxu0 %v2057
      %v2096 = vpop.f32.mrf.mxu0
      %v2097 = vadd.f32 %v2077, %v2096
      %2098 = vmatmul.f32.gmra.mxu0 %v2058
      %v2099 = vpop.f32.mrf.mxu0
      %v2100 = vadd.f32 %v2077, %v2099
      %2101 = vdwg.mxu0
      %2102 = vst [vmem:[%s614] sm:$0xff] %v2097
      %2103 = vst [vmem:[%s614 + $0x8] sm:$0xff] %v2100
      %2104 = vst [vmem:[%s620] sm:$0xff] %v1957
      %2105 = vst [vmem:[%s620 + $0x8] sm:$0xff] %v1960
      %2106 = vst [vmem:[%s626] sm:$0xff] %v2027
      %2107 = vst [vmem:[%s626 + $0x8] sm:$0xff] %v2028
      %s2108 = smul.u32 2, %s30
      %p2109 = scmp.lt.s32.totalorder %s2108, 3
      %s2110 = scalar_select %p2109, %s2108, 3
      %s2111 = smul.addr %s2110, 8
      %s2112 = scalar_lea.vmem %s16, %s2111
      %s2113 = smul.u32 2, %s30
      %p2114 = scmp.lt.s32.totalorder %s2113, 3
      %s2115 = scalar_select %p2114, %s2113, 3
      %s2116 = smul.addr %s2115, 8
      %s2117 = scalar_lea.vmem %s17, %s2116
      %s2118 = smul.u32 2, %s30
      %p2119 = scmp.lt.s32.totalorder %s2118, 3
      %s2120 = scalar_select %p2119, %s2118, 3
      %s2121 = smul.addr %s2120, 8
      %s2122 = scalar_lea.vmem %s18, %s2121
      // Predicated region
      $region89: #{sequential_variational_ib_forward.1} parent=83 // pred_check
        %p2123 = pneg %p394
      $region90: #{sequential_variational_ib_forward.1} parent=83 // pred_check_branch
        %2125 = sbr.rel (%p2123) target = $region92
      $region91: #{sequential_variational_ib_forward.1} parent=83 // pred_region
        %s2126 = smul.u32 2, %s30
      $region92: #{sequential_variational_ib_forward.1} parent=83 // pred_fallthru
        _
      // Predicated region
      $region93: #{sequential_variational_ib_forward.1} parent=83 // pred_check
        %p2127 = pneg %p420
      $region94: #{sequential_variational_ib_forward.1} parent=83 // pred_check_branch
        %2129 = sbr.rel (%p2127) target = $region96
      $region95: #{sequential_variational_ib_forward.1} parent=83 // pred_region
        %s2130 = smul.u32 2, %s30
      $region96: #{sequential_variational_ib_forward.1} parent=83 // pred_fallthru
        _
      // Predicated region
      $region97: #{sequential_variational_ib_forward.1} parent=83 // pred_check
        %p2131 = pneg %p446
      $region98: #{sequential_variational_ib_forward.1} parent=83 // pred_check_branch
        %2133 = sbr.rel (%p2131) target = $region100
      $region99: #{sequential_variational_ib_forward.1} parent=83 // pred_region
        %s2134 = smul.u32 2, %s30
      $region100: #{sequential_variational_ib_forward.1} parent=83 // pred_fallthru
        _
    $region84: #{sequential_variational_ib_forward.1} parent=5 // pred_fallthru
      _
    %p2135 = scmp.le.s32.totalorder 2, %s25
    // Predicated region
    $region101: #{sequential_variational_ib_forward.1} parent=5 // pred_check
      %p2136 = pneg %p2135
    $region102: #{sequential_variational_ib_forward.1} parent=5 // pred_check_branch
      %2138 = sbr.rel (%p2136) target = $region104
    $region103: #{sequential_variational_ib_forward.1} parent=5 // pred_region
      %s2139 = ssub.s32 %s25, 2
      // Predicated region
      $region105: #{sequential_variational_ib_forward.1} parent=103 // pred_check
        %p2140 = pneg %p400
      $region106: #{sequential_variational_ib_forward.1} parent=103 // pred_check_branch
        %2142 = sbr.rel (%p2140) target = $region108
      $region107: #{sequential_variational_ib_forward.1} parent=103 // pred_region
        %s2143 = smul.u32 2, %s31
        %p2144 = scmp.lt.s32.totalorder %s2143, 3
        %s2145 = scalar_select %p2144, %s2143, 3
        %s2146 = smul.addr %s2145, 8
        %s2147 = scalar_lea.vmem %s16, %s2146
      $region108: #{sequential_variational_ib_forward.1} parent=103 // pred_fallthru
        _
      // Predicated region
      $region109: #{sequential_variational_ib_forward.1} parent=103 // pred_check
        %p2148 = pneg %p426
      $region110: #{sequential_variational_ib_forward.1} parent=103 // pred_check_branch
        %2150 = sbr.rel (%p2148) target = $region112
      $region111: #{sequential_variational_ib_forward.1} parent=103 // pred_region
        %s2151 = smul.u32 2, %s31
        %p2152 = scmp.lt.s32.totalorder %s2151, 3
        %s2153 = scalar_select %p2152, %s2151, 3
        %s2154 = smul.addr %s2153, 8
        %s2155 = scalar_lea.vmem %s17, %s2154
      $region112: #{sequential_variational_ib_forward.1} parent=103 // pred_fallthru
        _
      // Predicated region
      $region113: #{sequential_variational_ib_forward.1} parent=103 // pred_check
        %p2156 = pneg %p452
      $region114: #{sequential_variational_ib_forward.1} parent=103 // pred_check_branch
        %2158 = sbr.rel (%p2156) target = $region116
      $region115: #{sequential_variational_ib_forward.1} parent=103 // pred_region
        %s2159 = smul.u32 2, %s31
        %p2160 = scmp.lt.s32.totalorder %s2159, 3
        %s2161 = scalar_select %p2160, %s2159, 3
        %s2162 = smul.addr %s2161, 8
        %s2163 = scalar_lea.vmem %s18, %s2162
      $region116: #{sequential_variational_ib_forward.1} parent=103 // pred_fallthru
        _
    $region104: #{sequential_variational_ib_forward.1} parent=5 // pred_fallthru
      _
  $region6: #{sequential_variational_ib_forward.1} parent=0 // loop_footer
    %s29 = sadd.s32 1, %s25
  $region7: #{sequential_variational_ib_forward.1} parent=0 // loop_footer_branch
    %24 = sbr.rel target = $region3
  $region8: #{sequential_variational_ib_forward.1} parent=0 // loop_exit
    _

</llo_original>
